<compile_context>
chip_gen: v7x
topology: tpu7x:2x2x1
jax: 0.10.0
libtpu: 0.0.40
codegen_flags: <defaults>
</compile_context>

<pallas_src>
import math

import jax
import jax.numpy as jnp
import numpy as np
from jax.experimental import pallas as pl
from jax.experimental.pallas import tpu as pltpu

# ---- model hyperparameters (small, consistent with the module) ---------------------
HIDDEN = 64
HEADS = 4
HEAD_DIM = HIDDEN // HEADS
MLP_HIDDEN = int(HIDDEN * 4.0)
LN_EPS = 1e-6
SCALE = HEAD_DIM ** -0.5
_GELU_C = math.sqrt(2.0 / math.pi)


# ---- small helpers usable both inside kernels and in the JAX reference -------------
def _ln(x, eps=LN_EPS):
    mu = jnp.mean(x, axis=-1, keepdims=True)
    var = jnp.mean(jnp.square(x - mu), axis=-1, keepdims=True)
    return (x - mu) * jax.lax.rsqrt(var + eps)


def _gelu_tanh(x):
    return 0.5 * x * (1.0 + jnp.tanh(_GELU_C * (x + 0.044715 * x * x * x)))


# =====================================================================================
# Fused DiTBlock kernel (one grid step == one batch element, fully fused)
# =====================================================================================
def _make_dit_kernel(use_cross: bool):
    def kernel(*refs):
        it = iter(refs)
        x_ref = next(it)
        ctx_ref = next(it) if use_cross else None
        c_ref = next(it)
        w_ada_ref, b_ada_ref = next(it), next(it)
        w_qkv_ref, b_qkv_ref = next(it), next(it)
        w_proj_ref, b_proj_ref = next(it), next(it)
        if use_cross:
            nq_w_ref, nq_b_ref = next(it), next(it)
            w_kv_ref, nk_w_ref, nk_b_ref = next(it), next(it), next(it)
            w_out_ref, b_out_ref = next(it), next(it)
        w1_ref, b1_ref = next(it), next(it)
        w2_ref, b2_ref = next(it), next(it)
        o_ref = next(it)

        f32, bf16 = jnp.float32, jnp.bfloat16

        # ---- adaLN modulation: SiLU(c) @ W + b, then 9 static (1,H) lane slices ----
        cvec = c_ref[0]                                        # (1, H)
        silu = cvec * jax.nn.sigmoid(cvec)
        ada = jnp.dot(silu.astype(bf16), w_ada_ref[...],
                      preferred_element_type=f32) + b_ada_ref[...]   # (1, 9H)

        def mod(j):
            return ada[:, j * HIDDEN:(j + 1) * HIDDEN]         # (1, H)

        (shift_msa, scale_msa, gate_msa,
         shift_mca, scale_mca, gate_mca,
         shift_mlp, scale_mlp, gate_mlp) = (mod(j) for j in range(9))

        # ---- shared MHA core: heads folded through the output projection ----------
        def attention(q, k, v, w_o, b_o):
            # q: (Nq,H) fp32 already *SCALE ;  k, v: (Nk,H) fp32 ;  w_o: (H,H) bf16.
            qb, kb, vb = q.astype(bf16), k.astype(bf16), v.astype(bf16)
            acc = jnp.zeros((q.shape[0], HIDDEN), f32)
            for h in range(HEADS):                             # static 4-iter loop
                sl = slice(h * HEAD_DIM, (h + 1) * HEAD_DIM)
                s = jax.lax.dot_general(                       # q_h @ k_h^T (no XLU transpose)
                    qb[:, sl], kb[:, sl],
                    dimension_numbers=(((1,), (1,)), ((), ())),
                    preferred_element_type=f32)                # (Nq, Nk)
                s = s - jnp.max(s, axis=-1, keepdims=True)
                e = jnp.exp(s)
                p = e * pl.reciprocal(jnp.sum(e, axis=-1, keepdims=True), approx=True)
                pv = jnp.dot(p.astype(bf16), vb[:, sl], preferred_element_type=f32)
                acc = acc + jnp.dot(pv.astype(bf16), w_o[sl, :],
                                    preferred_element_type=f32)
            return acc + b_o

        x = x_ref[0]                                           # (N, H) fp32, VMEM-resident

        # ---- 1) self-attention branch ---------------------------------------------
        xm = _ln(x) * (1.0 + scale_msa) + shift_msa
        qkv = jnp.dot(xm.astype(bf16), w_qkv_ref[...],
                      preferred_element_type=f32) + b_qkv_ref[...]   # (N, 3H)
        q = qkv[:, :HIDDEN] * SCALE                            # SCALE hoisted out of head loop
        k = qkv[:, HIDDEN:2 * HIDDEN]
        v = qkv[:, 2 * HIDDEN:]
        x = x + gate_msa * attention(q, k, v, w_proj_ref[...], b_proj_ref[...])

        # ---- 2) cross-attention branch --------------------------------------------
        if use_cross:
            ctx = ctx_ref[0]                                   # (M, H)
            xm = _ln(x) * (1.0 + scale_mca) + shift_mca
            q = (_ln(xm) * nq_w_ref[...] + nq_b_ref[...]) * SCALE
            proj = jnp.dot(ctx.astype(bf16), w_kv_ref[...],
                           preferred_element_type=f32)         # (M, 2H)
            k = _ln(proj[:, :HIDDEN]) * nk_w_ref[...] + nk_b_ref[...]
            v = proj[:, HIDDEN:]
            x = x + gate_mca * attention(q, k, v, w_out_ref[...], b_out_ref[...])

        # ---- 3) MLP branch ----------------------------------------------------------
        xm = _ln(x) * (1.0 + scale_mlp) + shift_mlp
        hdn = jnp.dot(xm.astype(bf16), w1_ref[...],
                      preferred_element_type=f32) + b1_ref[...]
        hdn = _gelu_tanh(hdn)
        y = jnp.dot(hdn.astype(bf16), w2_ref[...],
                    preferred_element_type=f32) + b2_ref[...]
        o_ref[0] = x + gate_mlp * y

    return kernel


# =====================================================================================
# Pallas wrapper (single fused pallas_call)
# =====================================================================================
def dit_block_forward(params, x, c, dino_feat=None):
    """DiTBlock.forward(x, c, dino_feat) as one fused Pallas kernel."""
    B, N, H = x.shape
    use_cross = dino_feat is not None
    bf16 = jnp.bfloat16

    args, specs = [], []

    def add(arr, spec, dtype=None):
        args.append(arr if dtype is None else arr.astype(dtype))
        specs.append(spec)

    def rep_spec(shape):
        return pl.BlockSpec(shape, lambda b: (0,) * len(shape))

    add(x, pl.BlockSpec((1, N, H), lambda b: (b, 0, 0)))
    if use_cross:
        M = dino_feat.shape[1]
        add(dino_feat, pl.BlockSpec((1, M, H), lambda b: (b, 0, 0)))
    add(c.reshape(B, 1, H), pl.BlockSpec((1, 1, H), lambda b: (b, 0, 0)))

    def add_w(name, dtype=None):
        arr = params[name]
        add(arr, rep_spec(arr.shape), dtype)

    add_w("w_ada", bf16); add_w("b_ada")
    add_w("w_qkv", bf16); add_w("b_qkv")
    add_w("w_proj", bf16); add_w("b_proj")
    if use_cross:
        add_w("nq_w"); add_w("nq_b")
        add_w("w_kv", bf16); add_w("nk_w"); add_w("nk_b")
        add_w("w_out", bf16); add_w("b_out")
    add_w("w1", bf16); add_w("b1")
    add_w("w2", bf16); add_w("b2")

    # Advisory cost estimate so XLA's scheduler knows this kernel is cheap.
    Mc = dino_feat.shape[1] if use_cross else 0
    flops = 2 * B * (H * 9 * H
                     + N * H * (3 * H + H + 2 * MLP_HIDDEN)
                     + HEADS * N * HEAD_DIM * 2 * N
                     + ((Mc * H * 2 * H + N * H * H
                         + HEADS * N * HEAD_DIM * 2 * Mc) if use_cross else 0))
    transcendentals = B * (HEADS * N * (N + Mc) + N * MLP_HIDDEN + H)
    bytes_accessed = sum(int(a.size) * a.dtype.itemsize for a in args) + B * N * H * 4
    cost = pl.CostEstimate(flops=int(flops),
                           transcendentals=int(transcendentals),
                           bytes_accessed=int(bytes_accessed))

    return pl.pallas_call(
        _make_dit_kernel(use_cross),
        out_shape=jax.ShapeDtypeStruct((B, N, H), jnp.float32),
        grid=(B,),
        in_specs=specs,
        out_specs=pl.BlockSpec((1, N, H), lambda b: (b, 0, 0)),
        compiler_params=pltpu.CompilerParams(dimension_semantics=("parallel",)),
        cost_estimate=cost,
    )(*args)


# =====================================================================================
# Pure-JAX fp32 reference (mirrors the PyTorch semantics) for a correctness check
# =====================================================================================
def reference_forward(params, x, c, dino_feat=None):
    B, N, H = x.shape
    ada = (c * jax.nn.sigmoid(c)) @ params["w_ada"] + params["b_ada"][0]
    (s_msa, sc_msa, g_msa, s_mca, sc_mca, g_mca,
     s_mlp, sc_mlp, g_mlp) = jnp.split(ada, 9, axis=1)

    def modulate(t, shift, scale):
        return t * (1.0 + scale[:, None, :]) + shift[:, None, :]

    def split_heads(t, L):
        return t.reshape(B, L, HEADS, HEAD_DIM).transpose(0, 2, 1, 3)

    def self_attn(xm):
        qkv = xm @ params["w_qkv"] + params["b_qkv"][0]
        q, k, v = jnp.split(qkv, 3, axis=-1)
        q, k, v = split_heads(q, N), split_heads(k, N), split_heads(v, N)
        p = jax.nn.softmax(jnp.einsum("bhnd,bhmd->bhnm", q * SCALE, k), axis=-1)
        o = jnp.einsum("bhnm,bhmd->bhnd", p, v).transpose(0, 2, 1, 3).reshape(B, N, H)
        return o @ params["w_proj"] + params["b_proj"][0]

    def cross_attn(xm, ctx):
        M = ctx.shape[1]
        q = _ln(xm) * params["nq_w"][0] + params["nq_b"][0]
        proj = ctx @ params["w_kv"]
        k, v = jnp.split(proj, 2, axis=-1)
        k = _ln(k) * params["nk_w"][0] + params["nk_b"][0]
        qh, kh, vh = split_heads(q, N), split_heads(k, M), split_heads(v, M)
        p = jax.nn.softmax(jnp.einsum("bhnd,bhmd->bhnm", qh, kh) * SCALE, axis=-1)
        o = jnp.einsum("bhnm,bhmd->bhnd", p, vh).transpose(0, 2, 1, 3).reshape(B, N, H)
        return o @ params["w_out"] + params["b_out"][0]

    def mlp(xm):
        return _gelu_tanh(xm @ params["w1"] + params["b1"][0]) @ params["w2"] + params["b2"][0]

    x = x + g_msa[:, None, :] * self_attn(modulate(_ln(x), s_msa, sc_msa))
    if dino_feat is not None:
        x = x + g_mca[:, None, :] * cross_attn(modulate(_ln(x), s_mca, sc_mca), dino_feat)
    x = x + g_mlp[:, None, :] * mlp(modulate(_ln(x), s_mlp, sc_mlp))
    return x


# =====================================================================================
# Deterministic parameter init (synthetic; shapes follow the module's __init__)
# =====================================================================================
def init_params(key):
    ks = jax.random.split(key, 12)

    def w(k, shape, s=0.02):
        return (s * jax.random.normal(k, shape)).astype(jnp.float32)

    return dict(
        # adaLN_modulation: Linear(H, 9H), bias=True
        w_ada=w(ks[0], (HIDDEN, 9 * HIDDEN)), b_ada=w(ks[1], (1, 9 * HIDDEN)),
        # Attention: qkv Linear(H, 3H, bias=True), proj Linear(H, H, bias=True)
        w_qkv=w(ks[2], (HIDDEN, 3 * HIDDEN)), b_qkv=w(ks[3], (1, 3 * HIDDEN)),
        w_proj=w(ks[4], (HIDDEN, HIDDEN)), b_proj=w(ks[5], (1, HIDDEN)),
        # Mlp: Linear(H, 4H), GELU(tanh), Linear(4H, H)
        w1=w(ks[6], (HIDDEN, MLP_HIDDEN)), b1=w(ks[7], (1, MLP_HIDDEN)),
        w2=w(ks[8], (MLP_HIDDEN, HIDDEN)), b2=w(ks[9], (1, HIDDEN)),
        # CrossAttention: norm_q / norm_k (affine LN), kv Linear(H, 2H, no bias),
        # to_out Linear(H, H, bias=True)
        nq_w=jnp.ones((1, HIDDEN), jnp.float32), nq_b=jnp.zeros((1, HIDDEN), jnp.float32),
        nk_w=jnp.ones((1, HIDDEN), jnp.float32), nk_b=jnp.zeros((1, HIDDEN), jnp.float32),
        w_kv=w(ks[10], (HIDDEN, 2 * HIDDEN)),
        w_out=w(ks[11], (HIDDEN, HIDDEN)), b_out=jnp.zeros((1, HIDDEN), jnp.float32),
    )


if __name__ == "__main__":
    key = jax.random.PRNGKey(0)
    kp, kx, kc, kd = jax.random.split(key, 4)
    params = init_params(kp)

    B, N, M = 2, 16, 16
    x = jax.random.normal(kx, (B, N, HIDDEN), dtype=jnp.float32)
    c = jax.random.normal(kc, (B, HIDDEN), dtype=jnp.float32)
    dino_feat = jax.random.normal(kd, (B, M, HIDDEN), dtype=jnp.float32)

    # with cross-attention context (main path)
    out = jax.block_until_ready(dit_block_forward(params, x, c, dino_feat))
    ref = reference_forward(params, x, c, dino_feat)
    np.testing.assert_allclose(np.asarray(out), np.asarray(ref), rtol=2e-3, atol=2e-3)

    # dino_feat=None path (skips cross-attention, as in the PyTorch forward)
    out2 = jax.block_until_ready(dit_block_forward(params, x, c, None))
    ref2 = reference_forward(params, x, c, None)
    np.testing.assert_allclose(np.asarray(out2), np.asarray(ref2), rtol=2e-3, atol=2e-3)

    print("KERNEL_OK")
</pallas_src>

<mosaic_0001>
module attributes {stable_mosaic.version = 11 : i64} {
  func.func @kernel(%arg0: i32, %arg1: memref<1x16x64xf32, #tpu.memory_space<vmem>>, %arg2: memref<1x16x64xf32, #tpu.memory_space<vmem>>, %arg3: memref<1x1x64xf32, #tpu.memory_space<vmem>>, %arg4: memref<64x576xbf16, #tpu.memory_space<vmem>>, %arg5: memref<1x576xf32, #tpu.memory_space<vmem>>, %arg6: memref<64x192xbf16, #tpu.memory_space<vmem>>, %arg7: memref<1x192xf32, #tpu.memory_space<vmem>>, %arg8: memref<64x64xbf16, #tpu.memory_space<vmem>>, %arg9: memref<1x64xf32, #tpu.memory_space<vmem>>, %arg10: memref<1x64xf32, #tpu.memory_space<vmem>>, %arg11: memref<1x64xf32, #tpu.memory_space<vmem>>, %arg12: memref<64x128xbf16, #tpu.memory_space<vmem>>, %arg13: memref<1x64xf32, #tpu.memory_space<vmem>>, %arg14: memref<1x64xf32, #tpu.memory_space<vmem>>, %arg15: memref<64x64xbf16, #tpu.memory_space<vmem>>, %arg16: memref<1x64xf32, #tpu.memory_space<vmem>>, %arg17: memref<64x256xbf16, #tpu.memory_space<vmem>>, %arg18: memref<1x256xf32, #tpu.memory_space<vmem>>, %arg19: memref<256x64xbf16, #tpu.memory_space<vmem>>, %arg20: memref<1x64xf32, #tpu.memory_space<vmem>>, %arg21: memref<1x16x64xf32, #tpu.memory_space<vmem>>) attributes {dimension_semantics = [#tpu.dimension_semantics<parallel>], iteration_bounds = array<i64: 2>, scalar_prefetch = 0 : i64, scratch_operands = 0 : i64, tpu.core_type = #tpu.core_type<tc>, window_params = [{transform_indices = @transform_0, window_bounds = array<i64: 1, 16, 64>}, {transform_indices = @transform_1, window_bounds = array<i64: 1, 16, 64>}, {transform_indices = @transform_2, window_bounds = array<i64: 1, 1, 64>}, {pipeline_mode = #tpu.pipeline_mode<synchronous>, transform_indices = @transform_3, window_bounds = array<i64: 64, 576>}, {pipeline_mode = #tpu.pipeline_mode<synchronous>, transform_indices = @transform_4, window_bounds = array<i64: 1, 576>}, {pipeline_mode = #tpu.pipeline_mode<synchronous>, transform_indices = @transform_5, window_bounds = array<i64: 64, 192>}, {pipeline_mode = #tpu.pipeline_mode<synchronous>, transform_indices = @transform_6, window_bounds = array<i64: 1, 192>}, {pipeline_mode = #tpu.pipeline_mode<synchronous>, transform_indices = @transform_7, window_bounds = array<i64: 64, 64>}, {pipeline_mode = #tpu.pipeline_mode<synchronous>, transform_indices = @transform_8, window_bounds = array<i64: 1, 64>}, {pipeline_mode = #tpu.pipeline_mode<synchronous>, transform_indices = @transform_9, window_bounds = array<i64: 1, 64>}, {pipeline_mode = #tpu.pipeline_mode<synchronous>, transform_indices = @transform_10, window_bounds = array<i64: 1, 64>}, {pipeline_mode = #tpu.pipeline_mode<synchronous>, transform_indices = @transform_11, window_bounds = array<i64: 64, 128>}, {pipeline_mode = #tpu.pipeline_mode<synchronous>, transform_indices = @transform_12, window_bounds = array<i64: 1, 64>}, {pipeline_mode = #tpu.pipeline_mode<synchronous>, transform_indices = @transform_13, window_bounds = array<i64: 1, 64>}, {pipeline_mode = #tpu.pipeline_mode<synchronous>, transform_indices = @transform_14, window_bounds = array<i64: 64, 64>}, {pipeline_mode = #tpu.pipeline_mode<synchronous>, transform_indices = @transform_15, window_bounds = array<i64: 1, 64>}, {pipeline_mode = #tpu.pipeline_mode<synchronous>, transform_indices = @transform_16, window_bounds = array<i64: 64, 256>}, {pipeline_mode = #tpu.pipeline_mode<synchronous>, transform_indices = @transform_17, window_bounds = array<i64: 1, 256>}, {pipeline_mode = #tpu.pipeline_mode<synchronous>, transform_indices = @transform_18, window_bounds = array<i64: 256, 64>}, {pipeline_mode = #tpu.pipeline_mode<synchronous>, transform_indices = @transform_19, window_bounds = array<i64: 1, 64>}, {transform_indices = @transform_20, window_bounds = array<i64: 1, 16, 64>}]} {
    %c0 = arith.constant 0 : index
    %c0_0 = arith.constant 0 : index
    %c0_1 = arith.constant 0 : index
    %0 = vector.load %arg3[%c0, %c0_0, %c0_1] : memref<1x1x64xf32, #tpu.memory_space<vmem>>, vector<1x1x64xf32>
    %1 = vector.shape_cast %0 : vector<1x1x64xf32> to vector<1x64xf32>
    %2 = arith.negf %1 : vector<1x64xf32>
    %3 = math.exp %2 : vector<1x64xf32>
    %cst = arith.constant 1.000000e+00 : f32
    %4 = vector.broadcast %cst : f32 to vector<1x64xf32>
    %5 = arith.addf %4, %3 : vector<1x64xf32>
    %6 = arith.divf %4, %5 : vector<1x64xf32>
    %7 = arith.mulf %1, %6 : vector<1x64xf32>
    %8 = arith.truncf %7 : vector<1x64xf32> to vector<1x64xbf16>
    %c0_2 = arith.constant 0 : index
    %c0_3 = arith.constant 0 : index
    %9 = vector.load %arg4[%c0_2, %c0_3] : memref<64x576xbf16, #tpu.memory_space<vmem>>, vector<64x576xbf16>
    %cst_4 = arith.constant dense<0.000000e+00> : vector<1x576xf32>
    %10 = tpu.matmul %8, %9, %cst_4 {dimension_numbers = #tpu.dot_dimension_numbers<[1], [0], [0], [1], [0, 0, 1, 1], [], []>} : vector<1x64xbf16>, vector<64x576xbf16>, vector<1x576xf32> -> vector<1x576xf32>
    %c0_5 = arith.constant 0 : index
    %c0_6 = arith.constant 0 : index
    %11 = vector.load %arg5[%c0_5, %c0_6] : memref<1x576xf32, #tpu.memory_space<vmem>>, vector<1x576xf32>
    %12 = arith.addf %10, %11 : vector<1x576xf32>
    %13 = vector.extract_strided_slice %12 {offsets = [0, 0], sizes = [1, 64], strides = [1, 1]} : vector<1x576xf32> to vector<1x64xf32>
    %14 = vector.extract_strided_slice %12 {offsets = [0, 64], sizes = [1, 64], strides = [1, 1]} : vector<1x576xf32> to vector<1x64xf32>
    %15 = vector.extract_strided_slice %12 {offsets = [0, 128], sizes = [1, 64], strides = [1, 1]} : vector<1x576xf32> to vector<1x64xf32>
    %16 = vector.extract_strided_slice %12 {offsets = [0, 192], sizes = [1, 64], strides = [1, 1]} : vector<1x576xf32> to vector<1x64xf32>
    %17 = vector.extract_strided_slice %12 {offsets = [0, 256], sizes = [1, 64], strides = [1, 1]} : vector<1x576xf32> to vector<1x64xf32>
    %18 = vector.extract_strided_slice %12 {offsets = [0, 320], sizes = [1, 64], strides = [1, 1]} : vector<1x576xf32> to vector<1x64xf32>
    %19 = vector.extract_strided_slice %12 {offsets = [0, 384], sizes = [1, 64], strides = [1, 1]} : vector<1x576xf32> to vector<1x64xf32>
    %20 = vector.extract_strided_slice %12 {offsets = [0, 448], sizes = [1, 64], strides = [1, 1]} : vector<1x576xf32> to vector<1x64xf32>
    %21 = vector.extract_strided_slice %12 {offsets = [0, 512], sizes = [1, 64], strides = [1, 1]} : vector<1x576xf32> to vector<1x64xf32>
    %c0_7 = arith.constant 0 : index
    %c0_8 = arith.constant 0 : index
    %c0_9 = arith.constant 0 : index
    %22 = vector.load %arg1[%c0_7, %c0_8, %c0_9] : memref<1x16x64xf32, #tpu.memory_space<vmem>>, vector<1x16x64xf32>
    %23 = vector.shape_cast %22 : vector<1x16x64xf32> to vector<16x64xf32>
    %cst_10 = arith.constant dense<0.000000e+00> : vector<16xf32>
    %24 = vector.multi_reduction <add>, %23, %cst_10 [1] : vector<16x64xf32> to vector<16xf32>
    %25 = vector.shape_cast %24 : vector<16xf32> to vector<16x1xf32>
    %cst_11 = arith.constant 6.400000e+01 : f32
    %26 = vector.broadcast %cst_11 : f32 to vector<16x1xf32>
    %27 = arith.divf %25, %26 : vector<16x1xf32>
    %28 = vector.broadcast %27 : vector<16x1xf32> to vector<16x64xf32>
    %29 = arith.subf %23, %28 : vector<16x64xf32>
    %30 = arith.mulf %29, %29 : vector<16x64xf32>
    %cst_12 = arith.constant dense<0.000000e+00> : vector<16xf32>
    %31 = vector.multi_reduction <add>, %30, %cst_12 [1] : vector<16x64xf32> to vector<16xf32>
    %32 = vector.shape_cast %31 : vector<16xf32> to vector<16x1xf32>
    %cst_13 = arith.constant 6.400000e+01 : f32
    %33 = vector.broadcast %cst_13 : f32 to vector<16x1xf32>
    %34 = arith.divf %32, %33 : vector<16x1xf32>
    %35 = vector.broadcast %27 : vector<16x1xf32> to vector<16x64xf32>
    %36 = arith.subf %23, %35 : vector<16x64xf32>
    %cst_14 = arith.constant 9.99999997E-7 : f32
    %37 = vector.broadcast %cst_14 : f32 to vector<16x1xf32>
    %38 = arith.addf %34, %37 : vector<16x1xf32>
    %39 = math.rsqrt %38 : vector<16x1xf32>
    %40 = vector.broadcast %39 : vector<16x1xf32> to vector<16x64xf32>
    %41 = arith.mulf %36, %40 : vector<16x64xf32>
    %cst_15 = arith.constant 1.000000e+00 : f32
    %42 = vector.broadcast %cst_15 : f32 to vector<1x64xf32>
    %43 = arith.addf %42, %14 : vector<1x64xf32>
    %44 = vector.broadcast %43 : vector<1x64xf32> to vector<16x64xf32>
    %45 = arith.mulf %41, %44 : vector<16x64xf32>
    %46 = vector.broadcast %13 : vector<1x64xf32> to vector<16x64xf32>
    %47 = arith.addf %45, %46 : vector<16x64xf32>
    %48 = arith.truncf %47 : vector<16x64xf32> to vector<16x64xbf16>
    %c0_16 = arith.constant 0 : index
    %c0_17 = arith.constant 0 : index
    %49 = vector.load %arg6[%c0_16, %c0_17] : memref<64x192xbf16, #tpu.memory_space<vmem>>, vector<64x192xbf16>
    %cst_18 = arith.constant dense<0.000000e+00> : vector<16x192xf32>
    %50 = tpu.matmul %48, %49, %cst_18 {dimension_numbers = #tpu.dot_dimension_numbers<[1], [0], [0], [1], [0, 0, 1, 1], [], []>} : vector<16x64xbf16>, vector<64x192xbf16>, vector<16x192xf32> -> vector<16x192xf32>
    %c0_19 = arith.constant 0 : index
    %c0_20 = arith.constant 0 : index
    %51 = vector.load %arg7[%c0_19, %c0_20] : memref<1x192xf32, #tpu.memory_space<vmem>>, vector<1x192xf32>
    %52 = vector.broadcast %51 : vector<1x192xf32> to vector<16x192xf32>
    %53 = arith.addf %50, %52 : vector<16x192xf32>
    %54 = vector.extract_strided_slice %53 {offsets = [0, 0], sizes = [16, 64], strides = [1, 1]} : vector<16x192xf32> to vector<16x64xf32>
    %cst_21 = arith.constant 2.500000e-01 : f32
    %55 = vector.broadcast %cst_21 : f32 to vector<16x64xf32>
    %56 = arith.mulf %54, %55 : vector<16x64xf32>
    %57 = vector.extract_strided_slice %53 {offsets = [0, 64], sizes = [16, 64], strides = [1, 1]} : vector<16x192xf32> to vector<16x64xf32>
    %58 = vector.extract_strided_slice %53 {offsets = [0, 128], sizes = [16, 64], strides = [1, 1]} : vector<16x192xf32> to vector<16x64xf32>
    %c0_22 = arith.constant 0 : index
    %c0_23 = arith.constant 0 : index
    %59 = vector.load %arg8[%c0_22, %c0_23] : memref<64x64xbf16, #tpu.memory_space<vmem>>, vector<64x64xbf16>
    %c0_24 = arith.constant 0 : index
    %c0_25 = arith.constant 0 : index
    %60 = vector.load %arg9[%c0_24, %c0_25] : memref<1x64xf32, #tpu.memory_space<vmem>>, vector<1x64xf32>
    %61 = arith.truncf %56 : vector<16x64xf32> to vector<16x64xbf16>
    %62 = arith.truncf %57 : vector<16x64xf32> to vector<16x64xbf16>
    %63 = arith.truncf %58 : vector<16x64xf32> to vector<16x64xbf16>
    %cst_26 = arith.constant 0.000000e+00 : f32
    %64 = vector.broadcast %cst_26 : f32 to vector<16x64xf32>
    %65 = vector.extract_strided_slice %61 {offsets = [0, 0], sizes = [16, 16], strides = [1, 1]} : vector<16x64xbf16> to vector<16x16xbf16>
    %66 = vector.extract_strided_slice %62 {offsets = [0, 0], sizes = [16, 16], strides = [1, 1]} : vector<16x64xbf16> to vector<16x16xbf16>
    %cst_27 = arith.constant dense<0.000000e+00> : vector<16x16xf32>
    %67 = tpu.matmul %65, %66, %cst_27 {dimension_numbers = #tpu.dot_dimension_numbers<[1], [1], [0], [0], [0, 0, 1, 0], [], []>} : vector<16x16xbf16>, vector<16x16xbf16>, vector<16x16xf32> -> vector<16x16xf32>
    %cst_28 = arith.constant dense<0xFF800000> : vector<16xf32>
    %68 = vector.multi_reduction <maximumf>, %67, %cst_28 [1] : vector<16x16xf32> to vector<16xf32>
    %69 = vector.shape_cast %68 : vector<16xf32> to vector<16x1xf32>
    %70 = vector.broadcast %69 : vector<16x1xf32> to vector<16x16xf32>
    %71 = arith.subf %67, %70 : vector<16x16xf32>
    %72 = math.exp %71 : vector<16x16xf32>
    %cst_29 = arith.constant dense<0.000000e+00> : vector<16xf32>
    %73 = vector.multi_reduction <add>, %72, %cst_29 [1] : vector<16x16xf32> to vector<16xf32>
    %74 = vector.shape_cast %73 : vector<16xf32> to vector<16x1xf32>
    %75 = tpu.reciprocal %74 {approx = true} : vector<16x1xf32> -> vector<16x1xf32>
    %76 = vector.broadcast %75 : vector<16x1xf32> to vector<16x16xf32>
    %77 = arith.mulf %72, %76 : vector<16x16xf32>
    %78 = arith.truncf %77 : vector<16x16xf32> to vector<16x16xbf16>
    %79 = vector.extract_strided_slice %63 {offsets = [0, 0], sizes = [16, 16], strides = [1, 1]} : vector<16x64xbf16> to vector<16x16xbf16>
    %cst_30 = arith.constant dense<0.000000e+00> : vector<16x16xf32>
    %80 = tpu.matmul %78, %79, %cst_30 {dimension_numbers = #tpu.dot_dimension_numbers<[1], [0], [0], [1], [0, 0, 1, 1], [], []>} : vector<16x16xbf16>, vector<16x16xbf16>, vector<16x16xf32> -> vector<16x16xf32>
    %81 = arith.truncf %80 : vector<16x16xf32> to vector<16x16xbf16>
    %82 = vector.extract_strided_slice %59 {offsets = [0, 0], sizes = [16, 64], strides = [1, 1]} : vector<64x64xbf16> to vector<16x64xbf16>
    %cst_31 = arith.constant dense<0.000000e+00> : vector<16x64xf32>
    %83 = tpu.matmul %81, %82, %cst_31 {dimension_numbers = #tpu.dot_dimension_numbers<[1], [0], [0], [1], [0, 0, 1, 1], [], []>} : vector<16x16xbf16>, vector<16x64xbf16>, vector<16x64xf32> -> vector<16x64xf32>
    %84 = arith.addf %64, %83 : vector<16x64xf32>
    %85 = vector.extract_strided_slice %61 {offsets = [0, 16], sizes = [16, 16], strides = [1, 1]} : vector<16x64xbf16> to vector<16x16xbf16>
    %86 = vector.extract_strided_slice %62 {offsets = [0, 16], sizes = [16, 16], strides = [1, 1]} : vector<16x64xbf16> to vector<16x16xbf16>
    %cst_32 = arith.constant dense<0.000000e+00> : vector<16x16xf32>
    %87 = tpu.matmul %85, %86, %cst_32 {dimension_numbers = #tpu.dot_dimension_numbers<[1], [1], [0], [0], [0, 0, 1, 0], [], []>} : vector<16x16xbf16>, vector<16x16xbf16>, vector<16x16xf32> -> vector<16x16xf32>
    %cst_33 = arith.constant dense<0xFF800000> : vector<16xf32>
    %88 = vector.multi_reduction <maximumf>, %87, %cst_33 [1] : vector<16x16xf32> to vector<16xf32>
    %89 = vector.shape_cast %88 : vector<16xf32> to vector<16x1xf32>
    %90 = vector.broadcast %89 : vector<16x1xf32> to vector<16x16xf32>
    %91 = arith.subf %87, %90 : vector<16x16xf32>
    %92 = math.exp %91 : vector<16x16xf32>
    %cst_34 = arith.constant dense<0.000000e+00> : vector<16xf32>
    %93 = vector.multi_reduction <add>, %92, %cst_34 [1] : vector<16x16xf32> to vector<16xf32>
    %94 = vector.shape_cast %93 : vector<16xf32> to vector<16x1xf32>
    %95 = tpu.reciprocal %94 {approx = true} : vector<16x1xf32> -> vector<16x1xf32>
    %96 = vector.broadcast %95 : vector<16x1xf32> to vector<16x16xf32>
    %97 = arith.mulf %92, %96 : vector<16x16xf32>
    %98 = arith.truncf %97 : vector<16x16xf32> to vector<16x16xbf16>
    %99 = vector.extract_strided_slice %63 {offsets = [0, 16], sizes = [16, 16], strides = [1, 1]} : vector<16x64xbf16> to vector<16x16xbf16>
    %cst_35 = arith.constant dense<0.000000e+00> : vector<16x16xf32>
    %100 = tpu.matmul %98, %99, %cst_35 {dimension_numbers = #tpu.dot_dimension_numbers<[1], [0], [0], [1], [0, 0, 1, 1], [], []>} : vector<16x16xbf16>, vector<16x16xbf16>, vector<16x16xf32> -> vector<16x16xf32>
    %101 = arith.truncf %100 : vector<16x16xf32> to vector<16x16xbf16>
    %102 = vector.extract_strided_slice %59 {offsets = [16, 0], sizes = [16, 64], strides = [1, 1]} : vector<64x64xbf16> to vector<16x64xbf16>
    %cst_36 = arith.constant dense<0.000000e+00> : vector<16x64xf32>
    %103 = tpu.matmul %101, %102, %cst_36 {dimension_numbers = #tpu.dot_dimension_numbers<[1], [0], [0], [1], [0, 0, 1, 1], [], []>} : vector<16x16xbf16>, vector<16x64xbf16>, vector<16x64xf32> -> vector<16x64xf32>
    %104 = arith.addf %84, %103 : vector<16x64xf32>
    %105 = vector.extract_strided_slice %61 {offsets = [0, 32], sizes = [16, 16], strides = [1, 1]} : vector<16x64xbf16> to vector<16x16xbf16>
    %106 = vector.extract_strided_slice %62 {offsets = [0, 32], sizes = [16, 16], strides = [1, 1]} : vector<16x64xbf16> to vector<16x16xbf16>
    %cst_37 = arith.constant dense<0.000000e+00> : vector<16x16xf32>
    %107 = tpu.matmul %105, %106, %cst_37 {dimension_numbers = #tpu.dot_dimension_numbers<[1], [1], [0], [0], [0, 0, 1, 0], [], []>} : vector<16x16xbf16>, vector<16x16xbf16>, vector<16x16xf32> -> vector<16x16xf32>
    %cst_38 = arith.constant dense<0xFF800000> : vector<16xf32>
    %108 = vector.multi_reduction <maximumf>, %107, %cst_38 [1] : vector<16x16xf32> to vector<16xf32>
    %109 = vector.shape_cast %108 : vector<16xf32> to vector<16x1xf32>
    %110 = vector.broadcast %109 : vector<16x1xf32> to vector<16x16xf32>
    %111 = arith.subf %107, %110 : vector<16x16xf32>
    %112 = math.exp %111 : vector<16x16xf32>
    %cst_39 = arith.constant dense<0.000000e+00> : vector<16xf32>
    %113 = vector.multi_reduction <add>, %112, %cst_39 [1] : vector<16x16xf32> to vector<16xf32>
    %114 = vector.shape_cast %113 : vector<16xf32> to vector<16x1xf32>
    %115 = tpu.reciprocal %114 {approx = true} : vector<16x1xf32> -> vector<16x1xf32>
    %116 = vector.broadcast %115 : vector<16x1xf32> to vector<16x16xf32>
    %117 = arith.mulf %112, %116 : vector<16x16xf32>
    %118 = arith.truncf %117 : vector<16x16xf32> to vector<16x16xbf16>
    %119 = vector.extract_strided_slice %63 {offsets = [0, 32], sizes = [16, 16], strides = [1, 1]} : vector<16x64xbf16> to vector<16x16xbf16>
    %cst_40 = arith.constant dense<0.000000e+00> : vector<16x16xf32>
    %120 = tpu.matmul %118, %119, %cst_40 {dimension_numbers = #tpu.dot_dimension_numbers<[1], [0], [0], [1], [0, 0, 1, 1], [], []>} : vector<16x16xbf16>, vector<16x16xbf16>, vector<16x16xf32> -> vector<16x16xf32>
    %121 = arith.truncf %120 : vector<16x16xf32> to vector<16x16xbf16>
    %122 = vector.extract_strided_slice %59 {offsets = [32, 0], sizes = [16, 64], strides = [1, 1]} : vector<64x64xbf16> to vector<16x64xbf16>
    %cst_41 = arith.constant dense<0.000000e+00> : vector<16x64xf32>
    %123 = tpu.matmul %121, %122, %cst_41 {dimension_numbers = #tpu.dot_dimension_numbers<[1], [0], [0], [1], [0, 0, 1, 1], [], []>} : vector<16x16xbf16>, vector<16x64xbf16>, vector<16x64xf32> -> vector<16x64xf32>
    %124 = arith.addf %104, %123 : vector<16x64xf32>
    %125 = vector.extract_strided_slice %61 {offsets = [0, 48], sizes = [16, 16], strides = [1, 1]} : vector<16x64xbf16> to vector<16x16xbf16>
    %126 = vector.extract_strided_slice %62 {offsets = [0, 48], sizes = [16, 16], strides = [1, 1]} : vector<16x64xbf16> to vector<16x16xbf16>
    %cst_42 = arith.constant dense<0.000000e+00> : vector<16x16xf32>
    %127 = tpu.matmul %125, %126, %cst_42 {dimension_numbers = #tpu.dot_dimension_numbers<[1], [1], [0], [0], [0, 0, 1, 0], [], []>} : vector<16x16xbf16>, vector<16x16xbf16>, vector<16x16xf32> -> vector<16x16xf32>
    %cst_43 = arith.constant dense<0xFF800000> : vector<16xf32>
    %128 = vector.multi_reduction <maximumf>, %127, %cst_43 [1] : vector<16x16xf32> to vector<16xf32>
    %129 = vector.shape_cast %128 : vector<16xf32> to vector<16x1xf32>
    %130 = vector.broadcast %129 : vector<16x1xf32> to vector<16x16xf32>
    %131 = arith.subf %127, %130 : vector<16x16xf32>
    %132 = math.exp %131 : vector<16x16xf32>
    %cst_44 = arith.constant dense<0.000000e+00> : vector<16xf32>
    %133 = vector.multi_reduction <add>, %132, %cst_44 [1] : vector<16x16xf32> to vector<16xf32>
    %134 = vector.shape_cast %133 : vector<16xf32> to vector<16x1xf32>
    %135 = tpu.reciprocal %134 {approx = true} : vector<16x1xf32> -> vector<16x1xf32>
    %136 = vector.broadcast %135 : vector<16x1xf32> to vector<16x16xf32>
    %137 = arith.mulf %132, %136 : vector<16x16xf32>
    %138 = arith.truncf %137 : vector<16x16xf32> to vector<16x16xbf16>
    %139 = vector.extract_strided_slice %63 {offsets = [0, 48], sizes = [16, 16], strides = [1, 1]} : vector<16x64xbf16> to vector<16x16xbf16>
    %cst_45 = arith.constant dense<0.000000e+00> : vector<16x16xf32>
    %140 = tpu.matmul %138, %139, %cst_45 {dimension_numbers = #tpu.dot_dimension_numbers<[1], [0], [0], [1], [0, 0, 1, 1], [], []>} : vector<16x16xbf16>, vector<16x16xbf16>, vector<16x16xf32> -> vector<16x16xf32>
    %141 = arith.truncf %140 : vector<16x16xf32> to vector<16x16xbf16>
    %142 = vector.extract_strided_slice %59 {offsets = [48, 0], sizes = [16, 64], strides = [1, 1]} : vector<64x64xbf16> to vector<16x64xbf16>
    %cst_46 = arith.constant dense<0.000000e+00> : vector<16x64xf32>
    %143 = tpu.matmul %141, %142, %cst_46 {dimension_numbers = #tpu.dot_dimension_numbers<[1], [0], [0], [1], [0, 0, 1, 1], [], []>} : vector<16x16xbf16>, vector<16x64xbf16>, vector<16x64xf32> -> vector<16x64xf32>
    %144 = arith.addf %124, %143 : vector<16x64xf32>
    %145 = vector.broadcast %60 : vector<1x64xf32> to vector<16x64xf32>
    %146 = arith.addf %144, %145 : vector<16x64xf32>
    %147 = vector.broadcast %15 : vector<1x64xf32> to vector<16x64xf32>
    %148 = arith.mulf %147, %146 : vector<16x64xf32>
    %149 = arith.addf %23, %148 : vector<16x64xf32>
    %c0_47 = arith.constant 0 : index
    %c0_48 = arith.constant 0 : index
    %c0_49 = arith.constant 0 : index
    %150 = vector.load %arg2[%c0_47, %c0_48, %c0_49] : memref<1x16x64xf32, #tpu.memory_space<vmem>>, vector<1x16x64xf32>
    %151 = vector.shape_cast %150 : vector<1x16x64xf32> to vector<16x64xf32>
    %cst_50 = arith.constant dense<0.000000e+00> : vector<16xf32>
    %152 = vector.multi_reduction <add>, %149, %cst_50 [1] : vector<16x64xf32> to vector<16xf32>
    %153 = vector.shape_cast %152 : vector<16xf32> to vector<16x1xf32>
    %cst_51 = arith.constant 6.400000e+01 : f32
    %154 = vector.broadcast %cst_51 : f32 to vector<16x1xf32>
    %155 = arith.divf %153, %154 : vector<16x1xf32>
    %156 = vector.broadcast %155 : vector<16x1xf32> to vector<16x64xf32>
    %157 = arith.subf %149, %156 : vector<16x64xf32>
    %158 = arith.mulf %157, %157 : vector<16x64xf32>
    %cst_52 = arith.constant dense<0.000000e+00> : vector<16xf32>
    %159 = vector.multi_reduction <add>, %158, %cst_52 [1] : vector<16x64xf32> to vector<16xf32>
    %160 = vector.shape_cast %159 : vector<16xf32> to vector<16x1xf32>
    %cst_53 = arith.constant 6.400000e+01 : f32
    %161 = vector.broadcast %cst_53 : f32 to vector<16x1xf32>
    %162 = arith.divf %160, %161 : vector<16x1xf32>
    %163 = vector.broadcast %155 : vector<16x1xf32> to vector<16x64xf32>
    %164 = arith.subf %149, %163 : vector<16x64xf32>
    %cst_54 = arith.constant 9.99999997E-7 : f32
    %165 = vector.broadcast %cst_54 : f32 to vector<16x1xf32>
    %166 = arith.addf %162, %165 : vector<16x1xf32>
    %167 = math.rsqrt %166 : vector<16x1xf32>
    %168 = vector.broadcast %167 : vector<16x1xf32> to vector<16x64xf32>
    %169 = arith.mulf %164, %168 : vector<16x64xf32>
    %cst_55 = arith.constant 1.000000e+00 : f32
    %170 = vector.broadcast %cst_55 : f32 to vector<1x64xf32>
    %171 = arith.addf %170, %17 : vector<1x64xf32>
    %172 = vector.broadcast %171 : vector<1x64xf32> to vector<16x64xf32>
    %173 = arith.mulf %169, %172 : vector<16x64xf32>
    %174 = vector.broadcast %16 : vector<1x64xf32> to vector<16x64xf32>
    %175 = arith.addf %173, %174 : vector<16x64xf32>
    %cst_56 = arith.constant dense<0.000000e+00> : vector<16xf32>
    %176 = vector.multi_reduction <add>, %175, %cst_56 [1] : vector<16x64xf32> to vector<16xf32>
    %177 = vector.shape_cast %176 : vector<16xf32> to vector<16x1xf32>
    %cst_57 = arith.constant 6.400000e+01 : f32
    %178 = vector.broadcast %cst_57 : f32 to vector<16x1xf32>
    %179 = arith.divf %177, %178 : vector<16x1xf32>
    %180 = vector.broadcast %179 : vector<16x1xf32> to vector<16x64xf32>
    %181 = arith.subf %175, %180 : vector<16x64xf32>
    %182 = arith.mulf %181, %181 : vector<16x64xf32>
    %cst_58 = arith.constant dense<0.000000e+00> : vector<16xf32>
    %183 = vector.multi_reduction <add>, %182, %cst_58 [1] : vector<16x64xf32> to vector<16xf32>
    %184 = vector.shape_cast %183 : vector<16xf32> to vector<16x1xf32>
    %cst_59 = arith.constant 6.400000e+01 : f32
    %185 = vector.broadcast %cst_59 : f32 to vector<16x1xf32>
    %186 = arith.divf %184, %185 : vector<16x1xf32>
    %187 = vector.broadcast %179 : vector<16x1xf32> to vector<16x64xf32>
    %188 = arith.subf %175, %187 : vector<16x64xf32>
    %cst_60 = arith.constant 9.99999997E-7 : f32
    %189 = vector.broadcast %cst_60 : f32 to vector<16x1xf32>
    %190 = arith.addf %186, %189 : vector<16x1xf32>
    %191 = math.rsqrt %190 : vector<16x1xf32>
    %192 = vector.broadcast %191 : vector<16x1xf32> to vector<16x64xf32>
    %193 = arith.mulf %188, %192 : vector<16x64xf32>
    %c0_61 = arith.constant 0 : index
    %c0_62 = arith.constant 0 : index
    %194 = vector.load %arg10[%c0_61, %c0_62] : memref<1x64xf32, #tpu.memory_space<vmem>>, vector<1x64xf32>
    %195 = vector.broadcast %194 : vector<1x64xf32> to vector<16x64xf32>
    %196 = arith.mulf %193, %195 : vector<16x64xf32>
    %c0_63 = arith.constant 0 : index
    %c0_64 = arith.constant 0 : index
    %197 = vector.load %arg11[%c0_63, %c0_64] : memref<1x64xf32, #tpu.memory_space<vmem>>, vector<1x64xf32>
    %198 = vector.broadcast %197 : vector<1x64xf32> to vector<16x64xf32>
    %199 = arith.addf %196, %198 : vector<16x64xf32>
    %cst_65 = arith.constant 2.500000e-01 : f32
    %200 = vector.broadcast %cst_65 : f32 to vector<16x64xf32>
    %201 = arith.mulf %199, %200 : vector<16x64xf32>
    %202 = arith.truncf %151 : vector<16x64xf32> to vector<16x64xbf16>
    %c0_66 = arith.constant 0 : index
    %c0_67 = arith.constant 0 : index
    %203 = vector.load %arg12[%c0_66, %c0_67] : memref<64x128xbf16, #tpu.memory_space<vmem>>, vector<64x128xbf16>
    %cst_68 = arith.constant dense<0.000000e+00> : vector<16x128xf32>
    %204 = tpu.matmul %202, %203, %cst_68 {dimension_numbers = #tpu.dot_dimension_numbers<[1], [0], [0], [1], [0, 0, 1, 1], [], []>} : vector<16x64xbf16>, vector<64x128xbf16>, vector<16x128xf32> -> vector<16x128xf32>
    %205 = vector.extract_strided_slice %204 {offsets = [0, 0], sizes = [16, 64], strides = [1, 1]} : vector<16x128xf32> to vector<16x64xf32>
    %cst_69 = arith.constant dense<0.000000e+00> : vector<16xf32>
    %206 = vector.multi_reduction <add>, %205, %cst_69 [1] : vector<16x64xf32> to vector<16xf32>
    %207 = vector.shape_cast %206 : vector<16xf32> to vector<16x1xf32>
    %cst_70 = arith.constant 6.400000e+01 : f32
    %208 = vector.broadcast %cst_70 : f32 to vector<16x1xf32>
    %209 = arith.divf %207, %208 : vector<16x1xf32>
    %210 = vector.broadcast %209 : vector<16x1xf32> to vector<16x64xf32>
    %211 = arith.subf %205, %210 : vector<16x64xf32>
    %212 = arith.mulf %211, %211 : vector<16x64xf32>
    %cst_71 = arith.constant dense<0.000000e+00> : vector<16xf32>
    %213 = vector.multi_reduction <add>, %212, %cst_71 [1] : vector<16x64xf32> to vector<16xf32>
    %214 = vector.shape_cast %213 : vector<16xf32> to vector<16x1xf32>
    %cst_72 = arith.constant 6.400000e+01 : f32
    %215 = vector.broadcast %cst_72 : f32 to vector<16x1xf32>
    %216 = arith.divf %214, %215 : vector<16x1xf32>
    %217 = vector.broadcast %209 : vector<16x1xf32> to vector<16x64xf32>
    %218 = arith.subf %205, %217 : vector<16x64xf32>
    %cst_73 = arith.constant 9.99999997E-7 : f32
    %219 = vector.broadcast %cst_73 : f32 to vector<16x1xf32>
    %220 = arith.addf %216, %219 : vector<16x1xf32>
    %221 = math.rsqrt %220 : vector<16x1xf32>
    %222 = vector.broadcast %221 : vector<16x1xf32> to vector<16x64xf32>
    %223 = arith.mulf %218, %222 : vector<16x64xf32>
    %c0_74 = arith.constant 0 : index
    %c0_75 = arith.constant 0 : index
    %224 = vector.load %arg13[%c0_74, %c0_75] : memref<1x64xf32, #tpu.memory_space<vmem>>, vector<1x64xf32>
    %225 = vector.broadcast %224 : vector<1x64xf32> to vector<16x64xf32>
    %226 = arith.mulf %223, %225 : vector<16x64xf32>
    %c0_76 = arith.constant 0 : index
    %c0_77 = arith.constant 0 : index
    %227 = vector.load %arg14[%c0_76, %c0_77] : memref<1x64xf32, #tpu.memory_space<vmem>>, vector<1x64xf32>
    %228 = vector.broadcast %227 : vector<1x64xf32> to vector<16x64xf32>
    %229 = arith.addf %226, %228 : vector<16x64xf32>
    %230 = vector.extract_strided_slice %204 {offsets = [0, 64], sizes = [16, 64], strides = [1, 1]} : vector<16x128xf32> to vector<16x64xf32>
    %c0_78 = arith.constant 0 : index
    %c0_79 = arith.constant 0 : index
    %231 = vector.load %arg15[%c0_78, %c0_79] : memref<64x64xbf16, #tpu.memory_space<vmem>>, vector<64x64xbf16>
    %c0_80 = arith.constant 0 : index
    %c0_81 = arith.constant 0 : index
    %232 = vector.load %arg16[%c0_80, %c0_81] : memref<1x64xf32, #tpu.memory_space<vmem>>, vector<1x64xf32>
    %233 = arith.truncf %201 : vector<16x64xf32> to vector<16x64xbf16>
    %234 = arith.truncf %229 : vector<16x64xf32> to vector<16x64xbf16>
    %235 = arith.truncf %230 : vector<16x64xf32> to vector<16x64xbf16>
    %cst_82 = arith.constant 0.000000e+00 : f32
    %236 = vector.broadcast %cst_82 : f32 to vector<16x64xf32>
    %237 = vector.extract_strided_slice %233 {offsets = [0, 0], sizes = [16, 16], strides = [1, 1]} : vector<16x64xbf16> to vector<16x16xbf16>
    %238 = vector.extract_strided_slice %234 {offsets = [0, 0], sizes = [16, 16], strides = [1, 1]} : vector<16x64xbf16> to vector<16x16xbf16>
    %cst_83 = arith.constant dense<0.000000e+00> : vector<16x16xf32>
    %239 = tpu.matmul %237, %238, %cst_83 {dimension_numbers = #tpu.dot_dimension_numbers<[1], [1], [0], [0], [0, 0, 1, 0], [], []>} : vector<16x16xbf16>, vector<16x16xbf16>, vector<16x16xf32> -> vector<16x16xf32>
    %cst_84 = arith.constant dense<0xFF800000> : vector<16xf32>
    %240 = vector.multi_reduction <maximumf>, %239, %cst_84 [1] : vector<16x16xf32> to vector<16xf32>
    %241 = vector.shape_cast %240 : vector<16xf32> to vector<16x1xf32>
    %242 = vector.broadcast %241 : vector<16x1xf32> to vector<16x16xf32>
    %243 = arith.subf %239, %242 : vector<16x16xf32>
    %244 = math.exp %243 : vector<16x16xf32>
    %cst_85 = arith.constant dense<0.000000e+00> : vector<16xf32>
    %245 = vector.multi_reduction <add>, %244, %cst_85 [1] : vector<16x16xf32> to vector<16xf32>
    %246 = vector.shape_cast %245 : vector<16xf32> to vector<16x1xf32>
    %247 = tpu.reciprocal %246 {approx = true} : vector<16x1xf32> -> vector<16x1xf32>
    %248 = vector.broadcast %247 : vector<16x1xf32> to vector<16x16xf32>
    %249 = arith.mulf %244, %248 : vector<16x16xf32>
    %250 = arith.truncf %249 : vector<16x16xf32> to vector<16x16xbf16>
    %251 = vector.extract_strided_slice %235 {offsets = [0, 0], sizes = [16, 16], strides = [1, 1]} : vector<16x64xbf16> to vector<16x16xbf16>
    %cst_86 = arith.constant dense<0.000000e+00> : vector<16x16xf32>
    %252 = tpu.matmul %250, %251, %cst_86 {dimension_numbers = #tpu.dot_dimension_numbers<[1], [0], [0], [1], [0, 0, 1, 1], [], []>} : vector<16x16xbf16>, vector<16x16xbf16>, vector<16x16xf32> -> vector<16x16xf32>
    %253 = arith.truncf %252 : vector<16x16xf32> to vector<16x16xbf16>
    %254 = vector.extract_strided_slice %231 {offsets = [0, 0], sizes = [16, 64], strides = [1, 1]} : vector<64x64xbf16> to vector<16x64xbf16>
    %cst_87 = arith.constant dense<0.000000e+00> : vector<16x64xf32>
    %255 = tpu.matmul %253, %254, %cst_87 {dimension_numbers = #tpu.dot_dimension_numbers<[1], [0], [0], [1], [0, 0, 1, 1], [], []>} : vector<16x16xbf16>, vector<16x64xbf16>, vector<16x64xf32> -> vector<16x64xf32>
    %256 = arith.addf %236, %255 : vector<16x64xf32>
    %257 = vector.extract_strided_slice %233 {offsets = [0, 16], sizes = [16, 16], strides = [1, 1]} : vector<16x64xbf16> to vector<16x16xbf16>
    %258 = vector.extract_strided_slice %234 {offsets = [0, 16], sizes = [16, 16], strides = [1, 1]} : vector<16x64xbf16> to vector<16x16xbf16>
    %cst_88 = arith.constant dense<0.000000e+00> : vector<16x16xf32>
    %259 = tpu.matmul %257, %258, %cst_88 {dimension_numbers = #tpu.dot_dimension_numbers<[1], [1], [0], [0], [0, 0, 1, 0], [], []>} : vector<16x16xbf16>, vector<16x16xbf16>, vector<16x16xf32> -> vector<16x16xf32>
    %cst_89 = arith.constant dense<0xFF800000> : vector<16xf32>
    %260 = vector.multi_reduction <maximumf>, %259, %cst_89 [1] : vector<16x16xf32> to vector<16xf32>
    %261 = vector.shape_cast %260 : vector<16xf32> to vector<16x1xf32>
    %262 = vector.broadcast %261 : vector<16x1xf32> to vector<16x16xf32>
    %263 = arith.subf %259, %262 : vector<16x16xf32>
    %264 = math.exp %263 : vector<16x16xf32>
    %cst_90 = arith.constant dense<0.000000e+00> : vector<16xf32>
    %265 = vector.multi_reduction <add>, %264, %cst_90 [1] : vector<16x16xf32> to vector<16xf32>
    %266 = vector.shape_cast %265 : vector<16xf32> to vector<16x1xf32>
    %267 = tpu.reciprocal %266 {approx = true} : vector<16x1xf32> -> vector<16x1xf32>
    %268 = vector.broadcast %267 : vector<16x1xf32> to vector<16x16xf32>
    %269 = arith.mulf %264, %268 : vector<16x16xf32>
    %270 = arith.truncf %269 : vector<16x16xf32> to vector<16x16xbf16>
    %271 = vector.extract_strided_slice %235 {offsets = [0, 16], sizes = [16, 16], strides = [1, 1]} : vector<16x64xbf16> to vector<16x16xbf16>
    %cst_91 = arith.constant dense<0.000000e+00> : vector<16x16xf32>
    %272 = tpu.matmul %270, %271, %cst_91 {dimension_numbers = #tpu.dot_dimension_numbers<[1], [0], [0], [1], [0, 0, 1, 1], [], []>} : vector<16x16xbf16>, vector<16x16xbf16>, vector<16x16xf32> -> vector<16x16xf32>
    %273 = arith.truncf %272 : vector<16x16xf32> to vector<16x16xbf16>
    %274 = vector.extract_strided_slice %231 {offsets = [16, 0], sizes = [16, 64], strides = [1, 1]} : vector<64x64xbf16> to vector<16x64xbf16>
    %cst_92 = arith.constant dense<0.000000e+00> : vector<16x64xf32>
    %275 = tpu.matmul %273, %274, %cst_92 {dimension_numbers = #tpu.dot_dimension_numbers<[1], [0], [0], [1], [0, 0, 1, 1], [], []>} : vector<16x16xbf16>, vector<16x64xbf16>, vector<16x64xf32> -> vector<16x64xf32>
    %276 = arith.addf %256, %275 : vector<16x64xf32>
    %277 = vector.extract_strided_slice %233 {offsets = [0, 32], sizes = [16, 16], strides = [1, 1]} : vector<16x64xbf16> to vector<16x16xbf16>
    %278 = vector.extract_strided_slice %234 {offsets = [0, 32], sizes = [16, 16], strides = [1, 1]} : vector<16x64xbf16> to vector<16x16xbf16>
    %cst_93 = arith.constant dense<0.000000e+00> : vector<16x16xf32>
    %279 = tpu.matmul %277, %278, %cst_93 {dimension_numbers = #tpu.dot_dimension_numbers<[1], [1], [0], [0], [0, 0, 1, 0], [], []>} : vector<16x16xbf16>, vector<16x16xbf16>, vector<16x16xf32> -> vector<16x16xf32>
    %cst_94 = arith.constant dense<0xFF800000> : vector<16xf32>
    %280 = vector.multi_reduction <maximumf>, %279, %cst_94 [1] : vector<16x16xf32> to vector<16xf32>
    %281 = vector.shape_cast %280 : vector<16xf32> to vector<16x1xf32>
    %282 = vector.broadcast %281 : vector<16x1xf32> to vector<16x16xf32>
    %283 = arith.subf %279, %282 : vector<16x16xf32>
    %284 = math.exp %283 : vector<16x16xf32>
    %cst_95 = arith.constant dense<0.000000e+00> : vector<16xf32>
    %285 = vector.multi_reduction <add>, %284, %cst_95 [1] : vector<16x16xf32> to vector<16xf32>
    %286 = vector.shape_cast %285 : vector<16xf32> to vector<16x1xf32>
    %287 = tpu.reciprocal %286 {approx = true} : vector<16x1xf32> -> vector<16x1xf32>
    %288 = vector.broadcast %287 : vector<16x1xf32> to vector<16x16xf32>
    %289 = arith.mulf %284, %288 : vector<16x16xf32>
    %290 = arith.truncf %289 : vector<16x16xf32> to vector<16x16xbf16>
    %291 = vector.extract_strided_slice %235 {offsets = [0, 32], sizes = [16, 16], strides = [1, 1]} : vector<16x64xbf16> to vector<16x16xbf16>
    %cst_96 = arith.constant dense<0.000000e+00> : vector<16x16xf32>
    %292 = tpu.matmul %290, %291, %cst_96 {dimension_numbers = #tpu.dot_dimension_numbers<[1], [0], [0], [1], [0, 0, 1, 1], [], []>} : vector<16x16xbf16>, vector<16x16xbf16>, vector<16x16xf32> -> vector<16x16xf32>
    %293 = arith.truncf %292 : vector<16x16xf32> to vector<16x16xbf16>
    %294 = vector.extract_strided_slice %231 {offsets = [32, 0], sizes = [16, 64], strides = [1, 1]} : vector<64x64xbf16> to vector<16x64xbf16>
    %cst_97 = arith.constant dense<0.000000e+00> : vector<16x64xf32>
    %295 = tpu.matmul %293, %294, %cst_97 {dimension_numbers = #tpu.dot_dimension_numbers<[1], [0], [0], [1], [0, 0, 1, 1], [], []>} : vector<16x16xbf16>, vector<16x64xbf16>, vector<16x64xf32> -> vector<16x64xf32>
    %296 = arith.addf %276, %295 : vector<16x64xf32>
    %297 = vector.extract_strided_slice %233 {offsets = [0, 48], sizes = [16, 16], strides = [1, 1]} : vector<16x64xbf16> to vector<16x16xbf16>
    %298 = vector.extract_strided_slice %234 {offsets = [0, 48], sizes = [16, 16], strides = [1, 1]} : vector<16x64xbf16> to vector<16x16xbf16>
    %cst_98 = arith.constant dense<0.000000e+00> : vector<16x16xf32>
    %299 = tpu.matmul %297, %298, %cst_98 {dimension_numbers = #tpu.dot_dimension_numbers<[1], [1], [0], [0], [0, 0, 1, 0], [], []>} : vector<16x16xbf16>, vector<16x16xbf16>, vector<16x16xf32> -> vector<16x16xf32>
    %cst_99 = arith.constant dense<0xFF800000> : vector<16xf32>
    %300 = vector.multi_reduction <maximumf>, %299, %cst_99 [1] : vector<16x16xf32> to vector<16xf32>
    %301 = vector.shape_cast %300 : vector<16xf32> to vector<16x1xf32>
    %302 = vector.broadcast %301 : vector<16x1xf32> to vector<16x16xf32>
    %303 = arith.subf %299, %302 : vector<16x16xf32>
    %304 = math.exp %303 : vector<16x16xf32>
    %cst_100 = arith.constant dense<0.000000e+00> : vector<16xf32>
    %305 = vector.multi_reduction <add>, %304, %cst_100 [1] : vector<16x16xf32> to vector<16xf32>
    %306 = vector.shape_cast %305 : vector<16xf32> to vector<16x1xf32>
    %307 = tpu.reciprocal %306 {approx = true} : vector<16x1xf32> -> vector<16x1xf32>
    %308 = vector.broadcast %307 : vector<16x1xf32> to vector<16x16xf32>
    %309 = arith.mulf %304, %308 : vector<16x16xf32>
    %310 = arith.truncf %309 : vector<16x16xf32> to vector<16x16xbf16>
    %311 = vector.extract_strided_slice %235 {offsets = [0, 48], sizes = [16, 16], strides = [1, 1]} : vector<16x64xbf16> to vector<16x16xbf16>
    %cst_101 = arith.constant dense<0.000000e+00> : vector<16x16xf32>
    %312 = tpu.matmul %310, %311, %cst_101 {dimension_numbers = #tpu.dot_dimension_numbers<[1], [0], [0], [1], [0, 0, 1, 1], [], []>} : vector<16x16xbf16>, vector<16x16xbf16>, vector<16x16xf32> -> vector<16x16xf32>
    %313 = arith.truncf %312 : vector<16x16xf32> to vector<16x16xbf16>
    %314 = vector.extract_strided_slice %231 {offsets = [48, 0], sizes = [16, 64], strides = [1, 1]} : vector<64x64xbf16> to vector<16x64xbf16>
    %cst_102 = arith.constant dense<0.000000e+00> : vector<16x64xf32>
    %315 = tpu.matmul %313, %314, %cst_102 {dimension_numbers = #tpu.dot_dimension_numbers<[1], [0], [0], [1], [0, 0, 1, 1], [], []>} : vector<16x16xbf16>, vector<16x64xbf16>, vector<16x64xf32> -> vector<16x64xf32>
    %316 = arith.addf %296, %315 : vector<16x64xf32>
    %317 = vector.broadcast %232 : vector<1x64xf32> to vector<16x64xf32>
    %318 = arith.addf %316, %317 : vector<16x64xf32>
    %319 = vector.broadcast %18 : vector<1x64xf32> to vector<16x64xf32>
    %320 = arith.mulf %319, %318 : vector<16x64xf32>
    %321 = arith.addf %149, %320 : vector<16x64xf32>
    %cst_103 = arith.constant dense<0.000000e+00> : vector<16xf32>
    %322 = vector.multi_reduction <add>, %321, %cst_103 [1] : vector<16x64xf32> to vector<16xf32>
    %323 = vector.shape_cast %322 : vector<16xf32> to vector<16x1xf32>
    %cst_104 = arith.constant 6.400000e+01 : f32
    %324 = vector.broadcast %cst_104 : f32 to vector<16x1xf32>
    %325 = arith.divf %323, %324 : vector<16x1xf32>
    %326 = vector.broadcast %325 : vector<16x1xf32> to vector<16x64xf32>
    %327 = arith.subf %321, %326 : vector<16x64xf32>
    %328 = arith.mulf %327, %327 : vector<16x64xf32>
    %cst_105 = arith.constant dense<0.000000e+00> : vector<16xf32>
    %329 = vector.multi_reduction <add>, %328, %cst_105 [1] : vector<16x64xf32> to vector<16xf32>
    %330 = vector.shape_cast %329 : vector<16xf32> to vector<16x1xf32>
    %cst_106 = arith.constant 6.400000e+01 : f32
    %331 = vector.broadcast %cst_106 : f32 to vector<16x1xf32>
    %332 = arith.divf %330, %331 : vector<16x1xf32>
    %333 = vector.broadcast %325 : vector<16x1xf32> to vector<16x64xf32>
    %334 = arith.subf %321, %333 : vector<16x64xf32>
    %cst_107 = arith.constant 9.99999997E-7 : f32
    %335 = vector.broadcast %cst_107 : f32 to vector<16x1xf32>
    %336 = arith.addf %332, %335 : vector<16x1xf32>
    %337 = math.rsqrt %336 : vector<16x1xf32>
    %338 = vector.broadcast %337 : vector<16x1xf32> to vector<16x64xf32>
    %339 = arith.mulf %334, %338 : vector<16x64xf32>
    %cst_108 = arith.constant 1.000000e+00 : f32
    %340 = vector.broadcast %cst_108 : f32 to vector<1x64xf32>
    %341 = arith.addf %340, %20 : vector<1x64xf32>
    %342 = vector.broadcast %341 : vector<1x64xf32> to vector<16x64xf32>
    %343 = arith.mulf %339, %342 : vector<16x64xf32>
    %344 = vector.broadcast %19 : vector<1x64xf32> to vector<16x64xf32>
    %345 = arith.addf %343, %344 : vector<16x64xf32>
    %346 = arith.truncf %345 : vector<16x64xf32> to vector<16x64xbf16>
    %c0_109 = arith.constant 0 : index
    %c0_110 = arith.constant 0 : index
    %347 = vector.load %arg17[%c0_109, %c0_110] : memref<64x256xbf16, #tpu.memory_space<vmem>>, vector<64x256xbf16>
    %cst_111 = arith.constant dense<0.000000e+00> : vector<16x256xf32>
    %348 = tpu.matmul %346, %347, %cst_111 {dimension_numbers = #tpu.dot_dimension_numbers<[1], [0], [0], [1], [0, 0, 1, 1], [], []>} : vector<16x64xbf16>, vector<64x256xbf16>, vector<16x256xf32> -> vector<16x256xf32>
    %c0_112 = arith.constant 0 : index
    %c0_113 = arith.constant 0 : index
    %349 = vector.load %arg18[%c0_112, %c0_113] : memref<1x256xf32, #tpu.memory_space<vmem>>, vector<1x256xf32>
    %350 = vector.broadcast %349 : vector<1x256xf32> to vector<16x256xf32>
    %351 = arith.addf %348, %350 : vector<16x256xf32>
    %cst_114 = arith.constant 5.000000e-01 : f32
    %352 = vector.broadcast %cst_114 : f32 to vector<16x256xf32>
    %353 = arith.mulf %352, %351 : vector<16x256xf32>
    %cst_115 = arith.constant 4.471500e-02 : f32
    %354 = vector.broadcast %cst_115 : f32 to vector<16x256xf32>
    %355 = arith.mulf %354, %351 : vector<16x256xf32>
    %356 = arith.mulf %355, %351 : vector<16x256xf32>
    %357 = arith.mulf %356, %351 : vector<16x256xf32>
    %358 = arith.addf %351, %357 : vector<16x256xf32>
    %cst_116 = arith.constant 0.797884583 : f32
    %359 = vector.broadcast %cst_116 : f32 to vector<16x256xf32>
    %360 = arith.mulf %359, %358 : vector<16x256xf32>
    %361 = math.tanh %360 : vector<16x256xf32>
    %cst_117 = arith.constant 1.000000e+00 : f32
    %362 = vector.broadcast %cst_117 : f32 to vector<16x256xf32>
    %363 = arith.addf %362, %361 : vector<16x256xf32>
    %364 = arith.mulf %353, %363 : vector<16x256xf32>
    %365 = arith.truncf %364 : vector<16x256xf32> to vector<16x256xbf16>
    %c0_118 = arith.constant 0 : index
    %c0_119 = arith.constant 0 : index
    %366 = vector.load %arg19[%c0_118, %c0_119] : memref<256x64xbf16, #tpu.memory_space<vmem>>, vector<256x64xbf16>
    %cst_120 = arith.constant dense<0.000000e+00> : vector<16x64xf32>
    %367 = tpu.matmul %365, %366, %cst_120 {dimension_numbers = #tpu.dot_dimension_numbers<[1], [0], [0], [1], [0, 0, 1, 1], [], []>} : vector<16x256xbf16>, vector<256x64xbf16>, vector<16x64xf32> -> vector<16x64xf32>
    %c0_121 = arith.constant 0 : index
    %c0_122 = arith.constant 0 : index
    %368 = vector.load %arg20[%c0_121, %c0_122] : memref<1x64xf32, #tpu.memory_space<vmem>>, vector<1x64xf32>
    %369 = vector.broadcast %368 : vector<1x64xf32> to vector<16x64xf32>
    %370 = arith.addf %367, %369 : vector<16x64xf32>
    %371 = vector.broadcast %21 : vector<1x64xf32> to vector<16x64xf32>
    %372 = arith.mulf %371, %370 : vector<16x64xf32>
    %373 = arith.addf %321, %372 : vector<16x64xf32>
    %c0_123 = arith.constant 0 : index
    %c0_124 = arith.constant 0 : index
    %c0_125 = arith.constant 0 : index
    %374 = vector.load %arg21[%c0_123, %c0_124, %c0_125] : memref<1x16x64xf32, #tpu.memory_space<vmem>>, vector<1x16x64xf32>
    %375 = vector.shape_cast %374 : vector<1x16x64xf32> to vector<16x64xf32>
    %376 = vector.shape_cast %373 : vector<16x64xf32> to vector<1x16x64xf32>
    tpu.vector_store %arg21[%c0_123, %c0_124, %c0_125], %376 {strides = array<i32>} : memref<1x16x64xf32, #tpu.memory_space<vmem>>, vector<1x16x64xf32>,
    return
  }
  func.func @transform_0(%arg0: i32) -> (i32, i32, i32) {
    %c0_i32 = arith.constant 0 : i32
    %c0_i32_0 = arith.constant 0 : i32
    %c0_i32_1 = arith.constant 0 : i32
    return %arg0, %c0_i32, %c0_i32_0 : i32, i32, i32
  }
  func.func @transform_1(%arg0: i32) -> (i32, i32, i32) {
    %c0_i32 = arith.constant 0 : i32
    %c0_i32_0 = arith.constant 0 : i32
    %c0_i32_1 = arith.constant 0 : i32
    return %arg0, %c0_i32, %c0_i32_0 : i32, i32, i32
  }
  func.func @transform_2(%arg0: i32) -> (i32, i32, i32) {
    %c0_i32 = arith.constant 0 : i32
    %c0_i32_0 = arith.constant 0 : i32
    %c0_i32_1 = arith.constant 0 : i32
    return %arg0, %c0_i32, %c0_i32_0 : i32, i32, i32
  }
  func.func @transform_3(%arg0: i32) -> (i32, i32) {
    %c0_i32 = arith.constant 0 : i32
    %c0_i32_0 = arith.constant 0 : i32
    %c0_i32_1 = arith.constant 0 : i32
    return %c0_i32, %c0_i32_0 : i32, i32
  }
  func.func @transform_4(%arg0: i32) -> (i32, i32) {
    %c0_i32 = arith.constant 0 : i32
    %c0_i32_0 = arith.constant 0 : i32
    %c0_i32_1 = arith.constant 0 : i32
    return %c0_i32, %c0_i32_0 : i32, i32
  }
  func.func @transform_5(%arg0: i32) -> (i32, i32) {
    %c0_i32 = arith.constant 0 : i32
    %c0_i32_0 = arith.constant 0 : i32
    %c0_i32_1 = arith.constant 0 : i32
    return %c0_i32, %c0_i32_0 : i32, i32
  }
  func.func @transform_6(%arg0: i32) -> (i32, i32) {
    %c0_i32 = arith.constant 0 : i32
    %c0_i32_0 = arith.constant 0 : i32
    %c0_i32_1 = arith.constant 0 : i32
    return %c0_i32, %c0_i32_0 : i32, i32
  }
  func.func @transform_7(%arg0: i32) -> (i32, i32) {
    %c0_i32 = arith.constant 0 : i32
    %c0_i32_0 = arith.constant 0 : i32
    %c0_i32_1 = arith.constant 0 : i32
    return %c0_i32, %c0_i32_0 : i32, i32
  }
  func.func @transform_8(%arg0: i32) -> (i32, i32) {
    %c0_i32 = arith.constant 0 : i32
    %c0_i32_0 = arith.constant 0 : i32
    %c0_i32_1 = arith.constant 0 : i32
    return %c0_i32, %c0_i32_0 : i32, i32
  }
  func.func @transform_9(%arg0: i32) -> (i32, i32) {
    %c0_i32 = arith.constant 0 : i32
    %c0_i32_0 = arith.constant 0 : i32
    %c0_i32_1 = arith.constant 0 : i32
    return %c0_i32, %c0_i32_0 : i32, i32
  }
  func.func @transform_10(%arg0: i32) -> (i32, i32) {
    %c0_i32 = arith.constant 0 : i32
    %c0_i32_0 = arith.constant 0 : i32
    %c0_i32_1 = arith.constant 0 : i32
    return %c0_i32, %c0_i32_0 : i32, i32
  }
  func.func @transform_11(%arg0: i32) -> (i32, i32) {
    %c0_i32 = arith.constant 0 : i32
    %c0_i32_0 = arith.constant 0 : i32
    %c0_i32_1 = arith.constant 0 : i32
    return %c0_i32, %c0_i32_0 : i32, i32
  }
  func.func @transform_12(%arg0: i32) -> (i32, i32) {
    %c0_i32 = arith.constant 0 : i32
    %c0_i32_0 = arith.constant 0 : i32
    %c0_i32_1 = arith.constant 0 : i32
    return %c0_i32, %c0_i32_0 : i32, i32
  }
  func.func @transform_13(%arg0: i32) -> (i32, i32) {
    %c0_i32 = arith.constant 0 : i32
    %c0_i32_0 = arith.constant 0 : i32
    %c0_i32_1 = arith.constant 0 : i32
    return %c0_i32, %c0_i32_0 : i32, i32
  }
  func.func @transform_14(%arg0: i32) -> (i32, i32) {
    %c0_i32 = arith.constant 0 : i32
    %c0_i32_0 = arith.constant 0 : i32
    %c0_i32_1 = arith.constant 0 : i32
    return %c0_i32, %c0_i32_0 : i32, i32
  }
  func.func @transform_15(%arg0: i32) -> (i32, i32) {
    %c0_i32 = arith.constant 0 : i32
    %c0_i32_0 = arith.constant 0 : i32
    %c0_i32_1 = arith.constant 0 : i32
    return %c0_i32, %c0_i32_0 : i32, i32
  }
  func.func @transform_16(%arg0: i32) -> (i32, i32) {
    %c0_i32 = arith.constant 0 : i32
    %c0_i32_0 = arith.constant 0 : i32
    %c0_i32_1 = arith.constant 0 : i32
    return %c0_i32, %c0_i32_0 : i32, i32
  }
  func.func @transform_17(%arg0: i32) -> (i32, i32) {
    %c0_i32 = arith.constant 0 : i32
    %c0_i32_0 = arith.constant 0 : i32
    %c0_i32_1 = arith.constant 0 : i32
    return %c0_i32, %c0_i32_0 : i32, i32
  }
  func.func @transform_18(%arg0: i32) -> (i32, i32) {
    %c0_i32 = arith.constant 0 : i32
    %c0_i32_0 = arith.constant 0 : i32
    %c0_i32_1 = arith.constant 0 : i32
    return %c0_i32, %c0_i32_0 : i32, i32
  }
  func.func @transform_19(%arg0: i32) -> (i32, i32) {
    %c0_i32 = arith.constant 0 : i32
    %c0_i32_0 = arith.constant 0 : i32
    %c0_i32_1 = arith.constant 0 : i32
    return %c0_i32, %c0_i32_0 : i32, i32
  }
  func.func @transform_20(%arg0: i32) -> (i32, i32, i32) {
    %c0_i32 = arith.constant 0 : i32
    %c0_i32_0 = arith.constant 0 : i32
    %c0_i32_1 = arith.constant 0 : i32
    return %arg0, %c0_i32, %c0_i32_0 : i32, i32, i32
  }
}

</mosaic_0001>

<llo_original>
// kernel: tpu_custom_call.1
$region0: #{tpu_custom_call.1}
  #allocation0 [shape = 'u32[]', space=smem, size = 0x4, offset = 0x4, fixed_abs, tag = 'smem constant byte address 0x4 - core index']
  #allocation1 [shape = 'u32[144,128]{1,0:T(1,128)}', space=vmem, size = 0x12000, scoped, tag = 'internal scratch']
  %s0 = inlined_call_operand.vmem [shape: f32[2,16,64], index: 0, kind: input, shape index: {}]
  %s1 = inlined_call_operand.hbm [shape: f32[2,16,64], index: 1, kind: input, shape index: {}]
  %s2 = inlined_call_operand.vmem [shape: f32[2,1,64], index: 2, kind: input, shape index: {}]
  %s3 = inlined_call_operand.vmem [shape: bf16[64,576], index: 3, kind: input, shape index: {}]
  %s4 = inlined_call_operand.hbm [shape: f32[1,576], index: 4, kind: input, shape index: {}]
  %s5 = inlined_call_operand.hbm [shape: bf16[64,192], index: 5, kind: input, shape index: {}]
  %s6 = inlined_call_operand.vmem [shape: f32[1,192], index: 6, kind: input, shape index: {}]
  %s7 = inlined_call_operand.hbm [shape: bf16[64,64], index: 7, kind: input, shape index: {}]
  %s8 = inlined_call_operand.hbm [shape: f32[1,64], index: 8, kind: input, shape index: {}]
  %s9 = inlined_call_operand.hbm [shape: f32[1,64], index: 9, kind: input, shape index: {}]
  %s10 = inlined_call_operand.hbm [shape: f32[1,64], index: 10, kind: input, shape index: {}]
  %s11 = inlined_call_operand.hbm [shape: bf16[64,128], index: 11, kind: input, shape index: {}]
  %s12 = inlined_call_operand.hbm [shape: f32[1,64], index: 12, kind: input, shape index: {}]
  %s13 = inlined_call_operand.hbm [shape: f32[1,64], index: 13, kind: input, shape index: {}]
  %s14 = inlined_call_operand.hbm [shape: bf16[64,64], index: 14, kind: input, shape index: {}]
  %s15 = inlined_call_operand.hbm [shape: f32[1,64], index: 15, kind: input, shape index: {}]
  %s16 = inlined_call_operand.hbm [shape: bf16[64,256], index: 16, kind: input, shape index: {}]
  %s17 = inlined_call_operand.hbm [shape: f32[1,256], index: 17, kind: input, shape index: {}]
  %s18 = inlined_call_operand.vmem [shape: bf16[256,64], index: 18, kind: input, shape index: {}]
  %s19 = inlined_call_operand.vmem [shape: f32[1,64], index: 19, kind: input, shape index: {}]
  %s20 = inlined_call_operand.hbm [shape: f32[2,16,64], index: 20, kind: output, shape index: {}]
  %s21 = sld [smem:[#allocation0]]
  $region169: #{tpu_custom_call.1} parent=0
    _
  %s23 = ssub.s32 1, %s21
  %s24 = scalar_select 0, %s23, %s21
  $region1: #{tpu_custom_call.1} parent=0
    #allocation2 [shape = 'u8[16384]{0}', space=vmem, size = 0x4000, scoped, tag = 'input window, operand 1']
    #allocation3 [shape = 's32[2]{0}', space=sflag, size = 0x8, scoped, tag = 'scoped memory for tpu_custom_call.1']
    #allocation4 [shape = 's32[2]{0}', space=sflag, size = 0x8, scoped, tag = 'scoped memory for tpu_custom_call.1']
    #allocation5 [shape = 'u8[2560]{0}', space=vmem, size = 0xc00, scoped, tag = 'input window, operand 4, single buffered']
    #allocation6 [shape = 's32[1]{0}', space=sflag, size = 0x4, scoped, tag = 'scoped memory for tpu_custom_call.1']
    #allocation7 [shape = 'u8[32768]{0}', space=vmem, size = 0x8000, scoped, tag = 'input window, operand 5, single buffered']
    #allocation8 [shape = 'u8[16384]{0}', space=vmem, size = 0x4000, scoped, tag = 'input window, operand 7, single buffered']
    #allocation9 [shape = 's32[1]{0}', space=sflag, size = 0x4, scoped, tag = 'scoped memory for tpu_custom_call.1']
    #allocation10 [shape = 'u8[512]{0}', space=vmem, size = 0x400, scoped, tag = 'input window, operand 8, single buffered']
    #allocation11 [shape = 'u8[512]{0}', space=vmem, size = 0x400, scoped, tag = 'input window, operand 9, single buffered']
    #allocation12 [shape = 's32[1]{0}', space=sflag, size = 0x4, scoped, tag = 'scoped memory for tpu_custom_call.1']
    #allocation13 [shape = 'u8[512]{0}', space=vmem, size = 0x400, scoped, tag = 'input window, operand 10, single buffered']
    #allocation14 [shape = 'u8[16384]{0}', space=vmem, size = 0x4000, scoped, tag = 'input window, operand 11, single buffered']
    #allocation15 [shape = 's32[1]{0}', space=sflag, size = 0x4, scoped, tag = 'scoped memory for tpu_custom_call.1']
    #allocation16 [shape = 'u8[512]{0}', space=vmem, size = 0x400, scoped, tag = 'input window, operand 12, single buffered']
    #allocation17 [shape = 'u8[512]{0}', space=vmem, size = 0x400, scoped, tag = 'input window, operand 13, single buffered']
    #allocation18 [shape = 's32[1]{0}', space=sflag, size = 0x4, scoped, tag = 'scoped memory for tpu_custom_call.1']
    #allocation19 [shape = 'u8[16384]{0}', space=vmem, size = 0x4000, scoped, tag = 'input window, operand 14, single buffered']
    #allocation20 [shape = 'u8[512]{0}', space=vmem, size = 0x400, scoped, tag = 'input window, operand 15, single buffered']
    #allocation21 [shape = 's32[1]{0}', space=sflag, size = 0x4, scoped, tag = 'scoped memory for tpu_custom_call.1']
    #allocation22 [shape = 'u8[32768]{0}', space=vmem, size = 0x8000, scoped, tag = 'input window, operand 16, single buffered']
    #allocation23 [shape = 'u8[1024]{0}', space=vmem, size = 0x400, scoped, tag = 'input window, operand 17, single buffered']
    #allocation24 [shape = 's32[1]{0}', space=sflag, size = 0x4, scoped, tag = 'scoped memory for tpu_custom_call.1']
    #allocation25 [shape = 'u8[16384]{0}', space=vmem, size = 0x4000, scoped, tag = 'output window, operand 0']
    %25 = vsyncpa [#allocation3], 0
    %s26 = scalar_lea.sflag [#allocation3], 1
    %27 = vsyncpa %s26, 0
    %28 = vsyncpa [#allocation6], 0
    %29 = vsyncpa [#allocation9], 0
    %30 = vsyncpa [#allocation12], 0
    %31 = vsyncpa [#allocation15], 0
    %32 = vsyncpa [#allocation18], 0
    %33 = vsyncpa [#allocation21], 0
    %34 = vsyncpa [#allocation24], 0
    %35 = vsyncpa [#allocation4], 0
    %s36 = scalar_lea.sflag [#allocation4], 1
    %37 = vsyncpa %s36, 0
    loop: start=0, step=1, limit=4
    $region2: #{tpu_custom_call.1} parent=1 // loop_pre_header
      _
    $region3: #{tpu_custom_call.1} parent=1 // loop_header
      %s39 = sphi 0, %s43
      %p40 = scmp.ge.s32.totalorder %s39, 4
      %s49 = sphi 0, %s51
      %s52 = sphi 0, %s49
      %s53 = sphi 0, %s52
      %s69 = sphi 0, %s53
      %s75 = sphi 0, %s77
      %s78 = sphi 0, %s75
      %s79 = sphi 0, %s78
      %s95 = sphi 0, %s79
      %s101 = sphi 0, %s103
      %s104 = sphi 0, %s101
      %s105 = sphi 0, %s104
      %s121 = sphi 0, %s105
      %s125 = sphi 0, %s125
      %s127 = sphi 0, %s125
      %s128 = sphi 0, %s127
      %s142 = sphi 0, %s128
      %s146 = sphi 0, %s146
      %s148 = sphi 0, %s146
      %s149 = sphi 0, %s148
      %s163 = sphi 0, %s149
      %s167 = sphi 0, %s167
      %s169 = sphi 0, %s167
      %s170 = sphi 0, %s169
      %s184 = sphi 0, %s170
      %s188 = sphi 0, %s188
      %s190 = sphi 0, %s188
      %s191 = sphi 0, %s190
      %s205 = sphi 0, %s191
      %s209 = sphi 0, %s209
      %s211 = sphi 0, %s209
      %s212 = sphi 0, %s211
      %s226 = sphi 0, %s212
      %s230 = sphi 0, %s230
      %s232 = sphi 0, %s230
      %s233 = sphi 0, %s232
      %s247 = sphi 0, %s233
      %s251 = sphi 0, %s251
      %s253 = sphi 0, %s251
      %s254 = sphi 0, %s253
      %s268 = sphi 0, %s254
      %s272 = sphi 0, %s272
      %s274 = sphi 0, %s272
      %s275 = sphi 0, %s274
      %s289 = sphi 0, %s275
      %s293 = sphi 0, %s293
      %s295 = sphi 0, %s293
      %s296 = sphi 0, %s295
      %s310 = sphi 0, %s296
      %s314 = sphi 0, %s314
      %s316 = sphi 0, %s314
      %s317 = sphi 0, %s316
      %s331 = sphi 0, %s317
      %s335 = sphi 0, %s335
      %s337 = sphi 0, %s335
      %s338 = sphi 0, %s337
      %s352 = sphi 0, %s338
      %s356 = sphi 0, %s356
      %s358 = sphi 0, %s356
      %s359 = sphi 0, %s358
      %s373 = sphi 0, %s359
      %s377 = sphi 0, %s377
      %s379 = sphi 0, %s377
      %s380 = sphi 0, %s379
      %s394 = sphi 0, %s380
      %s398 = sphi 0, %s398
      %s400 = sphi 0, %s398
      %s401 = sphi 0, %s400
      %s415 = sphi 0, %s401
      %s419 = sphi 0, %s419
      %s421 = sphi 0, %s419
      %s422 = sphi 0, %s421
      %s436 = sphi 0, %s422
      %s440 = sphi 0, %s440
      %s442 = sphi 0, %s440
      %s443 = sphi 0, %s442
      %s457 = sphi 0, %s443
      %s461 = sphi 0, %s461
      %s463 = sphi 0, %s461
      %s464 = sphi 0, %s463
      %s478 = sphi 0, %s464
      %s484 = sphi 0, %s486
      %s487 = sphi 0, %s484
      %s488 = sphi 0, %s487
      %s504 = sphi 0, %s488
    $region4: #{tpu_custom_call.1} parent=1 // loop_header_branch
      %42 = sbr.rel (%p40) target = $region8
    $region5: #{tpu_custom_call.1} parent=1 // loop_body
      %s44 = ssub.s32 %s39, 1
      %s45 = ssub.s32 %s39, 2
      %s46 = sadd.s32 %s39, 1
      %s47 = ssub.s32 %s39, %s46
      %p48 = scmp.eq.s32.totalorder %s47, 0
      %s50 = sadd.s32 %s49, 1
      %s51 = scalar_select %p48, %s49, %s50
      %p54 = pneg %p48
      %p55 = scmp.eq.s32.totalorder %s39, 1
      %p56 = por %p54, %p55
      %p57 = scmp.ne.s32.totalorder %s49, %s52
      %p58 = scmp.eq.s32.totalorder %s39, 0
      %p59 = por %p57, %p58
      %p60 = scmp.ne.s32.totalorder %s49, %s52
      %p61 = scmp.eq.s32.totalorder %s44, 1
      %p62 = por %p60, %p61
      %p63 = scmp.ne.s32.totalorder %s52, %s53
      %p64 = scmp.eq.s32.totalorder %s44, 0
      %p65 = por %p63, %p64
      %p66 = scmp.ne.s32.totalorder %s52, %s53
      %p67 = scmp.eq.s32.totalorder %s45, 1
      %p68 = por %p66, %p67
      %p70 = scmp.ne.s32.totalorder %s53, %s69
      %p71 = scmp.eq.s32.totalorder %s45, 0
      %p72 = por %p70, %p71
      %s73 = ssub.s32 %s39, %s46
      %p74 = scmp.eq.s32.totalorder %s73, 0
      %s76 = sadd.s32 %s75, 1
      %s77 = scalar_select %p74, %s75, %s76
      %p80 = pneg %p74
      %p81 = scmp.eq.s32.totalorder %s39, 1
      %p82 = por %p80, %p81
      %p83 = scmp.ne.s32.totalorder %s75, %s78
      %p84 = scmp.eq.s32.totalorder %s39, 0
      %p85 = por %p83, %p84
      %p86 = scmp.ne.s32.totalorder %s75, %s78
      %p87 = scmp.eq.s32.totalorder %s44, 1
      %p88 = por %p86, %p87
      %p89 = scmp.ne.s32.totalorder %s78, %s79
      %p90 = scmp.eq.s32.totalorder %s44, 0
      %p91 = por %p89, %p90
      %p92 = scmp.ne.s32.totalorder %s78, %s79
      %p93 = scmp.eq.s32.totalorder %s45, 1
      %p94 = por %p92, %p93
      %p96 = scmp.ne.s32.totalorder %s79, %s95
      %p97 = scmp.eq.s32.totalorder %s45, 0
      %p98 = por %p96, %p97
      %s99 = ssub.s32 %s39, %s46
      %p100 = scmp.eq.s32.totalorder %s99, 0
      %s102 = sadd.s32 %s101, 1
      %s103 = scalar_select %p100, %s101, %s102
      %p106 = pneg %p100
      %p107 = scmp.eq.s32.totalorder %s39, 1
      %p108 = por %p106, %p107
      %p109 = scmp.ne.s32.totalorder %s101, %s104
      %p110 = scmp.eq.s32.totalorder %s39, 0
      %p111 = por %p109, %p110
      %p112 = scmp.ne.s32.totalorder %s101, %s104
      %p113 = scmp.eq.s32.totalorder %s44, 1
      %p114 = por %p112, %p113
      %p115 = scmp.ne.s32.totalorder %s104, %s105
      %p116 = scmp.eq.s32.totalorder %s44, 0
      %p117 = por %p115, %p116
      %p118 = scmp.ne.s32.totalorder %s104, %s105
      %p119 = scmp.eq.s32.totalorder %s45, 1
      %p120 = por %p118, %p119
      %p122 = scmp.ne.s32.totalorder %s105, %s121
      %p123 = scmp.eq.s32.totalorder %s45, 0
      %p124 = por %p122, %p123
      %s126 = sadd.s32 %s125, 1
      %p129 = scmp.eq.s32.totalorder %s39, 1
      %p130 = scmp.ne.s32.totalorder %s125, %s127
      %p131 = scmp.eq.s32.totalorder %s39, 0
      %p132 = por %p130, %p131
      %p133 = scmp.ne.s32.totalorder %s125, %s127
      %p134 = scmp.eq.s32.totalorder %s44, 1
      %p135 = por %p133, %p134
      %p136 = scmp.ne.s32.totalorder %s127, %s128
      %p137 = scmp.eq.s32.totalorder %s44, 0
      %p138 = por %p136, %p137
      %p139 = scmp.ne.s32.totalorder %s127, %s128
      %p140 = scmp.eq.s32.totalorder %s45, 1
      %p141 = por %p139, %p140
      %p143 = scmp.ne.s32.totalorder %s128, %s142
      %p144 = scmp.eq.s32.totalorder %s45, 0
      %p145 = por %p143, %p144
      %s147 = sadd.s32 %s146, 1
      %p150 = scmp.eq.s32.totalorder %s39, 1
      %p151 = scmp.ne.s32.totalorder %s146, %s148
      %p152 = scmp.eq.s32.totalorder %s39, 0
      %p153 = por %p151, %p152
      %p154 = scmp.ne.s32.totalorder %s146, %s148
      %p155 = scmp.eq.s32.totalorder %s44, 1
      %p156 = por %p154, %p155
      %p157 = scmp.ne.s32.totalorder %s148, %s149
      %p158 = scmp.eq.s32.totalorder %s44, 0
      %p159 = por %p157, %p158
      %p160 = scmp.ne.s32.totalorder %s148, %s149
      %p161 = scmp.eq.s32.totalorder %s45, 1
      %p162 = por %p160, %p161
      %p164 = scmp.ne.s32.totalorder %s149, %s163
      %p165 = scmp.eq.s32.totalorder %s45, 0
      %p166 = por %p164, %p165
      %s168 = sadd.s32 %s167, 1
      %p171 = scmp.eq.s32.totalorder %s39, 1
      %p172 = scmp.ne.s32.totalorder %s167, %s169
      %p173 = scmp.eq.s32.totalorder %s39, 0
      %p174 = por %p172, %p173
      %p175 = scmp.ne.s32.totalorder %s167, %s169
      %p176 = scmp.eq.s32.totalorder %s44, 1
      %p177 = por %p175, %p176
      %p178 = scmp.ne.s32.totalorder %s169, %s170
      %p179 = scmp.eq.s32.totalorder %s44, 0
      %p180 = por %p178, %p179
      %p181 = scmp.ne.s32.totalorder %s169, %s170
      %p182 = scmp.eq.s32.totalorder %s45, 1
      %p183 = por %p181, %p182
      %p185 = scmp.ne.s32.totalorder %s170, %s184
      %p186 = scmp.eq.s32.totalorder %s45, 0
      %p187 = por %p185, %p186
      %s189 = sadd.s32 %s188, 1
      %p192 = scmp.eq.s32.totalorder %s39, 1
      %p193 = scmp.ne.s32.totalorder %s188, %s190
      %p194 = scmp.eq.s32.totalorder %s39, 0
      %p195 = por %p193, %p194
      %p196 = scmp.ne.s32.totalorder %s188, %s190
      %p197 = scmp.eq.s32.totalorder %s44, 1
      %p198 = por %p196, %p197
      %p199 = scmp.ne.s32.totalorder %s190, %s191
      %p200 = scmp.eq.s32.totalorder %s44, 0
      %p201 = por %p199, %p200
      %p202 = scmp.ne.s32.totalorder %s190, %s191
      %p203 = scmp.eq.s32.totalorder %s45, 1
      %p204 = por %p202, %p203
      %p206 = scmp.ne.s32.totalorder %s191, %s205
      %p207 = scmp.eq.s32.totalorder %s45, 0
      %p208 = por %p206, %p207
      %s210 = sadd.s32 %s209, 1
      %p213 = scmp.eq.s32.totalorder %s39, 1
      %p214 = scmp.ne.s32.totalorder %s209, %s211
      %p215 = scmp.eq.s32.totalorder %s39, 0
      %p216 = por %p214, %p215
      %p217 = scmp.ne.s32.totalorder %s209, %s211
      %p218 = scmp.eq.s32.totalorder %s44, 1
      %p219 = por %p217, %p218
      %p220 = scmp.ne.s32.totalorder %s211, %s212
      %p221 = scmp.eq.s32.totalorder %s44, 0
      %p222 = por %p220, %p221
      %p223 = scmp.ne.s32.totalorder %s211, %s212
      %p224 = scmp.eq.s32.totalorder %s45, 1
      %p225 = por %p223, %p224
      %p227 = scmp.ne.s32.totalorder %s212, %s226
      %p228 = scmp.eq.s32.totalorder %s45, 0
      %p229 = por %p227, %p228
      %s231 = sadd.s32 %s230, 1
      %p234 = scmp.eq.s32.totalorder %s39, 1
      %p235 = scmp.ne.s32.totalorder %s230, %s232
      %p236 = scmp.eq.s32.totalorder %s39, 0
      %p237 = por %p235, %p236
      %p238 = scmp.ne.s32.totalorder %s230, %s232
      %p239 = scmp.eq.s32.totalorder %s44, 1
      %p240 = por %p238, %p239
      %p241 = scmp.ne.s32.totalorder %s232, %s233
      %p242 = scmp.eq.s32.totalorder %s44, 0
      %p243 = por %p241, %p242
      %p244 = scmp.ne.s32.totalorder %s232, %s233
      %p245 = scmp.eq.s32.totalorder %s45, 1
      %p246 = por %p244, %p245
      %p248 = scmp.ne.s32.totalorder %s233, %s247
      %p249 = scmp.eq.s32.totalorder %s45, 0
      %p250 = por %p248, %p249
      %s252 = sadd.s32 %s251, 1
      %p255 = scmp.eq.s32.totalorder %s39, 1
      %p256 = scmp.ne.s32.totalorder %s251, %s253
      %p257 = scmp.eq.s32.totalorder %s39, 0
      %p258 = por %p256, %p257
      %p259 = scmp.ne.s32.totalorder %s251, %s253
      %p260 = scmp.eq.s32.totalorder %s44, 1
      %p261 = por %p259, %p260
      %p262 = scmp.ne.s32.totalorder %s253, %s254
      %p263 = scmp.eq.s32.totalorder %s44, 0
      %p264 = por %p262, %p263
      %p265 = scmp.ne.s32.totalorder %s253, %s254
      %p266 = scmp.eq.s32.totalorder %s45, 1
      %p267 = por %p265, %p266
      %p269 = scmp.ne.s32.totalorder %s254, %s268
      %p270 = scmp.eq.s32.totalorder %s45, 0
      %p271 = por %p269, %p270
      %s273 = sadd.s32 %s272, 1
      %p276 = scmp.eq.s32.totalorder %s39, 1
      %p277 = scmp.ne.s32.totalorder %s272, %s274
      %p278 = scmp.eq.s32.totalorder %s39, 0
      %p279 = por %p277, %p278
      %p280 = scmp.ne.s32.totalorder %s272, %s274
      %p281 = scmp.eq.s32.totalorder %s44, 1
      %p282 = por %p280, %p281
      %p283 = scmp.ne.s32.totalorder %s274, %s275
      %p284 = scmp.eq.s32.totalorder %s44, 0
      %p285 = por %p283, %p284
      %p286 = scmp.ne.s32.totalorder %s274, %s275
      %p287 = scmp.eq.s32.totalorder %s45, 1
      %p288 = por %p286, %p287
      %p290 = scmp.ne.s32.totalorder %s275, %s289
      %p291 = scmp.eq.s32.totalorder %s45, 0
      %p292 = por %p290, %p291
      %s294 = sadd.s32 %s293, 1
      %p297 = scmp.eq.s32.totalorder %s39, 1
      %p298 = scmp.ne.s32.totalorder %s293, %s295
      %p299 = scmp.eq.s32.totalorder %s39, 0
      %p300 = por %p298, %p299
      %p301 = scmp.ne.s32.totalorder %s293, %s295
      %p302 = scmp.eq.s32.totalorder %s44, 1
      %p303 = por %p301, %p302
      %p304 = scmp.ne.s32.totalorder %s295, %s296
      %p305 = scmp.eq.s32.totalorder %s44, 0
      %p306 = por %p304, %p305
      %p307 = scmp.ne.s32.totalorder %s295, %s296
      %p308 = scmp.eq.s32.totalorder %s45, 1
      %p309 = por %p307, %p308
      %p311 = scmp.ne.s32.totalorder %s296, %s310
      %p312 = scmp.eq.s32.totalorder %s45, 0
      %p313 = por %p311, %p312
      %s315 = sadd.s32 %s314, 1
      %p318 = scmp.eq.s32.totalorder %s39, 1
      %p319 = scmp.ne.s32.totalorder %s314, %s316
      %p320 = scmp.eq.s32.totalorder %s39, 0
      %p321 = por %p319, %p320
      %p322 = scmp.ne.s32.totalorder %s314, %s316
      %p323 = scmp.eq.s32.totalorder %s44, 1
      %p324 = por %p322, %p323
      %p325 = scmp.ne.s32.totalorder %s316, %s317
      %p326 = scmp.eq.s32.totalorder %s44, 0
      %p327 = por %p325, %p326
      %p328 = scmp.ne.s32.totalorder %s316, %s317
      %p329 = scmp.eq.s32.totalorder %s45, 1
      %p330 = por %p328, %p329
      %p332 = scmp.ne.s32.totalorder %s317, %s331
      %p333 = scmp.eq.s32.totalorder %s45, 0
      %p334 = por %p332, %p333
      %s336 = sadd.s32 %s335, 1
      %p339 = scmp.eq.s32.totalorder %s39, 1
      %p340 = scmp.ne.s32.totalorder %s335, %s337
      %p341 = scmp.eq.s32.totalorder %s39, 0
      %p342 = por %p340, %p341
      %p343 = scmp.ne.s32.totalorder %s335, %s337
      %p344 = scmp.eq.s32.totalorder %s44, 1
      %p345 = por %p343, %p344
      %p346 = scmp.ne.s32.totalorder %s337, %s338
      %p347 = scmp.eq.s32.totalorder %s44, 0
      %p348 = por %p346, %p347
      %p349 = scmp.ne.s32.totalorder %s337, %s338
      %p350 = scmp.eq.s32.totalorder %s45, 1
      %p351 = por %p349, %p350
      %p353 = scmp.ne.s32.totalorder %s338, %s352
      %p354 = scmp.eq.s32.totalorder %s45, 0
      %p355 = por %p353, %p354
      %s357 = sadd.s32 %s356, 1
      %p360 = scmp.eq.s32.totalorder %s39, 1
      %p361 = scmp.ne.s32.totalorder %s356, %s358
      %p362 = scmp.eq.s32.totalorder %s39, 0
      %p363 = por %p361, %p362
      %p364 = scmp.ne.s32.totalorder %s356, %s358
      %p365 = scmp.eq.s32.totalorder %s44, 1
      %p366 = por %p364, %p365
      %p367 = scmp.ne.s32.totalorder %s358, %s359
      %p368 = scmp.eq.s32.totalorder %s44, 0
      %p369 = por %p367, %p368
      %p370 = scmp.ne.s32.totalorder %s358, %s359
      %p371 = scmp.eq.s32.totalorder %s45, 1
      %p372 = por %p370, %p371
      %p374 = scmp.ne.s32.totalorder %s359, %s373
      %p375 = scmp.eq.s32.totalorder %s45, 0
      %p376 = por %p374, %p375
      %s378 = sadd.s32 %s377, 1
      %p381 = scmp.eq.s32.totalorder %s39, 1
      %p382 = scmp.ne.s32.totalorder %s377, %s379
      %p383 = scmp.eq.s32.totalorder %s39, 0
      %p384 = por %p382, %p383
      %p385 = scmp.ne.s32.totalorder %s377, %s379
      %p386 = scmp.eq.s32.totalorder %s44, 1
      %p387 = por %p385, %p386
      %p388 = scmp.ne.s32.totalorder %s379, %s380
      %p389 = scmp.eq.s32.totalorder %s44, 0
      %p390 = por %p388, %p389
      %p391 = scmp.ne.s32.totalorder %s379, %s380
      %p392 = scmp.eq.s32.totalorder %s45, 1
      %p393 = por %p391, %p392
      %p395 = scmp.ne.s32.totalorder %s380, %s394
      %p396 = scmp.eq.s32.totalorder %s45, 0
      %p397 = por %p395, %p396
      %s399 = sadd.s32 %s398, 1
      %p402 = scmp.eq.s32.totalorder %s39, 1
      %p403 = scmp.ne.s32.totalorder %s398, %s400
      %p404 = scmp.eq.s32.totalorder %s39, 0
      %p405 = por %p403, %p404
      %p406 = scmp.ne.s32.totalorder %s398, %s400
      %p407 = scmp.eq.s32.totalorder %s44, 1
      %p408 = por %p406, %p407
      %p409 = scmp.ne.s32.totalorder %s400, %s401
      %p410 = scmp.eq.s32.totalorder %s44, 0
      %p411 = por %p409, %p410
      %p412 = scmp.ne.s32.totalorder %s400, %s401
      %p413 = scmp.eq.s32.totalorder %s45, 1
      %p414 = por %p412, %p413
      %p416 = scmp.ne.s32.totalorder %s401, %s415
      %p417 = scmp.eq.s32.totalorder %s45, 0
      %p418 = por %p416, %p417
      %s420 = sadd.s32 %s419, 1
      %p423 = scmp.eq.s32.totalorder %s39, 1
      %p424 = scmp.ne.s32.totalorder %s419, %s421
      %p425 = scmp.eq.s32.totalorder %s39, 0
      %p426 = por %p424, %p425
      %p427 = scmp.ne.s32.totalorder %s419, %s421
      %p428 = scmp.eq.s32.totalorder %s44, 1
      %p429 = por %p427, %p428
      %p430 = scmp.ne.s32.totalorder %s421, %s422
      %p431 = scmp.eq.s32.totalorder %s44, 0
      %p432 = por %p430, %p431
      %p433 = scmp.ne.s32.totalorder %s421, %s422
      %p434 = scmp.eq.s32.totalorder %s45, 1
      %p435 = por %p433, %p434
      %p437 = scmp.ne.s32.totalorder %s422, %s436
      %p438 = scmp.eq.s32.totalorder %s45, 0
      %p439 = por %p437, %p438
      %s441 = sadd.s32 %s440, 1
      %p444 = scmp.eq.s32.totalorder %s39, 1
      %p445 = scmp.ne.s32.totalorder %s440, %s442
      %p446 = scmp.eq.s32.totalorder %s39, 0
      %p447 = por %p445, %p446
      %p448 = scmp.ne.s32.totalorder %s440, %s442
      %p449 = scmp.eq.s32.totalorder %s44, 1
      %p450 = por %p448, %p449
      %p451 = scmp.ne.s32.totalorder %s442, %s443
      %p452 = scmp.eq.s32.totalorder %s44, 0
      %p453 = por %p451, %p452
      %p454 = scmp.ne.s32.totalorder %s442, %s443
      %p455 = scmp.eq.s32.totalorder %s45, 1
      %p456 = por %p454, %p455
      %p458 = scmp.ne.s32.totalorder %s443, %s457
      %p459 = scmp.eq.s32.totalorder %s45, 0
      %p460 = por %p458, %p459
      %s462 = sadd.s32 %s461, 1
      %p465 = scmp.eq.s32.totalorder %s39, 1
      %p466 = scmp.ne.s32.totalorder %s461, %s463
      %p467 = scmp.eq.s32.totalorder %s39, 0
      %p468 = por %p466, %p467
      %p469 = scmp.ne.s32.totalorder %s461, %s463
      %p470 = scmp.eq.s32.totalorder %s44, 1
      %p471 = por %p469, %p470
      %p472 = scmp.ne.s32.totalorder %s463, %s464
      %p473 = scmp.eq.s32.totalorder %s44, 0
      %p474 = por %p472, %p473
      %p475 = scmp.ne.s32.totalorder %s463, %s464
      %p476 = scmp.eq.s32.totalorder %s45, 1
      %p477 = por %p475, %p476
      %p479 = scmp.ne.s32.totalorder %s464, %s478
      %p480 = scmp.eq.s32.totalorder %s45, 0
      %p481 = por %p479, %p480
      %s482 = ssub.s32 %s39, %s46
      %p483 = scmp.eq.s32.totalorder %s482, 0
      %s485 = sadd.s32 %s484, 1
      %s486 = scalar_select %p483, %s484, %s485
      %p489 = pneg %p483
      %p490 = scmp.eq.s32.totalorder %s39, 1
      %p491 = por %p489, %p490
      %p492 = scmp.ne.s32.totalorder %s484, %s487
      %p493 = scmp.eq.s32.totalorder %s39, 0
      %p494 = por %p492, %p493
      %p495 = scmp.ne.s32.totalorder %s484, %s487
      %p496 = scmp.eq.s32.totalorder %s44, 1
      %p497 = por %p495, %p496
      %p498 = scmp.ne.s32.totalorder %s487, %s488
      %p499 = scmp.eq.s32.totalorder %s44, 0
      %p500 = por %p498, %p499
      %p501 = scmp.ne.s32.totalorder %s487, %s488
      %p502 = scmp.eq.s32.totalorder %s45, 1
      %p503 = por %p501, %p502
      %p505 = scmp.ne.s32.totalorder %s488, %s504
      %p506 = scmp.eq.s32.totalorder %s45, 0
      %p507 = por %p505, %p506
      %p508 = scmp.le.s32.totalorder 1, %s39
      %p509 = scmp.lt.s32.totalorder %s39, 3
      %p510 = pnand %p508, %p509
      %p511 = pneg %p510
      // Predicated region
      $region9: #{tpu_custom_call.1} parent=5 // pred_check
        _
      $region10: #{tpu_custom_call.1} parent=5 // pred_check_branch
        %513 = sbr.rel (%p510) target = $region12
      $region11: #{tpu_custom_call.1} parent=5 // pred_region
        %s514 = ssub.s32 %s39, 1
        // Predicated region
        $region13: #{tpu_custom_call.1} parent=11 // pred_check
          %p515 = pneg %p138
        $region14: #{tpu_custom_call.1} parent=11 // pred_check_branch
          %517 = sbr.rel (%p515) target = $region16
        $region15: #{tpu_custom_call.1} parent=11 // pred_region
          _
        $region16: #{tpu_custom_call.1} parent=11 // pred_fallthru
          _
        // Predicated region
        $region17: #{tpu_custom_call.1} parent=11 // pred_check
          %p518 = pneg %p159
        $region18: #{tpu_custom_call.1} parent=11 // pred_check_branch
          %520 = sbr.rel (%p518) target = $region20
        $region19: #{tpu_custom_call.1} parent=11 // pred_region
          %s522 = ssub.s32 80, 80
          %523 = vsyncadd [#allocation6], %s522
          %s525 = sshll.u32 [#allocation5], 4
          %s526 = int_to_ptr.vmem [resolvable:$true] %s525
          %528 = dma.hbm_to_vmem [thread:$0]  %s4, 80, %s526, [#allocation6]
        $region20: #{tpu_custom_call.1} parent=11 // pred_fallthru
          _
        // Predicated region
        $region21: #{tpu_custom_call.1} parent=11 // pred_check
          %p529 = pneg %p180
        $region22: #{tpu_custom_call.1} parent=11 // pred_check_branch
          %531 = sbr.rel (%p529) target = $region24
        $region23: #{tpu_custom_call.1} parent=11 // pred_region
          %s533 = ssub.s32 1024, 1024
          %534 = vsyncadd [#allocation6], %s533
          %s535 = sshll.u32 [#allocation7], 4
          %s536 = int_to_ptr.vmem [resolvable:$true] %s535
          %541 = dma.hbm_to_vmem [thread:$0]  %s5, 1024, %s536, [#allocation6], 128, 128, 8
        $region24: #{tpu_custom_call.1} parent=11 // pred_fallthru
          _
        // Predicated region
        $region25: #{tpu_custom_call.1} parent=11 // pred_check
          %p542 = pneg %p201
        $region26: #{tpu_custom_call.1} parent=11 // pred_check_branch
          %544 = sbr.rel (%p542) target = $region28
        $region27: #{tpu_custom_call.1} parent=11 // pred_region
          _
        $region28: #{tpu_custom_call.1} parent=11 // pred_fallthru
          _
        // Predicated region
        $region29: #{tpu_custom_call.1} parent=11 // pred_check
          %p545 = pneg %p222
        $region30: #{tpu_custom_call.1} parent=11 // pred_check_branch
          %547 = sbr.rel (%p545) target = $region32
        $region31: #{tpu_custom_call.1} parent=11 // pred_region
          %s549 = ssub.s32 512, 512
          %550 = vsyncadd [#allocation9], %s549
          %s551 = sshll.u32 [#allocation8], 4
          %s552 = int_to_ptr.vmem [resolvable:$true] %s551
          %557 = dma.hbm_to_vmem [thread:$0]  %s7, 512, %s552, [#allocation9], 64, 64, 4
        $region32: #{tpu_custom_call.1} parent=11 // pred_fallthru
          _
        // Predicated region
        $region33: #{tpu_custom_call.1} parent=11 // pred_check
          %p558 = pneg %p243
        $region34: #{tpu_custom_call.1} parent=11 // pred_check_branch
          %560 = sbr.rel (%p558) target = $region36
        $region35: #{tpu_custom_call.1} parent=11 // pred_region
          %s562 = ssub.s32 16, 16
          %563 = vsyncadd [#allocation9], %s562
          %s565 = sshll.u32 [#allocation10], 4
          %s566 = int_to_ptr.vmem [resolvable:$true] %s565
          %568 = dma.hbm_to_vmem [thread:$0]  %s8, 16, %s566, [#allocation9]
        $region36: #{tpu_custom_call.1} parent=11 // pred_fallthru
          _
        // Predicated region
        $region37: #{tpu_custom_call.1} parent=11 // pred_check
          %p569 = pneg %p264
        $region38: #{tpu_custom_call.1} parent=11 // pred_check_branch
          %571 = sbr.rel (%p569) target = $region40
        $region39: #{tpu_custom_call.1} parent=11 // pred_region
          %s573 = ssub.s32 16, 16
          %574 = vsyncadd [#allocation12], %s573
          %s576 = sshll.u32 [#allocation11], 4
          %s577 = int_to_ptr.vmem [resolvable:$true] %s576
          %579 = dma.hbm_to_vmem [thread:$0]  %s9, 16, %s577, [#allocation12]
        $region40: #{tpu_custom_call.1} parent=11 // pred_fallthru
          _
        // Predicated region
        $region41: #{tpu_custom_call.1} parent=11 // pred_check
          %p580 = pneg %p285
        $region42: #{tpu_custom_call.1} parent=11 // pred_check_branch
          %582 = sbr.rel (%p580) target = $region44
        $region43: #{tpu_custom_call.1} parent=11 // pred_region
          %s584 = ssub.s32 16, 16
          %585 = vsyncadd [#allocation12], %s584
          %s587 = sshll.u32 [#allocation13], 4
          %s588 = int_to_ptr.vmem [resolvable:$true] %s587
          %590 = dma.hbm_to_vmem [thread:$0]  %s10, 16, %s588, [#allocation12]
        $region44: #{tpu_custom_call.1} parent=11 // pred_fallthru
          _
        // Predicated region
        $region45: #{tpu_custom_call.1} parent=11 // pred_check
          %p591 = pneg %p306
        $region46: #{tpu_custom_call.1} parent=11 // pred_check_branch
          %593 = sbr.rel (%p591) target = $region48
        $region47: #{tpu_custom_call.1} parent=11 // pred_region
          %s595 = ssub.s32 512, 512
          %596 = vsyncadd [#allocation15], %s595
          %s597 = sshll.u32 [#allocation14], 4
          %s598 = int_to_ptr.vmem [resolvable:$true] %s597
          %603 = dma.hbm_to_vmem [thread:$0]  %s11, 512, %s598, [#allocation15], 64, 64, 4
        $region48: #{tpu_custom_call.1} parent=11 // pred_fallthru
          _
        // Predicated region
        $region49: #{tpu_custom_call.1} parent=11 // pred_check
          %p604 = pneg %p327
        $region50: #{tpu_custom_call.1} parent=11 // pred_check_branch
          %606 = sbr.rel (%p604) target = $region52
        $region51: #{tpu_custom_call.1} parent=11 // pred_region
          %s608 = ssub.s32 16, 16
          %609 = vsyncadd [#allocation15], %s608
          %s611 = sshll.u32 [#allocation16], 4
          %s612 = int_to_ptr.vmem [resolvable:$true] %s611
          %614 = dma.hbm_to_vmem [thread:$0]  %s12, 16, %s612, [#allocation15]
        $region52: #{tpu_custom_call.1} parent=11 // pred_fallthru
          _
        // Predicated region
        $region53: #{tpu_custom_call.1} parent=11 // pred_check
          %p615 = pneg %p348
        $region54: #{tpu_custom_call.1} parent=11 // pred_check_branch
          %617 = sbr.rel (%p615) target = $region56
        $region55: #{tpu_custom_call.1} parent=11 // pred_region
          %s619 = ssub.s32 16, 16
          %620 = vsyncadd [#allocation18], %s619
          %s622 = sshll.u32 [#allocation17], 4
          %s623 = int_to_ptr.vmem [resolvable:$true] %s622
          %625 = dma.hbm_to_vmem [thread:$0]  %s13, 16, %s623, [#allocation18]
        $region56: #{tpu_custom_call.1} parent=11 // pred_fallthru
          _
        // Predicated region
        $region57: #{tpu_custom_call.1} parent=11 // pred_check
          %p626 = pneg %p369
        $region58: #{tpu_custom_call.1} parent=11 // pred_check_branch
          %628 = sbr.rel (%p626) target = $region60
        $region59: #{tpu_custom_call.1} parent=11 // pred_region
          %s630 = ssub.s32 512, 512
          %631 = vsyncadd [#allocation18], %s630
          %s632 = sshll.u32 [#allocation19], 4
          %s633 = int_to_ptr.vmem [resolvable:$true] %s632
          %638 = dma.hbm_to_vmem [thread:$0]  %s14, 512, %s633, [#allocation18], 64, 64, 4
        $region60: #{tpu_custom_call.1} parent=11 // pred_fallthru
          _
        // Predicated region
        $region61: #{tpu_custom_call.1} parent=11 // pred_check
          %p639 = pneg %p390
        $region62: #{tpu_custom_call.1} parent=11 // pred_check_branch
          %641 = sbr.rel (%p639) target = $region64
        $region63: #{tpu_custom_call.1} parent=11 // pred_region
          %s643 = ssub.s32 16, 16
          %644 = vsyncadd [#allocation21], %s643
          %s646 = sshll.u32 [#allocation20], 4
          %s647 = int_to_ptr.vmem [resolvable:$true] %s646
          %649 = dma.hbm_to_vmem [thread:$0]  %s15, 16, %s647, [#allocation21]
        $region64: #{tpu_custom_call.1} parent=11 // pred_fallthru
          _
        // Predicated region
        $region65: #{tpu_custom_call.1} parent=11 // pred_check
          %p650 = pneg %p411
        $region66: #{tpu_custom_call.1} parent=11 // pred_check_branch
          %652 = sbr.rel (%p650) target = $region68
        $region67: #{tpu_custom_call.1} parent=11 // pred_region
          %s654 = ssub.s32 1024, 1024
          %655 = vsyncadd [#allocation21], %s654
          %s656 = sshll.u32 [#allocation22], 4
          %s657 = int_to_ptr.vmem [resolvable:$true] %s656
          %662 = dma.hbm_to_vmem [thread:$0]  %s16, 1024, %s657, [#allocation21], 128, 128, 8
        $region68: #{tpu_custom_call.1} parent=11 // pred_fallthru
          _
        // Predicated region
        $region69: #{tpu_custom_call.1} parent=11 // pred_check
          %p663 = pneg %p432
        $region70: #{tpu_custom_call.1} parent=11 // pred_check_branch
          %665 = sbr.rel (%p663) target = $region72
        $region71: #{tpu_custom_call.1} parent=11 // pred_region
          %s667 = ssub.s32 32, 32
          %668 = vsyncadd [#allocation24], %s667
          %s670 = sshll.u32 [#allocation23], 4
          %s671 = int_to_ptr.vmem [resolvable:$true] %s670
          %673 = dma.hbm_to_vmem [thread:$0]  %s17, 32, %s671, [#allocation24]
        $region72: #{tpu_custom_call.1} parent=11 // pred_fallthru
          _
        // Predicated region
        $region73: #{tpu_custom_call.1} parent=11 // pred_check
          %p674 = pneg %p453
        $region74: #{tpu_custom_call.1} parent=11 // pred_check_branch
          %676 = sbr.rel (%p674) target = $region76
        $region75: #{tpu_custom_call.1} parent=11 // pred_region
          _
        $region76: #{tpu_custom_call.1} parent=11 // pred_fallthru
          _
        // Predicated region
        $region77: #{tpu_custom_call.1} parent=11 // pred_check
          %p677 = pneg %p474
        $region78: #{tpu_custom_call.1} parent=11 // pred_check_branch
          %679 = sbr.rel (%p677) target = $region80
        $region79: #{tpu_custom_call.1} parent=11 // pred_region
          _
        $region80: #{tpu_custom_call.1} parent=11 // pred_fallthru
          _
      $region12: #{tpu_custom_call.1} parent=5 // pred_fallthru
        _
      %p680 = scmp.lt.s32.totalorder %s39, 2
      // Predicated region
      $region81: #{tpu_custom_call.1} parent=5 // pred_check
        %p681 = pneg %p680
      $region82: #{tpu_custom_call.1} parent=5 // pred_check_branch
        %683 = sbr.rel (%p681) target = $region84
      $region83: #{tpu_custom_call.1} parent=5 // pred_region
        // Predicated region
        $region85: #{tpu_custom_call.1} parent=83 // pred_check
          %p684 = pneg %p59
        $region86: #{tpu_custom_call.1} parent=83 // pred_check_branch
          %686 = sbr.rel (%p684) target = $region88
        $region87: #{tpu_custom_call.1} parent=83 // pred_region
          %p687 = scmp.lt.s32.totalorder %s39, 1
          %s688 = scalar_select %p687, %s39, 1
          %s689 = smul.addr %s688, 2
          %s690 = smul.addr %s689, 8
          %s691 = scalar_lea.vmem %s0, %s690
        $region88: #{tpu_custom_call.1} parent=83 // pred_fallthru
          _
        // Predicated region
        $region89: #{tpu_custom_call.1} parent=83 // pred_check
          %p692 = pneg %p85
        $region90: #{tpu_custom_call.1} parent=83 // pred_check_branch
          %694 = sbr.rel (%p692) target = $region92
        $region91: #{tpu_custom_call.1} parent=83 // pred_region
          %s695 = sand.u32 %s75, 1
          %s696 = scalar_lea.sflag [#allocation3], %s695
          %s697 = sand.u32 %s75, 1
          %s698 = smul.addr %s697, 16
          %s699 = scalar_lea.vmem [#allocation2], %s698
          %s701 = ssub.s32 256, 256
          %702 = vsyncadd %s696, %s701
          %s703 = smul.addr %s39, 2
          %s704 = smul.addr %s703, 128
          %s705 = scalar_lea.hbm %s1, %s704
          %s706 = sshll.u32 %s699, 4
          %s707 = int_to_ptr.vmem [resolvable:$true] %s706
          %712 = dma.hbm_to_vmem [thread:$0]  %s705, 256, %s707, %s696, 128, 128, 8
        $region92: #{tpu_custom_call.1} parent=83 // pred_fallthru
          _
        // Predicated region
        $region93: #{tpu_custom_call.1} parent=83 // pred_check
          %p713 = pneg %p111
        $region94: #{tpu_custom_call.1} parent=83 // pred_check_branch
          %715 = sbr.rel (%p713) target = $region96
        $region95: #{tpu_custom_call.1} parent=83 // pred_region
          %p716 = scmp.lt.s32.totalorder %s39, 1
          %s717 = scalar_select %p716, %s39, 1
          %s718 = scalar_lea.vmem %s2, %s717
        $region96: #{tpu_custom_call.1} parent=83 // pred_fallthru
          _
      $region84: #{tpu_custom_call.1} parent=5 // pred_fallthru
        _
      %p719 = scmp.le.s32.totalorder 1, %s39
      %p720 = scmp.lt.s32.totalorder %s39, 3
      %p721 = pnand %p719, %p720
      %p722 = pneg %p721
      // Predicated region
      $region97: #{tpu_custom_call.1} parent=5 // pred_check
        _
      $region98: #{tpu_custom_call.1} parent=5 // pred_check_branch
        %724 = sbr.rel (%p721) target = $region100
      $region99: #{tpu_custom_call.1} parent=5 // pred_region
        %s725 = ssub.s32 %s39, 1
        %s726 = sand.u32 %s78, 1
        %s727 = scalar_lea.sflag [#allocation3], %s726
        %s728 = sand.u32 %s78, 1
        %s729 = smul.addr %s728, 16
        %s730 = scalar_lea.vmem [#allocation2], %s729
        // Predicated region
        $region101: #{tpu_custom_call.1} parent=99 // pred_check
          %p731 = pneg %p91
        $region102: #{tpu_custom_call.1} parent=99 // pred_check_branch
          %733 = sbr.rel (%p731) target = $region104
        $region103: #{tpu_custom_call.1} parent=99 // pred_region
          %734 = dma.done %s727, 256
        $region104: #{tpu_custom_call.1} parent=99 // pred_fallthru
          _
        // Predicated region
        $region105: #{tpu_custom_call.1} parent=99 // pred_check
          %p735 = pneg %p159
        $region106: #{tpu_custom_call.1} parent=99 // pred_check_branch
          %737 = sbr.rel (%p735) target = $region108
        $region107: #{tpu_custom_call.1} parent=99 // pred_region
          %738 = dma.done [#allocation6], 80
        $region108: #{tpu_custom_call.1} parent=99 // pred_fallthru
          _
        // Predicated region
        $region109: #{tpu_custom_call.1} parent=99 // pred_check
          %p739 = pneg %p180
        $region110: #{tpu_custom_call.1} parent=99 // pred_check_branch
          %741 = sbr.rel (%p739) target = $region112
        $region111: #{tpu_custom_call.1} parent=99 // pred_region
          %742 = dma.done [#allocation6], 1024
        $region112: #{tpu_custom_call.1} parent=99 // pred_fallthru
          _
        // Predicated region
        $region113: #{tpu_custom_call.1} parent=99 // pred_check
          %p743 = pneg %p222
        $region114: #{tpu_custom_call.1} parent=99 // pred_check_branch
          %745 = sbr.rel (%p743) target = $region116
        $region115: #{tpu_custom_call.1} parent=99 // pred_region
          %746 = dma.done [#allocation9], 512
        $region116: #{tpu_custom_call.1} parent=99 // pred_fallthru
          _
        // Predicated region
        $region117: #{tpu_custom_call.1} parent=99 // pred_check
          %p747 = pneg %p243
        $region118: #{tpu_custom_call.1} parent=99 // pred_check_branch
          %749 = sbr.rel (%p747) target = $region120
        $region119: #{tpu_custom_call.1} parent=99 // pred_region
          %750 = dma.done [#allocation9], 16
        $region120: #{tpu_custom_call.1} parent=99 // pred_fallthru
          _
        // Predicated region
        $region121: #{tpu_custom_call.1} parent=99 // pred_check
          %p751 = pneg %p264
        $region122: #{tpu_custom_call.1} parent=99 // pred_check_branch
          %753 = sbr.rel (%p751) target = $region124
        $region123: #{tpu_custom_call.1} parent=99 // pred_region
          %754 = dma.done [#allocation12], 16
        $region124: #{tpu_custom_call.1} parent=99 // pred_fallthru
          _
        // Predicated region
        $region125: #{tpu_custom_call.1} parent=99 // pred_check
          %p755 = pneg %p285
        $region126: #{tpu_custom_call.1} parent=99 // pred_check_branch
          %757 = sbr.rel (%p755) target = $region128
        $region127: #{tpu_custom_call.1} parent=99 // pred_region
          %758 = dma.done [#allocation12], 16
        $region128: #{tpu_custom_call.1} parent=99 // pred_fallthru
          _
        // Predicated region
        $region129: #{tpu_custom_call.1} parent=99 // pred_check
          %p759 = pneg %p306
        $region130: #{tpu_custom_call.1} parent=99 // pred_check_branch
          %761 = sbr.rel (%p759) target = $region132
        $region131: #{tpu_custom_call.1} parent=99 // pred_region
          %762 = dma.done [#allocation15], 512
        $region132: #{tpu_custom_call.1} parent=99 // pred_fallthru
          _
        // Predicated region
        $region133: #{tpu_custom_call.1} parent=99 // pred_check
          %p763 = pneg %p327
        $region134: #{tpu_custom_call.1} parent=99 // pred_check_branch
          %765 = sbr.rel (%p763) target = $region136
        $region135: #{tpu_custom_call.1} parent=99 // pred_region
          %766 = dma.done [#allocation15], 16
        $region136: #{tpu_custom_call.1} parent=99 // pred_fallthru
          _
        // Predicated region
        $region137: #{tpu_custom_call.1} parent=99 // pred_check
          %p767 = pneg %p348
        $region138: #{tpu_custom_call.1} parent=99 // pred_check_branch
          %769 = sbr.rel (%p767) target = $region140
        $region139: #{tpu_custom_call.1} parent=99 // pred_region
          %770 = dma.done [#allocation18], 16
        $region140: #{tpu_custom_call.1} parent=99 // pred_fallthru
          _
        // Predicated region
        $region141: #{tpu_custom_call.1} parent=99 // pred_check
          %p771 = pneg %p369
        $region142: #{tpu_custom_call.1} parent=99 // pred_check_branch
          %773 = sbr.rel (%p771) target = $region144
        $region143: #{tpu_custom_call.1} parent=99 // pred_region
          %774 = dma.done [#allocation18], 512
        $region144: #{tpu_custom_call.1} parent=99 // pred_fallthru
          _
        // Predicated region
        $region145: #{tpu_custom_call.1} parent=99 // pred_check
          %p775 = pneg %p390
        $region146: #{tpu_custom_call.1} parent=99 // pred_check_branch
          %777 = sbr.rel (%p775) target = $region148
        $region147: #{tpu_custom_call.1} parent=99 // pred_region
          %778 = dma.done [#allocation21], 16
        $region148: #{tpu_custom_call.1} parent=99 // pred_fallthru
          _
        // Predicated region
        $region149: #{tpu_custom_call.1} parent=99 // pred_check
          %p779 = pneg %p411
        $region150: #{tpu_custom_call.1} parent=99 // pred_check_branch
          %781 = sbr.rel (%p779) target = $region152
        $region151: #{tpu_custom_call.1} parent=99 // pred_region
          %782 = dma.done [#allocation21], 1024
        $region152: #{tpu_custom_call.1} parent=99 // pred_fallthru
          _
        // Predicated region
        $region153: #{tpu_custom_call.1} parent=99 // pred_check
          %p783 = pneg %p432
        $region154: #{tpu_custom_call.1} parent=99 // pred_check_branch
          %785 = sbr.rel (%p783) target = $region156
        $region155: #{tpu_custom_call.1} parent=99 // pred_region
          %786 = dma.done [#allocation24], 32
        $region156: #{tpu_custom_call.1} parent=99 // pred_fallthru
          _
        %p787 = scmp.lt.s32.totalorder %s44, 1
        %s788 = scalar_select %p787, %s44, 1
        %s789 = smul.addr %s788, 2
        %s790 = smul.addr %s789, 8
        %s791 = scalar_lea.vmem %s0, %s790
        %p792 = pneg %p65
        %p793 = pneg %p62
        %s794 = sand.u32 %s78, 1
        %s795 = scalar_lea.sflag [#allocation3], %s794
        %s796 = sand.u32 %s78, 1
        %s797 = smul.addr %s796, 16
        %s798 = scalar_lea.vmem [#allocation2], %s797
        %p799 = pneg %p91
        %p800 = pneg %p88
        %p801 = scmp.lt.s32.totalorder %s44, 1
        %s802 = scalar_select %p801, %s44, 1
        %s803 = scalar_lea.vmem %s2, %s802
        %p804 = pneg %p117
        %p805 = pneg %p114
        %p806 = pneg %p138
        %p807 = pneg %p135
        %p808 = pneg %p159
        %p809 = pneg %p156
        %p810 = pneg %p180
        %p811 = pneg %p177
        %p812 = pneg %p201
        %p813 = pneg %p198
        %p814 = pneg %p222
        %p815 = pneg %p219
        %p816 = pneg %p243
        %p817 = pneg %p240
        %p818 = pneg %p264
        %p819 = pneg %p261
        %p820 = pneg %p285
        %p821 = pneg %p282
        %p822 = pneg %p306
        %p823 = pneg %p303
        %p824 = pneg %p327
        %p825 = pneg %p324
        %p826 = pneg %p348
        %p827 = pneg %p345
        %p828 = pneg %p369
        %p829 = pneg %p366
        %p830 = pneg %p390
        %p831 = pneg %p387
        %p832 = pneg %p411
        %p833 = pneg %p408
        %p834 = pneg %p432
        %p835 = pneg %p429
        %p836 = pneg %p453
        %p837 = pneg %p450
        %p838 = pneg %p474
        %p839 = pneg %p471
        %p840 = pneg %p500
        %p841 = pneg %p497
        %s842 = sand.u32 %s487, 1
        %s843 = scalar_lea.sflag [#allocation4], %s842
        %s844 = sand.u32 %s487, 1
        %s845 = smul.addr %s844, 16
        %s846 = scalar_lea.vmem [#allocation25], %s845
        %p847 = scmp.lt.s32.totalorder %s44, 1
        %s848 = scalar_select %p847, %s44, 1
        %s849 = smul.addr %s848, 2
        %s850 = smul.addr %s849, 8
        %s851 = scalar_lea.vmem %s0, %s850
        %p852 = scmp.lt.s32.totalorder %s44, 1
        %s853 = scalar_select %p852, %s44, 1
        %s854 = scalar_lea.vmem %s2, %s853
        %v856 = vld [vmem:[%s854] sm:$0x1]
        %v857 = vxor.u32 %v856, 2147483648
        %v858 = vmul.f32 %v857, 1.442695
        %v859 = vpow.pop %v858
        %v860 = vadd.f32 %v859, 1.0
        %v861 = vrcp.pop %v860
        %v862 = vmul.f32 1.0, %v861
        %v863 = vmul.f32 %v856, %v862
        %v864 = vpack.c.bf16 %v863, %v863
        %v865 = vld [vmem:[%s3] sm:$0xff]
        %v866 = vld [vmem:[%s3 + $0x8] sm:$0xff]
        %v867 = vld [vmem:[%s3 + $0x10] sm:$0xf]
        %v868 = vld [vmem:[%s3 + $0x14] sm:$0xff]
        %v869 = vld [vmem:[%s3 + $0x1c] sm:$0xff]
        %v870 = vld [vmem:[%s3 + $0x24] sm:$0xf]
        %v871 = vld [vmem:[%s3 + $0x28] sm:$0xff]
        %v872 = vld [vmem:[%s3 + $0x30] sm:$0xff]
        %v873 = vld [vmem:[%s3 + $0x38] sm:$0xf]
        %v874 = vld [vmem:[%s3 + $0x3c] sm:$0xff]
        %v875 = vld [vmem:[%s3 + $0x44] sm:$0xff]
        %v876 = vld [vmem:[%s3 + $0x4c] sm:$0xf]
        %v877 = vld [vmem:[%s3 + $0x50] sm:$0xff]
        %v878 = vld [vmem:[%s3 + $0x58] sm:$0xff]
        %v879 = vld [vmem:[%s3 + $0x60] sm:$0xf]
        %v880 = vld [vmem:[%s3 + $0x64] sm:$0xff]
        %v881 = vld [vmem:[%s3 + $0x6c] sm:$0xff]
        %v882 = vld [vmem:[%s3 + $0x74] sm:$0xf]
        %v883 = vld [vmem:[%s3 + $0x78] sm:$0xff]
        %v884 = vld [vmem:[%s3 + $0x80] sm:$0xff]
        %v885 = vld [vmem:[%s3 + $0x88] sm:$0xf]
        %v886 = vld [vmem:[%s3 + $0x8c] sm:$0xff]
        %v887 = vld [vmem:[%s3 + $0x94] sm:$0xff]
        %v888 = vld [vmem:[%s3 + $0x9c] sm:$0xf]
        %v889 = vld [vmem:[#allocation5] sm:$0x1f]
        %v914 = vunpack.c.l.b16 %v865
        %v915 = vunpack.c.h.b16 %v865
        %v916 = vunpack.c.l.b16 %v866
        %v917 = vunpack.c.h.b16 %v866
        %v918 = vunpack.c.l.b16 %v867
        %v919 = vunpack.c.l.b16 %v868
        %v920 = vunpack.c.h.b16 %v868
        %v921 = vunpack.c.l.b16 %v869
        %v922 = vunpack.c.h.b16 %v869
        %v923 = vunpack.c.l.b16 %v870
        %v924 = vunpack.c.l.b16 %v871
        %v925 = vunpack.c.h.b16 %v871
        %v926 = vunpack.c.l.b16 %v872
        %v927 = vunpack.c.h.b16 %v872
        %v928 = vunpack.c.l.b16 %v873
        %v929 = vunpack.c.l.b16 %v874
        %v930 = vunpack.c.h.b16 %v874
        %v931 = vunpack.c.l.b16 %v875
        %v932 = vunpack.c.h.b16 %v875
        %v933 = vunpack.c.l.b16 %v876
        %v934 = vunpack.c.l.b16 %v877
        %v935 = vunpack.c.h.b16 %v877
        %v936 = vunpack.c.l.b16 %v878
        %v937 = vunpack.c.h.b16 %v878
        %v938 = vunpack.c.l.b16 %v879
        %v939 = vunpack.c.l.b16 %v880
        %v940 = vunpack.c.h.b16 %v880
        %v941 = vunpack.c.l.b16 %v881
        %v942 = vunpack.c.h.b16 %v881
        %v943 = vunpack.c.l.b16 %v882
        %v944 = vunpack.c.l.b16 %v883
        %v945 = vunpack.c.h.b16 %v883
        %v946 = vunpack.c.l.b16 %v884
        %v947 = vunpack.c.h.b16 %v884
        %v948 = vunpack.c.l.b16 %v885
        %v949 = vunpack.c.l.b16 %v886
        %v950 = vunpack.c.h.b16 %v886
        %v951 = vunpack.c.l.b16 %v887
        %v952 = vunpack.c.h.b16 %v887
        %v953 = vunpack.c.l.b16 %v888
        %v954 = vpack.c.b16 %v919, %v914
        %v955 = vpack.c.b16 %v920, %v915
        %v956 = vpack.c.b16 %v921, %v916
        %v957 = vpack.c.b16 %v922, %v917
        %v958 = vpack.c.b16 %v923, %v918
        %v959 = vpack.c.b16 %v929, %v924
        %v960 = vpack.c.b16 %v930, %v925
        %v961 = vpack.c.b16 %v931, %v926
        %v962 = vpack.c.b16 %v932, %v927
        %v963 = vpack.c.b16 %v933, %v928
        %v964 = vpack.c.b16 %v939, %v934
        %v965 = vpack.c.b16 %v940, %v935
        %v966 = vpack.c.b16 %v941, %v936
        %v967 = vpack.c.b16 %v942, %v937
        %v968 = vpack.c.b16 %v943, %v938
        %v969 = vpack.c.b16 %v949, %v944
        %v970 = vpack.c.b16 %v950, %v945
        %v971 = vpack.c.b16 %v951, %v946
        %v972 = vpack.c.b16 %v952, %v947
        %v973 = vpack.c.b16 %v953, %v948
        %v995 = vlaneseq
        %v996 = vshrl.u32 %v995, 7
        %v997 = vsub.s32 0, %v996
        %v998 = vrot.slane %v889, %v997
        %v999 = vlaneseq
        %v1000 = vshrl.u32 %v999, 7
        %v1001 = vsub.s32 1, %v1000
        %v1002 = vrot.slane %v889, %v1001
        %v1003 = vlaneseq
        %v1004 = vshrl.u32 %v1003, 7
        %v1005 = vsub.s32 2, %v1004
        %v1006 = vrot.slane %v889, %v1005
        %v1007 = vlaneseq
        %v1008 = vshrl.u32 %v1007, 7
        %v1009 = vsub.s32 3, %v1008
        %v1010 = vrot.slane %v889, %v1009
        %v1011 = vlaneseq
        %v1012 = vshrl.u32 %v1011, 7
        %v1013 = vsub.s32 4, %v1012
        %v1014 = vrot.slane %v889, %v1013
        %vm1020 = vcmask 523264
        %v1022 = vsel %vm1020, %v864, 0
        %1024 = vmatprep.subr.bf16.mxu0 %v955
        %1025 = vmatpush1.bf16.msra.mxu0 %v954
        %1026 = vmatprep.subr.bf16.mxu0 %v960
        %1027 = vmatpush1.bf16.msra.mxu0 %v959
        %1028 = vmatprep.subr.bf16.mxu0 %v965
        %1029 = vmatpush1.bf16.msra.mxu0 %v964
        %1030 = vmatprep.subr.bf16.mxu0 %v970
        %1031 = vmatpush1.bf16.msra.mxu0 %v969
        %1032 = vmatprep.subr.bf16.mxu0 0
        %1033 = vmatpush1.bf16.msra.mxu0 0
        %1034 = vmatprep.subr.bf16.mxu0 0
        %1035 = vmatpush1.bf16.msra.mxu0 0
        %1036 = vmatprep.subr.bf16.mxu0 0
        %1037 = vmatpush1.bf16.msra.mxu0 0
        %1038 = vmatprep.subr.bf16.mxu0 0
        %1039 = vmatpush1.bf16.msra.mxu0 0
        %1040 = vmatprep.subr.bf16.mxu0 0
        %1041 = vmatpush1.bf16.msra.mxu0 0
        %1042 = vmatprep.subr.bf16.mxu0 0
        %1043 = vmatpush1.bf16.msra.mxu0 0
        %1044 = vmatprep.subr.bf16.mxu0 0
        %1045 = vmatpush1.bf16.msra.mxu0 0
        %1046 = vmatprep.subr.bf16.mxu0 0
        %1047 = vmatpush1.bf16.msra.mxu0 0
        %1048 = vmatprep.subr.bf16.mxu0 0
        %1049 = vmatpush1.bf16.msra.mxu0 0
        %1050 = vmatprep.subr.bf16.mxu0 0
        %1051 = vmatpush1.bf16.msra.mxu0 0
        %1052 = vmatprep.subr.bf16.mxu0 0
        %1053 = vmatpush1.bf16.msra.mxu0 0
        %1054 = vmatprep.subr.bf16.mxu0 0
        %1055 = vmatpush1.bf16.msra.mxu0 0
        %1056 = vmatprep.mubr.bf16.mxu0 0
        %1057 = vmatmul.mubr.bf16.gmra.mrb[0].mxu0 %v1022
        %v1058 = vpop.f32.mrb[0].mxu0
        %v1059 = vadd.f32 %v998, %v1058
        %v1060 = vpop.f32.mrb[0].mxu0
        %v1061 = vadd.f32 %v1002, %v1060
        %v1062 = vpop.f32.mrb[0].mxu0
        %v1063 = vpop.f32.mrb[0].mxu0
        %1064 = vdwg.mxu0
        %1065 = vmatprep.subr.bf16.mxu0 %v957
        %1066 = vmatpush1.bf16.msra.mxu0 %v956
        %1067 = vmatprep.subr.bf16.mxu0 %v962
        %1068 = vmatpush1.bf16.msra.mxu0 %v961
        %1069 = vmatprep.subr.bf16.mxu0 %v967
        %1070 = vmatpush1.bf16.msra.mxu0 %v966
        %1071 = vmatprep.subr.bf16.mxu0 %v972
        %1072 = vmatpush1.bf16.msra.mxu0 %v971
        %1073 = vmatprep.subr.bf16.mxu0 0
        %1074 = vmatpush1.bf16.msra.mxu0 0
        %1075 = vmatprep.subr.bf16.mxu0 0
        %1076 = vmatpush1.bf16.msra.mxu0 0
        %1077 = vmatprep.subr.bf16.mxu0 0
        %1078 = vmatpush1.bf16.msra.mxu0 0
        %1079 = vmatprep.subr.bf16.mxu0 0
        %1080 = vmatpush1.bf16.msra.mxu0 0
        %1081 = vmatprep.subr.bf16.mxu0 0
        %1082 = vmatpush1.bf16.msra.mxu0 0
        %1083 = vmatprep.subr.bf16.mxu0 0
        %1084 = vmatpush1.bf16.msra.mxu0 0
        %1085 = vmatprep.subr.bf16.mxu0 0
        %1086 = vmatpush1.bf16.msra.mxu0 0
        %1087 = vmatprep.subr.bf16.mxu0 0
        %1088 = vmatpush1.bf16.msra.mxu0 0
        %1089 = vmatprep.subr.bf16.mxu0 0
        %1090 = vmatpush1.bf16.msra.mxu0 0
        %1091 = vmatprep.subr.bf16.mxu0 0
        %1092 = vmatpush1.bf16.msra.mxu0 0
        %1093 = vmatprep.subr.bf16.mxu0 0
        %1094 = vmatpush1.bf16.msra.mxu0 0
        %1095 = vmatprep.subr.bf16.mxu0 0
        %1096 = vmatpush1.bf16.msra.mxu0 0
        %1097 = vmatprep.mubr.bf16.mxu0 0
        %1098 = vmatmul.mubr.bf16.gmra.mrb[0].mxu0 %v1022
        %v1099 = vpop.f32.mrb[0].mxu0
        %v1100 = vadd.f32 %v1006, %v1099
        %v1101 = vpop.f32.mrb[0].mxu0
        %v1102 = vadd.f32 %v1010, %v1101
        %v1103 = vpop.f32.mrb[0].mxu0
        %v1104 = vpop.f32.mrb[0].mxu0
        %1105 = vdwg.mxu0
        %1106 = vmatprep.subr.bf16.mxu0 0
        %1107 = vmatpush1.bf16.msra.mxu0 %v958
        %1108 = vmatprep.subr.bf16.mxu0 0
        %1109 = vmatpush1.bf16.msra.mxu0 %v963
        %1110 = vmatprep.subr.bf16.mxu0 0
        %1111 = vmatpush1.bf16.msra.mxu0 %v968
        %1112 = vmatprep.subr.bf16.mxu0 0
        %1113 = vmatpush1.bf16.msra.mxu0 %v973
        %1114 = vmatprep.subr.bf16.mxu0 0
        %1115 = vmatpush1.bf16.msra.mxu0 0
        %1116 = vmatprep.subr.bf16.mxu0 0
        %1117 = vmatpush1.bf16.msra.mxu0 0
        %1118 = vmatprep.subr.bf16.mxu0 0
        %1119 = vmatpush1.bf16.msra.mxu0 0
        %1120 = vmatprep.subr.bf16.mxu0 0
        %1121 = vmatpush1.bf16.msra.mxu0 0
        %1122 = vmatprep.subr.bf16.mxu0 0
        %1123 = vmatpush1.bf16.msra.mxu0 0
        %1124 = vmatprep.subr.bf16.mxu0 0
        %1125 = vmatpush1.bf16.msra.mxu0 0
        %1126 = vmatprep.subr.bf16.mxu0 0
        %1127 = vmatpush1.bf16.msra.mxu0 0
        %1128 = vmatprep.subr.bf16.mxu0 0
        %1129 = vmatpush1.bf16.msra.mxu0 0
        %1130 = vmatprep.subr.bf16.mxu0 0
        %1131 = vmatpush1.bf16.msra.mxu0 0
        %1132 = vmatprep.subr.bf16.mxu0 0
        %1133 = vmatpush1.bf16.msra.mxu0 0
        %1134 = vmatprep.subr.bf16.mxu0 0
        %1135 = vmatpush1.bf16.msra.mxu0 0
        %1136 = vmatprep.subr.bf16.mxu0 0
        %1137 = vmatpush1.bf16.msra.mxu0 0
        %1138 = vmatprep.mubr.bf16.mxu0 0
        %1139 = vmatmul.mubr.bf16.gmra.mrb[0].mxu0 %v1022
        %v1140 = vpop.f32.mrb[0].mxu0
        %v1141 = vadd.f32 %v1014, %v1140
        %v1142 = vpop.f32.mrb[0].mxu0
        %v1143 = vpop.f32.mrb[0].mxu0
        %v1144 = vpop.f32.mrb[0].mxu0
        %1145 = vdwg.mxu0
        %v1146 = vld [vmem:[%s851] sm:$0xff]
        %v1147 = vld [vmem:[%s851 + $0x8] sm:$0xff]
        %v1148 = vsel %vm1020, %v1146, 0.0
        %1149 = vadd.xlane.f32.xlu0 %v1148
        %v1150 = vpop.xlane.xlu0 %1149
        %v1151 = vsel %vm1020, %v1147, 0.0
        %1152 = vadd.xlane.f32.xlu0 %v1151
        %v1153 = vpop.xlane.xlu0 %1152
        %v1154 = vrcp.pop 64.0
        %v1155 = vmul.f32 %v1150, %v1154
        %v1156 = vmul.f32 %v1153, %v1154
        %v1157 = vsub.f32 %v1146, %v1155
        %v1158 = vsub.f32 %v1147, %v1156
        %v1159 = vmul.f32 %v1157, %v1157
        %v1160 = vmul.f32 %v1158, %v1158
        %v1161 = vsel %vm1020, %v1159, 0.0
        %1162 = vadd.xlane.f32.xlu0 %v1161
        %v1163 = vpop.xlane.xlu0 %1162
        %v1164 = vsel %vm1020, %v1160, 0.0
        %1165 = vadd.xlane.f32.xlu0 %v1164
        %v1166 = vpop.xlane.xlu0 %1165
        %v1167 = vmul.f32 %v1163, %v1154
        %v1168 = vmul.f32 %v1166, %v1154
        %v1169 = vadd.f32 %v1167, 1e-06
        %v1170 = vadd.f32 %v1168, 1e-06
        %v1171 = vrsqrt.pop %v1169
        %v1172 = vrsqrt.pop %v1170
        %v1173 = vmul.f32 %v1157, %v1171
        %v1174 = vmul.f32 %v1158, %v1172
        %v1175 = vadd.f32 %v1059, 1.0
        %v1176 = vlaneseq
        %v1177 = vshrl.u32 %v1176, 7
        %v1178 = vsub.s32 0, %v1177
        %v1179 = vrot.slane %v1175, %v1178
        %1181 = vrot.lane.b32.xlu0 %v1179, 64
        %v1182 = vpop.permute.xlu0 %1181
        %v1184 = vmul.f32 %v1173, %v1182
        %v1185 = vmul.f32 %v1174, %v1182
        %v1186 = vlaneseq
        %v1187 = vshrl.u32 %v1186, 7
        %v1188 = vsub.s32 0, %v1187
        %v1189 = vrot.slane %v1059, %v1188
        %v1190 = vadd.f32 %v1184, %v1189
        %v1191 = vadd.f32 %v1185, %v1189
        %v1192 = vpack.c.bf16 %v1191, %v1190
        %v1193 = vld [vmem:[#allocation7] sm:$0xff]
        %v1194 = vld [vmem:[#allocation7 + $0x8] sm:$0xff]
        %v1195 = vld [vmem:[#allocation7 + $0x10] sm:$0xff]
        %v1196 = vld [vmem:[#allocation7 + $0x18] sm:$0xff]
        %v1197 = vld [vmem:[#allocation7 + $0x20] sm:$0xff]
        %v1198 = vld [vmem:[#allocation7 + $0x28] sm:$0xff]
        %v1199 = vld [vmem:[#allocation7 + $0x30] sm:$0xff]
        %v1200 = vld [vmem:[#allocation7 + $0x38] sm:$0xff]
        %v1201 = vld [vmem:[%s6] sm:$0x3]
        %v1203 = vlaneseq
        %v1204 = vshrl.u32 %v1203, 7
        %v1205 = vsub.s32 0, %v1204
        %v1206 = vrot.slane %v1201, %v1205
        %v1207 = vlaneseq
        %v1208 = vshrl.u32 %v1207, 7
        %v1209 = vsub.s32 1, %v1208
        %v1210 = vrot.slane %v1201, %v1209
        %v1221 = vunpack.c.l.b16 %v1193
        %v1222 = vunpack.c.h.b16 %v1193
        %v1223 = vunpack.c.l.b16 %v1194
        %v1224 = vunpack.c.h.b16 %v1194
        %v1225 = vunpack.c.l.b16 %v1195
        %v1226 = vunpack.c.h.b16 %v1195
        %v1227 = vunpack.c.l.b16 %v1196
        %v1228 = vunpack.c.h.b16 %v1196
        %v1229 = vunpack.c.l.b16 %v1197
        %v1230 = vunpack.c.h.b16 %v1197
        %v1231 = vunpack.c.l.b16 %v1198
        %v1232 = vunpack.c.h.b16 %v1198
        %v1233 = vunpack.c.l.b16 %v1199
        %v1234 = vunpack.c.h.b16 %v1199
        %v1235 = vunpack.c.l.b16 %v1200
        %v1236 = vunpack.c.h.b16 %v1200
        %v1237 = vpack.c.b16 %v1223, %v1221
        %v1238 = vpack.c.b16 %v1224, %v1222
        %v1239 = vpack.c.b16 %v1227, %v1225
        %v1240 = vpack.c.b16 %v1228, %v1226
        %v1241 = vpack.c.b16 %v1231, %v1229
        %v1242 = vpack.c.b16 %v1232, %v1230
        %v1243 = vpack.c.b16 %v1235, %v1233
        %v1244 = vpack.c.b16 %v1236, %v1234
        %v1254 = vsel %vm1020, %v1192, 0
        %1256 = vmatprep.subr.bf16.mxu0 %v1238
        %1257 = vmatpush1.bf16.msra.mxu0 %v1237
        %1258 = vmatprep.subr.bf16.mxu0 %v1240
        %1259 = vmatpush1.bf16.msra.mxu0 %v1239
        %1260 = vmatprep.subr.bf16.mxu0 %v1242
        %1261 = vmatpush1.bf16.msra.mxu0 %v1241
        %1262 = vmatprep.subr.bf16.mxu0 %v1244
        %1263 = vmatpush1.bf16.msra.mxu0 %v1243
        %1264 = vmatprep.subr.bf16.mxu0 0
        %1265 = vmatpush1.bf16.msra.mxu0 0
        %1266 = vmatprep.subr.bf16.mxu0 0
        %1267 = vmatpush1.bf16.msra.mxu0 0
        %1268 = vmatprep.subr.bf16.mxu0 0
        %1269 = vmatpush1.bf16.msra.mxu0 0
        %1270 = vmatprep.subr.bf16.mxu0 0
        %1271 = vmatpush1.bf16.msra.mxu0 0
        %1272 = vmatprep.subr.bf16.mxu0 0
        %1273 = vmatpush1.bf16.msra.mxu0 0
        %1274 = vmatprep.subr.bf16.mxu0 0
        %1275 = vmatpush1.bf16.msra.mxu0 0
        %1276 = vmatprep.subr.bf16.mxu0 0
        %1277 = vmatpush1.bf16.msra.mxu0 0
        %1278 = vmatprep.subr.bf16.mxu0 0
        %1279 = vmatpush1.bf16.msra.mxu0 0
        %1280 = vmatprep.subr.bf16.mxu0 0
        %1281 = vmatpush1.bf16.msra.mxu0 0
        %1282 = vmatprep.subr.bf16.mxu0 0
        %1283 = vmatpush1.bf16.msra.mxu0 0
        %1284 = vmatprep.subr.bf16.mxu0 0
        %1285 = vmatpush1.bf16.msra.mxu0 0
        %1286 = vmatprep.subr.bf16.mxu0 0
        %1287 = vmatpush1.bf16.msra.mxu0 0
        %1288 = vmatprep.mubr.bf16.mxu0 0
        %1289 = vmatmul.mubr.bf16.gmra.mrb[0].mxu0 %v1254
        %v1290 = vpop.f32.mrb[0].mxu0
        %v1291 = vadd.f32 %v1206, %v1290
        %v1292 = vpop.f32.mrb[0].mxu0
        %v1293 = vadd.f32 %v1210, %v1292
        %v1294 = vpop.f32.mrb[0].mxu0
        %v1295 = vadd.f32 %v1206, %v1294
        %v1296 = vpop.f32.mrb[0].mxu0
        %v1297 = vadd.f32 %v1210, %v1296
        %1298 = vdwg.mxu0
        %v1299 = vmul.f32 %v1291, 0.25
        %v1300 = vmul.f32 %v1295, 0.25
        %v1301 = vld [vmem:[#allocation8] sm:$0xf]
        %v1302 = vld [vmem:[#allocation8 + $0x4] sm:$0xf]
        %v1303 = vld [vmem:[#allocation8 + $0x8] sm:$0xf]
        %v1304 = vld [vmem:[#allocation8 + $0xc] sm:$0xf]
        %v1305 = vld [vmem:[#allocation8 + $0x10] sm:$0xf]
        %v1306 = vld [vmem:[#allocation8 + $0x14] sm:$0xf]
        %v1307 = vld [vmem:[#allocation8 + $0x18] sm:$0xf]
        %v1308 = vld [vmem:[#allocation8 + $0x1c] sm:$0xf]
        %v1309 = vld [vmem:[#allocation10] sm:$0x1]
        %v1310 = vpack.c.bf16 %v1300, %v1299
        %v1311 = vpack.c.bf16 %v1295, %v1291
        %v1312 = vpack.c.bf16 %v1297, %v1293
        %1314 = vrot.lane.b32.xlu0 %v1311, 64
        %v1315 = vpop.permute.xlu0 %1314
        %vm1316 = vcmask 130048
        %v1318 = vsel %vm1316, %v1310, 0
        %v1321 = vsel %vm1316, %v1315, 0
        %1323 = vmatprep.subr.bf16.mxu0 0
        %1324 = vmatpush1.bf16.xpose.msra.mxu0 %v1321
        %1325 = vmatprep.subr.bf16.mxu0 0
        %1326 = vmatpush1.bf16.xpose.msra.mxu0 0
        %1327 = vmatprep.subr.bf16.mxu0 0
        %1328 = vmatpush1.bf16.xpose.msra.mxu0 0
        %1329 = vmatprep.subr.bf16.mxu0 0
        %1330 = vmatpush1.bf16.xpose.msra.mxu0 0
        %1331 = vmatprep.subr.bf16.mxu0 0
        %1332 = vmatpush1.bf16.xpose.msra.mxu0 0
        %1333 = vmatprep.subr.bf16.mxu0 0
        %1334 = vmatpush1.bf16.xpose.msra.mxu0 0
        %1335 = vmatprep.subr.bf16.mxu0 0
        %1336 = vmatpush1.bf16.xpose.msra.mxu0 0
        %1337 = vmatprep.subr.bf16.mxu0 0
        %1338 = vmatpush1.bf16.xpose.msra.mxu0 0
        %1339 = vmatprep.subr.bf16.mxu0 0
        %1340 = vmatpush1.bf16.xpose.msra.mxu0 0
        %1341 = vmatprep.subr.bf16.mxu0 0
        %1342 = vmatpush1.bf16.xpose.msra.mxu0 0
        %1343 = vmatprep.subr.bf16.mxu0 0
        %1344 = vmatpush1.bf16.xpose.msra.mxu0 0
        %1345 = vmatprep.subr.bf16.mxu0 0
        %1346 = vmatpush1.bf16.xpose.msra.mxu0 0
        %1347 = vmatprep.subr.bf16.mxu0 0
        %1348 = vmatpush1.bf16.xpose.msra.mxu0 0
        %1349 = vmatprep.subr.bf16.mxu0 0
        %1350 = vmatpush1.bf16.xpose.msra.mxu0 0
        %1351 = vmatprep.subr.bf16.mxu0 0
        %1352 = vmatpush1.bf16.xpose.msra.mxu0 0
        %1353 = vmatprep.subr.bf16.mxu0 0
        %1354 = vmatpush1.bf16.xpose.msra.mxu0 0
        %1355 = vmatprep.mubr.bf16.mxu0 0
        %1356 = vmatmul.mubr.bf16.gmra.mrb[0].mxu0 %v1318
        %v1357 = vpop.f32.mrb[0].mxu0
        %v1358 = vadd.f32 0.0, %v1357
        %v1359 = vpop.f32.mrb[0].mxu0
        %v1360 = vpop.f32.mrb[0].mxu0
        %v1361 = vadd.f32 0.0, %v1360
        %v1362 = vpop.f32.mrb[0].mxu0
        %1363 = vdwg.mxu0
        %v1364 = vsel %vm1316, %v1358, -inf
        %1365 = vmax.xlane.f32.xlu0 %v1364
        %v1366 = vpop.xlane.xlu0 %1365
        %v1367 = vsel %vm1316, %v1361, -inf
        %1368 = vmax.xlane.f32.xlu0 %v1367
        %v1369 = vpop.xlane.xlu0 %1368
        %v1370 = vsub.f32 %v1358, %v1366
        %v1371 = vsub.f32 %v1361, %v1369
        %v1372 = vmul.f32 %v1370, 1.442695
        %v1373 = vpow.pop %v1372
        %v1374 = vmul.f32 %v1371, 1.442695
        %v1375 = vpow.pop %v1374
        %v1376 = vsel %vm1316, %v1373, 0.0
        %1377 = vadd.xlane.f32.xlu0 %v1376
        %v1378 = vpop.xlane.xlu0 %1377
        %v1379 = vsel %vm1316, %v1375, 0.0
        %1380 = vadd.xlane.f32.xlu0 %v1379
        %v1381 = vpop.xlane.xlu0 %1380
        %v1382 = vrcp.pop %v1378
        %v1383 = vrcp.pop %v1381
        %v1384 = vmul.f32 %v1373, %v1382
        %v1385 = vmul.f32 %v1375, %v1383
        %v1386 = vpack.c.bf16 %v1385, %v1384
        %v1388 = vsel %vm1316, %v1386, 0
        %1390 = vmatprep.subr.bf16.mxu0 0
        %1391 = vmatpush1.bf16.msra.mxu0 %v1312
        %1392 = vmatprep.subr.bf16.mxu0 0
        %1393 = vmatpush1.bf16.msra.mxu0 0
        %1394 = vmatprep.subr.bf16.mxu0 0
        %1395 = vmatpush1.bf16.msra.mxu0 0
        %1396 = vmatprep.subr.bf16.mxu0 0
        %1397 = vmatpush1.bf16.msra.mxu0 0
        %1398 = vmatprep.subr.bf16.mxu0 0
        %1399 = vmatpush1.bf16.msra.mxu0 0
        %1400 = vmatprep.subr.bf16.mxu0 0
        %1401 = vmatpush1.bf16.msra.mxu0 0
        %1402 = vmatprep.subr.bf16.mxu0 0
        %1403 = vmatpush1.bf16.msra.mxu0 0
        %1404 = vmatprep.subr.bf16.mxu0 0
        %1405 = vmatpush1.bf16.msra.mxu0 0
        %1406 = vmatprep.subr.bf16.mxu0 0
        %1407 = vmatpush1.bf16.msra.mxu0 0
        %1408 = vmatprep.subr.bf16.mxu0 0
        %1409 = vmatpush1.bf16.msra.mxu0 0
        %1410 = vmatprep.subr.bf16.mxu0 0
        %1411 = vmatpush1.bf16.msra.mxu0 0
        %1412 = vmatprep.subr.bf16.mxu0 0
        %1413 = vmatpush1.bf16.msra.mxu0 0
        %1414 = vmatprep.subr.bf16.mxu0 0
        %1415 = vmatpush1.bf16.msra.mxu0 0
        %1416 = vmatprep.subr.bf16.mxu0 0
        %1417 = vmatpush1.bf16.msra.mxu0 0
        %1418 = vmatprep.subr.bf16.mxu0 0
        %1419 = vmatpush1.bf16.msra.mxu0 0
        %1420 = vmatprep.subr.bf16.mxu0 0
        %1421 = vmatpush1.bf16.msra.mxu0 0
        %1422 = vmatprep.mubr.bf16.mxu0 0
        %1423 = vmatmul.mubr.bf16.gmra.mrb[0].mxu0 %v1388
        %v1424 = vpop.f32.mrb[0].mxu0
        %v1425 = vadd.f32 0.0, %v1424
        %v1426 = vpop.f32.mrb[0].mxu0
        %v1427 = vpop.f32.mrb[0].mxu0
        %v1428 = vadd.f32 0.0, %v1427
        %v1429 = vpop.f32.mrb[0].mxu0
        %1430 = vdwg.mxu0
        %v1431 = vpack.c.bf16 %v1428, %v1425
        %1433 = vrot.lane.b32.xlu0 %v1310, 112
        %v1434 = vpop.permute.xlu0 %1433
        %1435 = vrot.lane.b32.xlu0 %v1311, 48
        %v1436 = vpop.permute.xlu0 %1435
        %v1438 = vsel %vm1316, %v1434, 0
        %v1441 = vsel %vm1316, %v1436, 0
        %1443 = vmatprep.subr.bf16.mxu0 0
        %1444 = vmatpush1.bf16.xpose.msra.mxu0 %v1441
        %1445 = vmatprep.subr.bf16.mxu0 0
        %1446 = vmatpush1.bf16.xpose.msra.mxu0 0
        %1447 = vmatprep.subr.bf16.mxu0 0
        %1448 = vmatpush1.bf16.xpose.msra.mxu0 0
        %1449 = vmatprep.subr.bf16.mxu0 0
        %1450 = vmatpush1.bf16.xpose.msra.mxu0 0
        %1451 = vmatprep.subr.bf16.mxu0 0
        %1452 = vmatpush1.bf16.xpose.msra.mxu0 0
        %1453 = vmatprep.subr.bf16.mxu0 0
        %1454 = vmatpush1.bf16.xpose.msra.mxu0 0
        %1455 = vmatprep.subr.bf16.mxu0 0
        %1456 = vmatpush1.bf16.xpose.msra.mxu0 0
        %1457 = vmatprep.subr.bf16.mxu0 0
        %1458 = vmatpush1.bf16.xpose.msra.mxu0 0
        %1459 = vmatprep.subr.bf16.mxu0 0
        %1460 = vmatpush1.bf16.xpose.msra.mxu0 0
        %1461 = vmatprep.subr.bf16.mxu0 0
        %1462 = vmatpush1.bf16.xpose.msra.mxu0 0
        %1463 = vmatprep.subr.bf16.mxu0 0
        %1464 = vmatpush1.bf16.xpose.msra.mxu0 0
        %1465 = vmatprep.subr.bf16.mxu0 0
        %1466 = vmatpush1.bf16.xpose.msra.mxu0 0
        %1467 = vmatprep.subr.bf16.mxu0 0
        %1468 = vmatpush1.bf16.xpose.msra.mxu0 0
        %1469 = vmatprep.subr.bf16.mxu0 0
        %1470 = vmatpush1.bf16.xpose.msra.mxu0 0
        %1471 = vmatprep.subr.bf16.mxu0 0
        %1472 = vmatpush1.bf16.xpose.msra.mxu0 0
        %1473 = vmatprep.subr.bf16.mxu0 0
        %1474 = vmatpush1.bf16.xpose.msra.mxu0 0
        %1475 = vmatprep.mubr.bf16.mxu0 0
        %1476 = vmatmul.mubr.bf16.gmra.mrb[0].mxu0 %v1438
        %v1477 = vpop.f32.mrb[0].mxu0
        %v1478 = vadd.f32 0.0, %v1477
        %v1479 = vpop.f32.mrb[0].mxu0
        %v1480 = vpop.f32.mrb[0].mxu0
        %v1481 = vadd.f32 0.0, %v1480
        %v1482 = vpop.f32.mrb[0].mxu0
        %1483 = vdwg.mxu0
        %v1484 = vsel %vm1316, %v1478, -inf
        %1485 = vmax.xlane.f32.xlu0 %v1484
        %v1486 = vpop.xlane.xlu0 %1485
        %v1487 = vsel %vm1316, %v1481, -inf
        %1488 = vmax.xlane.f32.xlu0 %v1487
        %v1489 = vpop.xlane.xlu0 %1488
        %v1490 = vsub.f32 %v1478, %v1486
        %v1491 = vsub.f32 %v1481, %v1489
        %v1492 = vmul.f32 %v1490, 1.442695
        %v1493 = vpow.pop %v1492
        %v1494 = vmul.f32 %v1491, 1.442695
        %v1495 = vpow.pop %v1494
        %v1496 = vsel %vm1316, %v1493, 0.0
        %1497 = vadd.xlane.f32.xlu0 %v1496
        %v1498 = vpop.xlane.xlu0 %1497
        %v1499 = vsel %vm1316, %v1495, 0.0
        %1500 = vadd.xlane.f32.xlu0 %v1499
        %v1501 = vpop.xlane.xlu0 %1500
        %v1502 = vrcp.pop %v1498
        %v1503 = vrcp.pop %v1501
        %v1504 = vmul.f32 %v1493, %v1502
        %v1505 = vmul.f32 %v1495, %v1503
        %v1506 = vpack.c.bf16 %v1505, %v1504
        %1508 = vrot.lane.b32.xlu0 %v1312, 112
        %v1509 = vpop.permute.xlu0 %1508
        %v1512 = vsel %vm1316, %v1506, 0
        %1514 = vmatprep.subr.bf16.mxu0 0
        %1515 = vmatpush1.bf16.msra.mxu0 %v1509
        %1516 = vmatprep.subr.bf16.mxu0 0
        %1517 = vmatpush1.bf16.msra.mxu0 0
        %1518 = vmatprep.subr.bf16.mxu0 0
        %1519 = vmatpush1.bf16.msra.mxu0 0
        %1520 = vmatprep.subr.bf16.mxu0 0
        %1521 = vmatpush1.bf16.msra.mxu0 0
        %1522 = vmatprep.subr.bf16.mxu0 0
        %1523 = vmatpush1.bf16.msra.mxu0 0
        %1524 = vmatprep.subr.bf16.mxu0 0
        %1525 = vmatpush1.bf16.msra.mxu0 0
        %1526 = vmatprep.subr.bf16.mxu0 0
        %1527 = vmatpush1.bf16.msra.mxu0 0
        %1528 = vmatprep.subr.bf16.mxu0 0
        %1529 = vmatpush1.bf16.msra.mxu0 0
        %1530 = vmatprep.subr.bf16.mxu0 0
        %1531 = vmatpush1.bf16.msra.mxu0 0
        %1532 = vmatprep.subr.bf16.mxu0 0
        %1533 = vmatpush1.bf16.msra.mxu0 0
        %1534 = vmatprep.subr.bf16.mxu0 0
        %1535 = vmatpush1.bf16.msra.mxu0 0
        %1536 = vmatprep.subr.bf16.mxu0 0
        %1537 = vmatpush1.bf16.msra.mxu0 0
        %1538 = vmatprep.subr.bf16.mxu0 0
        %1539 = vmatpush1.bf16.msra.mxu0 0
        %1540 = vmatprep.subr.bf16.mxu0 0
        %1541 = vmatpush1.bf16.msra.mxu0 0
        %1542 = vmatprep.subr.bf16.mxu0 0
        %1543 = vmatpush1.bf16.msra.mxu0 0
        %1544 = vmatprep.subr.bf16.mxu0 0
        %1545 = vmatpush1.bf16.msra.mxu0 0
        %1546 = vmatprep.mubr.bf16.mxu0 0
        %1547 = vmatmul.mubr.bf16.gmra.mrb[0].mxu0 %v1512
        %v1548 = vpop.f32.mrb[0].mxu0
        %v1549 = vadd.f32 0.0, %v1548
        %v1550 = vpop.f32.mrb[0].mxu0
        %v1551 = vpop.f32.mrb[0].mxu0
        %v1552 = vadd.f32 0.0, %v1551
        %v1553 = vpop.f32.mrb[0].mxu0
        %1554 = vdwg.mxu0
        %v1555 = vpack.c.bf16 %v1552, %v1549
        %v1558 = vunpack.c.l.b16 %v1303
        %v1559 = vunpack.c.l.b16 %v1304
        %v1560 = vpack.c.b16 %v1559, %v1558
        %v1563 = vsel %vm1316, %v1555, 0
        %1565 = vmatprep.subr.bf16.mxu0 0
        %1566 = vmatpush1.bf16.msra.mxu0 %v1560
        %1567 = vmatprep.subr.bf16.mxu0 0
        %1568 = vmatpush1.bf16.msra.mxu0 0
        %1569 = vmatprep.subr.bf16.mxu0 0
        %1570 = vmatpush1.bf16.msra.mxu0 0
        %1571 = vmatprep.subr.bf16.mxu0 0
        %1572 = vmatpush1.bf16.msra.mxu0 0
        %1573 = vmatprep.subr.bf16.mxu0 0
        %1574 = vmatpush1.bf16.msra.mxu0 0
        %1575 = vmatprep.subr.bf16.mxu0 0
        %1576 = vmatpush1.bf16.msra.mxu0 0
        %1577 = vmatprep.subr.bf16.mxu0 0
        %1578 = vmatpush1.bf16.msra.mxu0 0
        %1579 = vmatprep.subr.bf16.mxu0 0
        %1580 = vmatpush1.bf16.msra.mxu0 0
        %1581 = vmatprep.subr.bf16.mxu0 0
        %1582 = vmatpush1.bf16.msra.mxu0 0
        %1583 = vmatprep.subr.bf16.mxu0 0
        %1584 = vmatpush1.bf16.msra.mxu0 0
        %1585 = vmatprep.subr.bf16.mxu0 0
        %1586 = vmatpush1.bf16.msra.mxu0 0
        %1587 = vmatprep.subr.bf16.mxu0 0
        %1588 = vmatpush1.bf16.msra.mxu0 0
        %1589 = vmatprep.subr.bf16.mxu0 0
        %1590 = vmatpush1.bf16.msra.mxu0 0
        %1591 = vmatprep.subr.bf16.mxu0 0
        %1592 = vmatpush1.bf16.msra.mxu0 0
        %1593 = vmatprep.subr.bf16.mxu0 0
        %1594 = vmatpush1.bf16.msra.mxu0 0
        %1595 = vmatprep.subr.bf16.mxu0 0
        %1596 = vmatpush1.bf16.msra.mxu0 0
        %1597 = vmatprep.mubr.bf16.mxu0 0
        %1598 = vmatmul.mubr.bf16.gmra.mrb[0].mxu0 %v1563
        %v1599 = vpop.f32.mrb[0].mxu0
        %v1600 = vadd.f32 0.0, %v1599
        %v1601 = vpop.f32.mrb[0].mxu0
        %v1602 = vpop.f32.mrb[0].mxu0
        %v1603 = vadd.f32 0.0, %v1602
        %v1604 = vpop.f32.mrb[0].mxu0
        %1605 = vdwg.mxu0
        %v1608 = vunpack.c.l.b16 %v1301
        %v1609 = vunpack.c.l.b16 %v1302
        %v1610 = vpack.c.b16 %v1609, %v1608
        %v1613 = vsel %vm1316, %v1431, 0
        %1615 = vmatprep.subr.bf16.mxu0 0
        %1616 = vmatpush1.bf16.msra.mxu0 %v1610
        %1617 = vmatprep.subr.bf16.mxu0 0
        %1618 = vmatpush1.bf16.msra.mxu0 0
        %1619 = vmatprep.subr.bf16.mxu0 0
        %1620 = vmatpush1.bf16.msra.mxu0 0
        %1621 = vmatprep.subr.bf16.mxu0 0
        %1622 = vmatpush1.bf16.msra.mxu0 0
        %1623 = vmatprep.subr.bf16.mxu0 0
        %1624 = vmatpush1.bf16.msra.mxu0 0
        %1625 = vmatprep.subr.bf16.mxu0 0
        %1626 = vmatpush1.bf16.msra.mxu0 0
        %1627 = vmatprep.subr.bf16.mxu0 0
        %1628 = vmatpush1.bf16.msra.mxu0 0
        %1629 = vmatprep.subr.bf16.mxu0 0
        %1630 = vmatpush1.bf16.msra.mxu0 0
        %1631 = vmatprep.subr.bf16.mxu0 0
        %1632 = vmatpush1.bf16.msra.mxu0 0
        %1633 = vmatprep.subr.bf16.mxu0 0
        %1634 = vmatpush1.bf16.msra.mxu0 0
        %1635 = vmatprep.subr.bf16.mxu0 0
        %1636 = vmatpush1.bf16.msra.mxu0 0
        %1637 = vmatprep.subr.bf16.mxu0 0
        %1638 = vmatpush1.bf16.msra.mxu0 0
        %1639 = vmatprep.subr.bf16.mxu0 0
        %1640 = vmatpush1.bf16.msra.mxu0 0
        %1641 = vmatprep.subr.bf16.mxu0 0
        %1642 = vmatpush1.bf16.msra.mxu0 0
        %1643 = vmatprep.subr.bf16.mxu0 0
        %1644 = vmatpush1.bf16.msra.mxu0 0
        %1645 = vmatprep.subr.bf16.mxu0 0
        %1646 = vmatpush1.bf16.msra.mxu0 0
        %1647 = vmatprep.mubr.bf16.mxu0 0
        %1648 = vmatmul.mubr.bf16.gmra.mrb[0].mxu0 %v1613
        %v1649 = vpop.f32.mrb[0].mxu0
        %v1650 = vadd.f32 %v1600, %v1649
        %v1651 = vpop.f32.mrb[0].mxu0
        %v1652 = vpop.f32.mrb[0].mxu0
        %v1653 = vadd.f32 %v1603, %v1652
        %v1654 = vpop.f32.mrb[0].mxu0
        %1655 = vdwg.mxu0
        %1656 = vrot.lane.b32.xlu0 %v1310, 96
        %v1657 = vpop.permute.xlu0 %1656
        %1658 = vrot.lane.b32.xlu0 %v1311, 32
        %v1659 = vpop.permute.xlu0 %1658
        %v1661 = vsel %vm1316, %v1657, 0
        %v1664 = vsel %vm1316, %v1659, 0
        %1666 = vmatprep.subr.bf16.mxu0 0
        %1667 = vmatpush1.bf16.xpose.msra.mxu0 %v1664
        %1668 = vmatprep.subr.bf16.mxu0 0
        %1669 = vmatpush1.bf16.xpose.msra.mxu0 0
        %1670 = vmatprep.subr.bf16.mxu0 0
        %1671 = vmatpush1.bf16.xpose.msra.mxu0 0
        %1672 = vmatprep.subr.bf16.mxu0 0
        %1673 = vmatpush1.bf16.xpose.msra.mxu0 0
        %1674 = vmatprep.subr.bf16.mxu0 0
        %1675 = vmatpush1.bf16.xpose.msra.mxu0 0
        %1676 = vmatprep.subr.bf16.mxu0 0
        %1677 = vmatpush1.bf16.xpose.msra.mxu0 0
        %1678 = vmatprep.subr.bf16.mxu0 0
        %1679 = vmatpush1.bf16.xpose.msra.mxu0 0
        %1680 = vmatprep.subr.bf16.mxu0 0
        %1681 = vmatpush1.bf16.xpose.msra.mxu0 0
        %1682 = vmatprep.subr.bf16.mxu0 0
        %1683 = vmatpush1.bf16.xpose.msra.mxu0 0
        %1684 = vmatprep.subr.bf16.mxu0 0
        %1685 = vmatpush1.bf16.xpose.msra.mxu0 0
        %1686 = vmatprep.subr.bf16.mxu0 0
        %1687 = vmatpush1.bf16.xpose.msra.mxu0 0
        %1688 = vmatprep.subr.bf16.mxu0 0
        %1689 = vmatpush1.bf16.xpose.msra.mxu0 0
        %1690 = vmatprep.subr.bf16.mxu0 0
        %1691 = vmatpush1.bf16.xpose.msra.mxu0 0
        %1692 = vmatprep.subr.bf16.mxu0 0
        %1693 = vmatpush1.bf16.xpose.msra.mxu0 0
        %1694 = vmatprep.subr.bf16.mxu0 0
        %1695 = vmatpush1.bf16.xpose.msra.mxu0 0
        %1696 = vmatprep.subr.bf16.mxu0 0
        %1697 = vmatpush1.bf16.xpose.msra.mxu0 0
        %1698 = vmatprep.mubr.bf16.mxu0 0
        %1699 = vmatmul.mubr.bf16.gmra.mrb[0].mxu0 %v1661
        %v1700 = vpop.f32.mrb[0].mxu0
        %v1701 = vadd.f32 0.0, %v1700
        %v1702 = vpop.f32.mrb[0].mxu0
        %v1703 = vpop.f32.mrb[0].mxu0
        %v1704 = vadd.f32 0.0, %v1703
        %v1705 = vpop.f32.mrb[0].mxu0
        %1706 = vdwg.mxu0
        %v1707 = vsel %vm1316, %v1701, -inf
        %1708 = vmax.xlane.f32.xlu0 %v1707
        %v1709 = vpop.xlane.xlu0 %1708
        %v1710 = vsel %vm1316, %v1704, -inf
        %1711 = vmax.xlane.f32.xlu0 %v1710
        %v1712 = vpop.xlane.xlu0 %1711
        %v1713 = vsub.f32 %v1701, %v1709
        %v1714 = vsub.f32 %v1704, %v1712
        %v1715 = vmul.f32 %v1713, 1.442695
        %v1716 = vpow.pop %v1715
        %v1717 = vmul.f32 %v1714, 1.442695
        %v1718 = vpow.pop %v1717
        %v1719 = vsel %vm1316, %v1716, 0.0
        %1720 = vadd.xlane.f32.xlu0 %v1719
        %v1721 = vpop.xlane.xlu0 %1720
        %v1722 = vsel %vm1316, %v1718, 0.0
        %1723 = vadd.xlane.f32.xlu0 %v1722
        %v1724 = vpop.xlane.xlu0 %1723
        %v1725 = vrcp.pop %v1721
        %v1726 = vrcp.pop %v1724
        %v1727 = vmul.f32 %v1716, %v1725
        %v1728 = vmul.f32 %v1718, %v1726
        %v1729 = vpack.c.bf16 %v1728, %v1727
        %1730 = vrot.lane.b32.xlu0 %v1312, 96
        %v1731 = vpop.permute.xlu0 %1730
        %v1734 = vsel %vm1316, %v1729, 0
        %1736 = vmatprep.subr.bf16.mxu0 0
        %1737 = vmatpush1.bf16.msra.mxu0 %v1731
        %1738 = vmatprep.subr.bf16.mxu0 0
        %1739 = vmatpush1.bf16.msra.mxu0 0
        %1740 = vmatprep.subr.bf16.mxu0 0
        %1741 = vmatpush1.bf16.msra.mxu0 0
        %1742 = vmatprep.subr.bf16.mxu0 0
        %1743 = vmatpush1.bf16.msra.mxu0 0
        %1744 = vmatprep.subr.bf16.mxu0 0
        %1745 = vmatpush1.bf16.msra.mxu0 0
        %1746 = vmatprep.subr.bf16.mxu0 0
        %1747 = vmatpush1.bf16.msra.mxu0 0
        %1748 = vmatprep.subr.bf16.mxu0 0
        %1749 = vmatpush1.bf16.msra.mxu0 0
        %1750 = vmatprep.subr.bf16.mxu0 0
        %1751 = vmatpush1.bf16.msra.mxu0 0
        %1752 = vmatprep.subr.bf16.mxu0 0
        %1753 = vmatpush1.bf16.msra.mxu0 0
        %1754 = vmatprep.subr.bf16.mxu0 0
        %1755 = vmatpush1.bf16.msra.mxu0 0
        %1756 = vmatprep.subr.bf16.mxu0 0
        %1757 = vmatpush1.bf16.msra.mxu0 0
        %1758 = vmatprep.subr.bf16.mxu0 0
        %1759 = vmatpush1.bf16.msra.mxu0 0
        %1760 = vmatprep.subr.bf16.mxu0 0
        %1761 = vmatpush1.bf16.msra.mxu0 0
        %1762 = vmatprep.subr.bf16.mxu0 0
        %1763 = vmatpush1.bf16.msra.mxu0 0
        %1764 = vmatprep.subr.bf16.mxu0 0
        %1765 = vmatpush1.bf16.msra.mxu0 0
        %1766 = vmatprep.subr.bf16.mxu0 0
        %1767 = vmatpush1.bf16.msra.mxu0 0
        %1768 = vmatprep.mubr.bf16.mxu0 0
        %1769 = vmatmul.mubr.bf16.gmra.mrb[0].mxu0 %v1734
        %v1770 = vpop.f32.mrb[0].mxu0
        %v1771 = vadd.f32 0.0, %v1770
        %v1772 = vpop.f32.mrb[0].mxu0
        %v1773 = vpop.f32.mrb[0].mxu0
        %v1774 = vadd.f32 0.0, %v1773
        %v1775 = vpop.f32.mrb[0].mxu0
        %1776 = vdwg.mxu0
        %v1777 = vpack.c.bf16 %v1774, %v1771
        %v1780 = vunpack.c.l.b16 %v1305
        %v1781 = vunpack.c.l.b16 %v1306
        %v1782 = vpack.c.b16 %v1781, %v1780
        %v1785 = vsel %vm1316, %v1777, 0
        %1787 = vmatprep.subr.bf16.mxu0 0
        %1788 = vmatpush1.bf16.msra.mxu0 %v1782
        %1789 = vmatprep.subr.bf16.mxu0 0
        %1790 = vmatpush1.bf16.msra.mxu0 0
        %1791 = vmatprep.subr.bf16.mxu0 0
        %1792 = vmatpush1.bf16.msra.mxu0 0
        %1793 = vmatprep.subr.bf16.mxu0 0
        %1794 = vmatpush1.bf16.msra.mxu0 0
        %1795 = vmatprep.subr.bf16.mxu0 0
        %1796 = vmatpush1.bf16.msra.mxu0 0
        %1797 = vmatprep.subr.bf16.mxu0 0
        %1798 = vmatpush1.bf16.msra.mxu0 0
        %1799 = vmatprep.subr.bf16.mxu0 0
        %1800 = vmatpush1.bf16.msra.mxu0 0
        %1801 = vmatprep.subr.bf16.mxu0 0
        %1802 = vmatpush1.bf16.msra.mxu0 0
        %1803 = vmatprep.subr.bf16.mxu0 0
        %1804 = vmatpush1.bf16.msra.mxu0 0
        %1805 = vmatprep.subr.bf16.mxu0 0
        %1806 = vmatpush1.bf16.msra.mxu0 0
        %1807 = vmatprep.subr.bf16.mxu0 0
        %1808 = vmatpush1.bf16.msra.mxu0 0
        %1809 = vmatprep.subr.bf16.mxu0 0
        %1810 = vmatpush1.bf16.msra.mxu0 0
        %1811 = vmatprep.subr.bf16.mxu0 0
        %1812 = vmatpush1.bf16.msra.mxu0 0
        %1813 = vmatprep.subr.bf16.mxu0 0
        %1814 = vmatpush1.bf16.msra.mxu0 0
        %1815 = vmatprep.subr.bf16.mxu0 0
        %1816 = vmatpush1.bf16.msra.mxu0 0
        %1817 = vmatprep.subr.bf16.mxu0 0
        %1818 = vmatpush1.bf16.msra.mxu0 0
        %1819 = vmatprep.mubr.bf16.mxu0 0
        %1820 = vmatmul.mubr.bf16.gmra.mrb[0].mxu0 %v1785
        %v1821 = vpop.f32.mrb[0].mxu0
        %v1822 = vadd.f32 0.0, %v1821
        %v1823 = vpop.f32.mrb[0].mxu0
        %v1824 = vpop.f32.mrb[0].mxu0
        %v1825 = vadd.f32 0.0, %v1824
        %v1826 = vpop.f32.mrb[0].mxu0
        %1827 = vdwg.mxu0
        %v1828 = vadd.f32 %v1650, %v1822
        %v1829 = vadd.f32 %v1653, %v1825
        %1830 = vrot.lane.b32.xlu0 %v1310, 80
        %v1831 = vpop.permute.xlu0 %1830
        %1832 = vrot.lane.b32.xlu0 %v1311, 16
        %v1833 = vpop.permute.xlu0 %1832
        %v1835 = vsel %vm1316, %v1831, 0
        %v1838 = vsel %vm1316, %v1833, 0
        %1840 = vmatprep.subr.bf16.mxu0 0
        %1841 = vmatpush1.bf16.xpose.msra.mxu0 %v1838
        %1842 = vmatprep.subr.bf16.mxu0 0
        %1843 = vmatpush1.bf16.xpose.msra.mxu0 0
        %1844 = vmatprep.subr.bf16.mxu0 0
        %1845 = vmatpush1.bf16.xpose.msra.mxu0 0
        %1846 = vmatprep.subr.bf16.mxu0 0
        %1847 = vmatpush1.bf16.xpose.msra.mxu0 0
        %1848 = vmatprep.subr.bf16.mxu0 0
        %1849 = vmatpush1.bf16.xpose.msra.mxu0 0
        %1850 = vmatprep.subr.bf16.mxu0 0
        %1851 = vmatpush1.bf16.xpose.msra.mxu0 0
        %1852 = vmatprep.subr.bf16.mxu0 0
        %1853 = vmatpush1.bf16.xpose.msra.mxu0 0
        %1854 = vmatprep.subr.bf16.mxu0 0
        %1855 = vmatpush1.bf16.xpose.msra.mxu0 0
        %1856 = vmatprep.subr.bf16.mxu0 0
        %1857 = vmatpush1.bf16.xpose.msra.mxu0 0
        %1858 = vmatprep.subr.bf16.mxu0 0
        %1859 = vmatpush1.bf16.xpose.msra.mxu0 0
        %1860 = vmatprep.subr.bf16.mxu0 0
        %1861 = vmatpush1.bf16.xpose.msra.mxu0 0
        %1862 = vmatprep.subr.bf16.mxu0 0
        %1863 = vmatpush1.bf16.xpose.msra.mxu0 0
        %1864 = vmatprep.subr.bf16.mxu0 0
        %1865 = vmatpush1.bf16.xpose.msra.mxu0 0
        %1866 = vmatprep.subr.bf16.mxu0 0
        %1867 = vmatpush1.bf16.xpose.msra.mxu0 0
        %1868 = vmatprep.subr.bf16.mxu0 0
        %1869 = vmatpush1.bf16.xpose.msra.mxu0 0
        %1870 = vmatprep.subr.bf16.mxu0 0
        %1871 = vmatpush1.bf16.xpose.msra.mxu0 0
        %1872 = vmatprep.mubr.bf16.mxu0 0
        %1873 = vmatmul.mubr.bf16.gmra.mrb[0].mxu0 %v1835
        %v1874 = vpop.f32.mrb[0].mxu0
        %v1875 = vadd.f32 0.0, %v1874
        %v1876 = vpop.f32.mrb[0].mxu0
        %v1877 = vpop.f32.mrb[0].mxu0
        %v1878 = vadd.f32 0.0, %v1877
        %v1879 = vpop.f32.mrb[0].mxu0
        %1880 = vdwg.mxu0
        %v1881 = vsel %vm1316, %v1875, -inf
        %1882 = vmax.xlane.f32.xlu0 %v1881
        %v1883 = vpop.xlane.xlu0 %1882
        %v1884 = vsel %vm1316, %v1878, -inf
        %1885 = vmax.xlane.f32.xlu0 %v1884
        %v1886 = vpop.xlane.xlu0 %1885
        %v1887 = vsub.f32 %v1875, %v1883
        %v1888 = vsub.f32 %v1878, %v1886
        %v1889 = vmul.f32 %v1887, 1.442695
        %v1890 = vpow.pop %v1889
        %v1891 = vmul.f32 %v1888, 1.442695
        %v1892 = vpow.pop %v1891
        %v1893 = vsel %vm1316, %v1890, 0.0
        %1894 = vadd.xlane.f32.xlu0 %v1893
        %v1895 = vpop.xlane.xlu0 %1894
        %v1896 = vsel %vm1316, %v1892, 0.0
        %1897 = vadd.xlane.f32.xlu0 %v1896
        %v1898 = vpop.xlane.xlu0 %1897
        %v1899 = vrcp.pop %v1895
        %v1900 = vrcp.pop %v1898
        %v1901 = vmul.f32 %v1890, %v1899
        %v1902 = vmul.f32 %v1892, %v1900
        %v1903 = vpack.c.bf16 %v1902, %v1901
        %1904 = vrot.lane.b32.xlu0 %v1312, 80
        %v1905 = vpop.permute.xlu0 %1904
        %v1908 = vsel %vm1316, %v1903, 0
        %1910 = vmatprep.subr.bf16.mxu0 0
        %1911 = vmatpush1.bf16.msra.mxu0 %v1905
        %1912 = vmatprep.subr.bf16.mxu0 0
        %1913 = vmatpush1.bf16.msra.mxu0 0
        %1914 = vmatprep.subr.bf16.mxu0 0
        %1915 = vmatpush1.bf16.msra.mxu0 0
        %1916 = vmatprep.subr.bf16.mxu0 0
        %1917 = vmatpush1.bf16.msra.mxu0 0
        %1918 = vmatprep.subr.bf16.mxu0 0
        %1919 = vmatpush1.bf16.msra.mxu0 0
        %1920 = vmatprep.subr.bf16.mxu0 0
        %1921 = vmatpush1.bf16.msra.mxu0 0
        %1922 = vmatprep.subr.bf16.mxu0 0
        %1923 = vmatpush1.bf16.msra.mxu0 0
        %1924 = vmatprep.subr.bf16.mxu0 0
        %1925 = vmatpush1.bf16.msra.mxu0 0
        %1926 = vmatprep.subr.bf16.mxu0 0
        %1927 = vmatpush1.bf16.msra.mxu0 0
        %1928 = vmatprep.subr.bf16.mxu0 0
        %1929 = vmatpush1.bf16.msra.mxu0 0
        %1930 = vmatprep.subr.bf16.mxu0 0
        %1931 = vmatpush1.bf16.msra.mxu0 0
        %1932 = vmatprep.subr.bf16.mxu0 0
        %1933 = vmatpush1.bf16.msra.mxu0 0
        %1934 = vmatprep.subr.bf16.mxu0 0
        %1935 = vmatpush1.bf16.msra.mxu0 0
        %1936 = vmatprep.subr.bf16.mxu0 0
        %1937 = vmatpush1.bf16.msra.mxu0 0
        %1938 = vmatprep.subr.bf16.mxu0 0
        %1939 = vmatpush1.bf16.msra.mxu0 0
        %1940 = vmatprep.subr.bf16.mxu0 0
        %1941 = vmatpush1.bf16.msra.mxu0 0
        %1942 = vmatprep.mubr.bf16.mxu0 0
        %1943 = vmatmul.mubr.bf16.gmra.mrb[0].mxu0 %v1908
        %v1944 = vpop.f32.mrb[0].mxu0
        %v1945 = vadd.f32 0.0, %v1944
        %v1946 = vpop.f32.mrb[0].mxu0
        %v1947 = vpop.f32.mrb[0].mxu0
        %v1948 = vadd.f32 0.0, %v1947
        %v1949 = vpop.f32.mrb[0].mxu0
        %1950 = vdwg.mxu0
        %v1951 = vpack.c.bf16 %v1948, %v1945
        %v1954 = vunpack.c.l.b16 %v1307
        %v1955 = vunpack.c.l.b16 %v1308
        %v1956 = vpack.c.b16 %v1955, %v1954
        %v1959 = vsel %vm1316, %v1951, 0
        %1961 = vmatprep.subr.bf16.mxu0 0
        %1962 = vmatpush1.bf16.msra.mxu0 %v1956
        %1963 = vmatprep.subr.bf16.mxu0 0
        %1964 = vmatpush1.bf16.msra.mxu0 0
        %1965 = vmatprep.subr.bf16.mxu0 0
        %1966 = vmatpush1.bf16.msra.mxu0 0
        %1967 = vmatprep.subr.bf16.mxu0 0
        %1968 = vmatpush1.bf16.msra.mxu0 0
        %1969 = vmatprep.subr.bf16.mxu0 0
        %1970 = vmatpush1.bf16.msra.mxu0 0
        %1971 = vmatprep.subr.bf16.mxu0 0
        %1972 = vmatpush1.bf16.msra.mxu0 0
        %1973 = vmatprep.subr.bf16.mxu0 0
        %1974 = vmatpush1.bf16.msra.mxu0 0
        %1975 = vmatprep.subr.bf16.mxu0 0
        %1976 = vmatpush1.bf16.msra.mxu0 0
        %1977 = vmatprep.subr.bf16.mxu0 0
        %1978 = vmatpush1.bf16.msra.mxu0 0
        %1979 = vmatprep.subr.bf16.mxu0 0
        %1980 = vmatpush1.bf16.msra.mxu0 0
        %1981 = vmatprep.subr.bf16.mxu0 0
        %1982 = vmatpush1.bf16.msra.mxu0 0
        %1983 = vmatprep.subr.bf16.mxu0 0
        %1984 = vmatpush1.bf16.msra.mxu0 0
        %1985 = vmatprep.subr.bf16.mxu0 0
        %1986 = vmatpush1.bf16.msra.mxu0 0
        %1987 = vmatprep.subr.bf16.mxu0 0
        %1988 = vmatpush1.bf16.msra.mxu0 0
        %1989 = vmatprep.subr.bf16.mxu0 0
        %1990 = vmatpush1.bf16.msra.mxu0 0
        %1991 = vmatprep.subr.bf16.mxu0 0
        %1992 = vmatpush1.bf16.msra.mxu0 0
        %1993 = vmatprep.mubr.bf16.mxu0 0
        %1994 = vmatmul.mubr.bf16.gmra.mrb[0].mxu0 %v1959
        %v1995 = vpop.f32.mrb[0].mxu0
        %v1996 = vadd.f32 0.0, %v1995
        %v1997 = vpop.f32.mrb[0].mxu0
        %v1998 = vpop.f32.mrb[0].mxu0
        %v1999 = vadd.f32 0.0, %v1998
        %v2000 = vpop.f32.mrb[0].mxu0
        %2001 = vdwg.mxu0
        %v2002 = vadd.f32 %v1828, %v1996
        %v2003 = vadd.f32 %v1829, %v1999
        %v2005 = vlaneseq
        %v2006 = vshrl.u32 %v2005, 7
        %v2007 = vsub.s32 0, %v2006
        %v2008 = vrot.slane %v1309, %v2007
        %v2010 = vadd.f32 %v2002, %v2008
        %v2011 = vadd.f32 %v2003, %v2008
        %v2012 = vlaneseq
        %v2013 = vshrl.u32 %v2012, 7
        %v2014 = vsub.s32 0, %v2013
        %v2015 = vrot.slane %v1061, %v2014
        %v2016 = vmul.f32 %v2015, %v2010
        %v2017 = vmul.f32 %v2015, %v2011
        %v2018 = vadd.f32 %v1146, %v2016
        %v2019 = vadd.f32 %v1147, %v2017
        %v2020 = vld [vmem:[%s730] sm:$0xff]
        %v2021 = vld [vmem:[%s730 + $0x8] sm:$0xff]
        %v2022 = vsel %vm1020, %v2018, 0.0
        %2023 = vadd.xlane.f32.xlu0 %v2022
        %v2024 = vpop.xlane.xlu0 %2023
        %v2025 = vsel %vm1020, %v2019, 0.0
        %2026 = vadd.xlane.f32.xlu0 %v2025
        %v2027 = vpop.xlane.xlu0 %2026
        %v2028 = vmul.f32 %v2024, %v1154
        %v2029 = vmul.f32 %v2027, %v1154
        %v2030 = vsub.f32 %v2018, %v2028
        %v2031 = vsub.f32 %v2019, %v2029
        %v2032 = vmul.f32 %v2030, %v2030
        %v2033 = vmul.f32 %v2031, %v2031
        %v2034 = vsel %vm1020, %v2032, 0.0
        %2035 = vadd.xlane.f32.xlu0 %v2034
        %v2036 = vpop.xlane.xlu0 %2035
        %v2037 = vsel %vm1020, %v2033, 0.0
        %2038 = vadd.xlane.f32.xlu0 %v2037
        %v2039 = vpop.xlane.xlu0 %2038
        %v2040 = vmul.f32 %v2036, %v1154
        %v2041 = vmul.f32 %v2039, %v1154
        %v2042 = vadd.f32 %v2040, 1e-06
        %v2043 = vadd.f32 %v2041, 1e-06
        %v2044 = vrsqrt.pop %v2042
        %v2045 = vrsqrt.pop %v2043
        %v2046 = vmul.f32 %v2030, %v2044
        %v2047 = vmul.f32 %v2031, %v2045
        %v2048 = vadd.f32 %v1100, 1.0
        %v2049 = vlaneseq
        %v2050 = vshrl.u32 %v2049, 7
        %v2051 = vsub.s32 0, %v2050
        %v2052 = vrot.slane %v2048, %v2051
        %v2053 = vmul.f32 %v2046, %v2052
        %v2054 = vmul.f32 %v2047, %v2052
        %2056 = vrot.lane.b32.xlu0 %v2015, 64
        %v2057 = vpop.permute.xlu0 %2056
        %v2059 = vadd.f32 %v2053, %v2057
        %v2060 = vadd.f32 %v2054, %v2057
        %v2061 = vsel %vm1020, %v2059, 0.0
        %2062 = vadd.xlane.f32.xlu0 %v2061
        %v2063 = vpop.xlane.xlu0 %2062
        %v2064 = vsel %vm1020, %v2060, 0.0
        %2065 = vadd.xlane.f32.xlu0 %v2064
        %v2066 = vpop.xlane.xlu0 %2065
        %v2067 = vmul.f32 %v2063, %v1154
        %v2068 = vmul.f32 %v2066, %v1154
        %v2069 = vsub.f32 %v2059, %v2067
        %v2070 = vsub.f32 %v2060, %v2068
        %v2071 = vmul.f32 %v2069, %v2069
        %v2072 = vmul.f32 %v2070, %v2070
        %v2073 = vsel %vm1020, %v2071, 0.0
        %2074 = vadd.xlane.f32.xlu0 %v2073
        %v2075 = vpop.xlane.xlu0 %2074
        %v2076 = vsel %vm1020, %v2072, 0.0
        %2077 = vadd.xlane.f32.xlu0 %v2076
        %v2078 = vpop.xlane.xlu0 %2077
        %v2079 = vmul.f32 %v2075, %v1154
        %v2080 = vmul.f32 %v2078, %v1154
        %v2081 = vadd.f32 %v2079, 1e-06
        %v2082 = vadd.f32 %v2080, 1e-06
        %v2083 = vrsqrt.pop %v2081
        %v2084 = vrsqrt.pop %v2082
        %v2085 = vmul.f32 %v2069, %v2083
        %v2086 = vmul.f32 %v2070, %v2084
        %v2087 = vld [vmem:[#allocation11] sm:$0x1]
        %v2089 = vlaneseq
        %v2090 = vshrl.u32 %v2089, 7
        %v2091 = vsub.s32 0, %v2090
        %v2092 = vrot.slane %v2087, %v2091
        %v2094 = vmul.f32 %v2085, %v2092
        %v2095 = vmul.f32 %v2086, %v2092
        %v2096 = vld [vmem:[#allocation13] sm:$0x1]
        %v2098 = vlaneseq
        %v2099 = vshrl.u32 %v2098, 7
        %v2100 = vsub.s32 0, %v2099
        %v2101 = vrot.slane %v2096, %v2100
        %v2103 = vadd.f32 %v2094, %v2101
        %v2104 = vadd.f32 %v2095, %v2101
        %v2105 = vmul.f32 %v2103, 0.25
        %v2106 = vmul.f32 %v2104, 0.25
        %v2107 = vpack.c.bf16 %v2021, %v2020
        %v2108 = vld [vmem:[#allocation14] sm:$0xf]
        %v2109 = vld [vmem:[#allocation14 + $0x4] sm:$0xf]
        %v2110 = vld [vmem:[#allocation14 + $0x8] sm:$0xf]
        %v2111 = vld [vmem:[#allocation14 + $0xc] sm:$0xf]
        %v2112 = vld [vmem:[#allocation14 + $0x10] sm:$0xf]
        %v2113 = vld [vmem:[#allocation14 + $0x14] sm:$0xf]
        %v2114 = vld [vmem:[#allocation14 + $0x18] sm:$0xf]
        %v2115 = vld [vmem:[#allocation14 + $0x1c] sm:$0xf]
        %v2124 = vunpack.c.l.b16 %v2108
        %v2125 = vunpack.c.l.b16 %v2109
        %v2126 = vunpack.c.l.b16 %v2110
        %v2127 = vunpack.c.l.b16 %v2111
        %v2128 = vunpack.c.l.b16 %v2112
        %v2129 = vunpack.c.l.b16 %v2113
        %v2130 = vunpack.c.l.b16 %v2114
        %v2131 = vunpack.c.l.b16 %v2115
        %v2132 = vpack.c.b16 %v2125, %v2124
        %v2133 = vpack.c.b16 %v2127, %v2126
        %v2134 = vpack.c.b16 %v2129, %v2128
        %v2135 = vpack.c.b16 %v2131, %v2130
        %v2141 = vsel %vm1020, %v2107, 0
        %2143 = vmatprep.subr.bf16.mxu0 0
        %2144 = vmatpush1.bf16.msra.mxu0 %v2132
        %2145 = vmatprep.subr.bf16.mxu0 0
        %2146 = vmatpush1.bf16.msra.mxu0 %v2133
        %2147 = vmatprep.subr.bf16.mxu0 0
        %2148 = vmatpush1.bf16.msra.mxu0 %v2134
        %2149 = vmatprep.subr.bf16.mxu0 0
        %2150 = vmatpush1.bf16.msra.mxu0 %v2135
        %2151 = vmatprep.subr.bf16.mxu0 0
        %2152 = vmatpush1.bf16.msra.mxu0 0
        %2153 = vmatprep.subr.bf16.mxu0 0
        %2154 = vmatpush1.bf16.msra.mxu0 0
        %2155 = vmatprep.subr.bf16.mxu0 0
        %2156 = vmatpush1.bf16.msra.mxu0 0
        %2157 = vmatprep.subr.bf16.mxu0 0
        %2158 = vmatpush1.bf16.msra.mxu0 0
        %2159 = vmatprep.subr.bf16.mxu0 0
        %2160 = vmatpush1.bf16.msra.mxu0 0
        %2161 = vmatprep.subr.bf16.mxu0 0
        %2162 = vmatpush1.bf16.msra.mxu0 0
        %2163 = vmatprep.subr.bf16.mxu0 0
        %2164 = vmatpush1.bf16.msra.mxu0 0
        %2165 = vmatprep.subr.bf16.mxu0 0
        %2166 = vmatpush1.bf16.msra.mxu0 0
        %2167 = vmatprep.subr.bf16.mxu0 0
        %2168 = vmatpush1.bf16.msra.mxu0 0
        %2169 = vmatprep.subr.bf16.mxu0 0
        %2170 = vmatpush1.bf16.msra.mxu0 0
        %2171 = vmatprep.subr.bf16.mxu0 0
        %2172 = vmatpush1.bf16.msra.mxu0 0
        %2173 = vmatprep.subr.bf16.mxu0 0
        %2174 = vmatpush1.bf16.msra.mxu0 0
        %2175 = vmatprep.mubr.bf16.mxu0 0
        %2176 = vmatmul.mubr.bf16.gmra.mrb[0].mxu0 %v2141
        %v2177 = vpop.f32.mrb[0].mxu0
        %v2178 = vadd.f32 0.0, %v2177
        %v2179 = vpop.f32.mrb[0].mxu0
        %v2180 = vpop.f32.mrb[0].mxu0
        %v2181 = vadd.f32 0.0, %v2180
        %v2182 = vpop.f32.mrb[0].mxu0
        %2183 = vdwg.mxu0
        %v2184 = vsel %vm1020, %v2178, 0.0
        %2185 = vadd.xlane.f32.xlu0 %v2184
        %v2186 = vpop.xlane.xlu0 %2185
        %v2187 = vsel %vm1020, %v2181, 0.0
        %2188 = vadd.xlane.f32.xlu0 %v2187
        %v2189 = vpop.xlane.xlu0 %2188
        %v2190 = vmul.f32 %v2186, %v1154
        %v2191 = vmul.f32 %v2189, %v1154
        %v2192 = vsub.f32 %v2178, %v2190
        %v2193 = vsub.f32 %v2181, %v2191
        %v2194 = vmul.f32 %v2192, %v2192
        %v2195 = vmul.f32 %v2193, %v2193
        %v2196 = vsel %vm1020, %v2194, 0.0
        %2197 = vadd.xlane.f32.xlu0 %v2196
        %v2198 = vpop.xlane.xlu0 %2197
        %v2199 = vsel %vm1020, %v2195, 0.0
        %2200 = vadd.xlane.f32.xlu0 %v2199
        %v2201 = vpop.xlane.xlu0 %2200
        %v2202 = vmul.f32 %v2198, %v1154
        %v2203 = vmul.f32 %v2201, %v1154
        %v2204 = vadd.f32 %v2202, 1e-06
        %v2205 = vadd.f32 %v2203, 1e-06
        %v2206 = vrsqrt.pop %v2204
        %v2207 = vrsqrt.pop %v2205
        %v2208 = vmul.f32 %v2192, %v2206
        %v2209 = vmul.f32 %v2193, %v2207
        %v2210 = vld [vmem:[#allocation16] sm:$0x1]
        %v2212 = vlaneseq
        %v2213 = vshrl.u32 %v2212, 7
        %v2214 = vsub.s32 0, %v2213
        %v2215 = vrot.slane %v2210, %v2214
        %v2217 = vmul.f32 %v2208, %v2215
        %v2218 = vmul.f32 %v2209, %v2215
        %v2219 = vld [vmem:[#allocation17] sm:$0x1]
        %v2221 = vlaneseq
        %v2222 = vshrl.u32 %v2221, 7
        %v2223 = vsub.s32 0, %v2222
        %v2224 = vrot.slane %v2219, %v2223
        %v2226 = vadd.f32 %v2217, %v2224
        %v2227 = vadd.f32 %v2218, %v2224
        %v2228 = vld [vmem:[#allocation19] sm:$0xf]
        %v2229 = vld [vmem:[#allocation19 + $0x4] sm:$0xf]
        %v2230 = vld [vmem:[#allocation19 + $0x8] sm:$0xf]
        %v2231 = vld [vmem:[#allocation19 + $0xc] sm:$0xf]
        %v2232 = vld [vmem:[#allocation19 + $0x10] sm:$0xf]
        %v2233 = vld [vmem:[#allocation19 + $0x14] sm:$0xf]
        %v2234 = vld [vmem:[#allocation19 + $0x18] sm:$0xf]
        %v2235 = vld [vmem:[#allocation19 + $0x1c] sm:$0xf]
        %v2236 = vld [vmem:[#allocation20] sm:$0x1]
        %v2237 = vpack.c.bf16 %v2106, %v2105
        %v2238 = vpack.c.bf16 %v2227, %v2226
        %v2239 = vpack.c.bf16 %v2181, %v2178
        %v2241 = vsel %vm1316, %v2237, 0
        %v2244 = vsel %vm1316, %v2238, 0
        %2246 = vmatprep.subr.bf16.mxu0 0
        %2247 = vmatpush1.bf16.xpose.msra.mxu0 %v2244
        %2248 = vmatprep.subr.bf16.mxu0 0
        %2249 = vmatpush1.bf16.xpose.msra.mxu0 0
        %2250 = vmatprep.subr.bf16.mxu0 0
        %2251 = vmatpush1.bf16.xpose.msra.mxu0 0
        %2252 = vmatprep.subr.bf16.mxu0 0
        %2253 = vmatpush1.bf16.xpose.msra.mxu0 0
        %2254 = vmatprep.subr.bf16.mxu0 0
        %2255 = vmatpush1.bf16.xpose.msra.mxu0 0
        %2256 = vmatprep.subr.bf16.mxu0 0
        %2257 = vmatpush1.bf16.xpose.msra.mxu0 0
        %2258 = vmatprep.subr.bf16.mxu0 0
        %2259 = vmatpush1.bf16.xpose.msra.mxu0 0
        %2260 = vmatprep.subr.bf16.mxu0 0
        %2261 = vmatpush1.bf16.xpose.msra.mxu0 0
        %2262 = vmatprep.subr.bf16.mxu0 0
        %2263 = vmatpush1.bf16.xpose.msra.mxu0 0
        %2264 = vmatprep.subr.bf16.mxu0 0
        %2265 = vmatpush1.bf16.xpose.msra.mxu0 0
        %2266 = vmatprep.subr.bf16.mxu0 0
        %2267 = vmatpush1.bf16.xpose.msra.mxu0 0
        %2268 = vmatprep.subr.bf16.mxu0 0
        %2269 = vmatpush1.bf16.xpose.msra.mxu0 0
        %2270 = vmatprep.subr.bf16.mxu0 0
        %2271 = vmatpush1.bf16.xpose.msra.mxu0 0
        %2272 = vmatprep.subr.bf16.mxu0 0
        %2273 = vmatpush1.bf16.xpose.msra.mxu0 0
        %2274 = vmatprep.subr.bf16.mxu0 0
        %2275 = vmatpush1.bf16.xpose.msra.mxu0 0
        %2276 = vmatprep.subr.bf16.mxu0 0
        %2277 = vmatpush1.bf16.xpose.msra.mxu0 0
        %2278 = vmatprep.mubr.bf16.mxu0 0
        %2279 = vmatmul.mubr.bf16.gmra.mrb[0].mxu0 %v2241
        %v2280 = vpop.f32.mrb[0].mxu0
        %v2281 = vadd.f32 0.0, %v2280
        %v2282 = vpop.f32.mrb[0].mxu0
        %v2283 = vpop.f32.mrb[0].mxu0
        %v2284 = vadd.f32 0.0, %v2283
        %v2285 = vpop.f32.mrb[0].mxu0
        %2286 = vdwg.mxu0
        %v2287 = vsel %vm1316, %v2281, -inf
        %2288 = vmax.xlane.f32.xlu0 %v2287
        %v2289 = vpop.xlane.xlu0 %2288
        %v2290 = vsel %vm1316, %v2284, -inf
        %2291 = vmax.xlane.f32.xlu0 %v2290
        %v2292 = vpop.xlane.xlu0 %2291
        %v2293 = vsub.f32 %v2281, %v2289
        %v2294 = vsub.f32 %v2284, %v2292
        %v2295 = vmul.f32 %v2293, 1.442695
        %v2296 = vpow.pop %v2295
        %v2297 = vmul.f32 %v2294, 1.442695
        %v2298 = vpow.pop %v2297
        %v2299 = vsel %vm1316, %v2296, 0.0
        %2300 = vadd.xlane.f32.xlu0 %v2299
        %v2301 = vpop.xlane.xlu0 %2300
        %v2302 = vsel %vm1316, %v2298, 0.0
        %2303 = vadd.xlane.f32.xlu0 %v2302
        %v2304 = vpop.xlane.xlu0 %2303
        %v2305 = vrcp.pop %v2301
        %v2306 = vrcp.pop %v2304
        %v2307 = vmul.f32 %v2296, %v2305
        %v2308 = vmul.f32 %v2298, %v2306
        %v2309 = vpack.c.bf16 %v2308, %v2307
        %2311 = vrot.lane.b32.xlu0 %v2239, 64
        %v2312 = vpop.permute.xlu0 %2311
        %v2315 = vsel %vm1316, %v2309, 0
        %2317 = vmatprep.subr.bf16.mxu0 0
        %2318 = vmatpush1.bf16.msra.mxu0 %v2312
        %2319 = vmatprep.subr.bf16.mxu0 0
        %2320 = vmatpush1.bf16.msra.mxu0 0
        %2321 = vmatprep.subr.bf16.mxu0 0
        %2322 = vmatpush1.bf16.msra.mxu0 0
        %2323 = vmatprep.subr.bf16.mxu0 0
        %2324 = vmatpush1.bf16.msra.mxu0 0
        %2325 = vmatprep.subr.bf16.mxu0 0
        %2326 = vmatpush1.bf16.msra.mxu0 0
        %2327 = vmatprep.subr.bf16.mxu0 0
        %2328 = vmatpush1.bf16.msra.mxu0 0
        %2329 = vmatprep.subr.bf16.mxu0 0
        %2330 = vmatpush1.bf16.msra.mxu0 0
        %2331 = vmatprep.subr.bf16.mxu0 0
        %2332 = vmatpush1.bf16.msra.mxu0 0
        %2333 = vmatprep.subr.bf16.mxu0 0
        %2334 = vmatpush1.bf16.msra.mxu0 0
        %2335 = vmatprep.subr.bf16.mxu0 0
        %2336 = vmatpush1.bf16.msra.mxu0 0
        %2337 = vmatprep.subr.bf16.mxu0 0
        %2338 = vmatpush1.bf16.msra.mxu0 0
        %2339 = vmatprep.subr.bf16.mxu0 0
        %2340 = vmatpush1.bf16.msra.mxu0 0
        %2341 = vmatprep.subr.bf16.mxu0 0
        %2342 = vmatpush1.bf16.msra.mxu0 0
        %2343 = vmatprep.subr.bf16.mxu0 0
        %2344 = vmatpush1.bf16.msra.mxu0 0
        %2345 = vmatprep.subr.bf16.mxu0 0
        %2346 = vmatpush1.bf16.msra.mxu0 0
        %2347 = vmatprep.subr.bf16.mxu0 0
        %2348 = vmatpush1.bf16.msra.mxu0 0
        %2349 = vmatprep.mubr.bf16.mxu0 0
        %2350 = vmatmul.mubr.bf16.gmra.mrb[0].mxu0 %v2315
        %v2351 = vpop.f32.mrb[0].mxu0
        %v2352 = vadd.f32 0.0, %v2351
        %v2353 = vpop.f32.mrb[0].mxu0
        %v2354 = vpop.f32.mrb[0].mxu0
        %v2355 = vadd.f32 0.0, %v2354
        %v2356 = vpop.f32.mrb[0].mxu0
        %2357 = vdwg.mxu0
        %v2358 = vpack.c.bf16 %v2355, %v2352
        %2360 = vrot.lane.b32.xlu0 %v2237, 112
        %v2361 = vpop.permute.xlu0 %2360
        %2363 = vrot.lane.b32.xlu0 %v2238, 112
        %v2364 = vpop.permute.xlu0 %2363
        %v2366 = vsel %vm1316, %v2361, 0
        %v2369 = vsel %vm1316, %v2364, 0
        %2371 = vmatprep.subr.bf16.mxu0 0
        %2372 = vmatpush1.bf16.xpose.msra.mxu0 %v2369
        %2373 = vmatprep.subr.bf16.mxu0 0
        %2374 = vmatpush1.bf16.xpose.msra.mxu0 0
        %2375 = vmatprep.subr.bf16.mxu0 0
        %2376 = vmatpush1.bf16.xpose.msra.mxu0 0
        %2377 = vmatprep.subr.bf16.mxu0 0
        %2378 = vmatpush1.bf16.xpose.msra.mxu0 0
        %2379 = vmatprep.subr.bf16.mxu0 0
        %2380 = vmatpush1.bf16.xpose.msra.mxu0 0
        %2381 = vmatprep.subr.bf16.mxu0 0
        %2382 = vmatpush1.bf16.xpose.msra.mxu0 0
        %2383 = vmatprep.subr.bf16.mxu0 0
        %2384 = vmatpush1.bf16.xpose.msra.mxu0 0
        %2385 = vmatprep.subr.bf16.mxu0 0
        %2386 = vmatpush1.bf16.xpose.msra.mxu0 0
        %2387 = vmatprep.subr.bf16.mxu0 0
        %2388 = vmatpush1.bf16.xpose.msra.mxu0 0
        %2389 = vmatprep.subr.bf16.mxu0 0
        %2390 = vmatpush1.bf16.xpose.msra.mxu0 0
        %2391 = vmatprep.subr.bf16.mxu0 0
        %2392 = vmatpush1.bf16.xpose.msra.mxu0 0
        %2393 = vmatprep.subr.bf16.mxu0 0
        %2394 = vmatpush1.bf16.xpose.msra.mxu0 0
        %2395 = vmatprep.subr.bf16.mxu0 0
        %2396 = vmatpush1.bf16.xpose.msra.mxu0 0
        %2397 = vmatprep.subr.bf16.mxu0 0
        %2398 = vmatpush1.bf16.xpose.msra.mxu0 0
        %2399 = vmatprep.subr.bf16.mxu0 0
        %2400 = vmatpush1.bf16.xpose.msra.mxu0 0
        %2401 = vmatprep.subr.bf16.mxu0 0
        %2402 = vmatpush1.bf16.xpose.msra.mxu0 0
        %2403 = vmatprep.mubr.bf16.mxu0 0
        %2404 = vmatmul.mubr.bf16.gmra.mrb[0].mxu0 %v2366
        %v2405 = vpop.f32.mrb[0].mxu0
        %v2406 = vadd.f32 0.0, %v2405
        %v2407 = vpop.f32.mrb[0].mxu0
        %v2408 = vpop.f32.mrb[0].mxu0
        %v2409 = vadd.f32 0.0, %v2408
        %v2410 = vpop.f32.mrb[0].mxu0
        %2411 = vdwg.mxu0
        %v2412 = vsel %vm1316, %v2406, -inf
        %2413 = vmax.xlane.f32.xlu0 %v2412
        %v2414 = vpop.xlane.xlu0 %2413
        %v2415 = vsel %vm1316, %v2409, -inf
        %2416 = vmax.xlane.f32.xlu0 %v2415
        %v2417 = vpop.xlane.xlu0 %2416
        %v2418 = vsub.f32 %v2406, %v2414
        %v2419 = vsub.f32 %v2409, %v2417
        %v2420 = vmul.f32 %v2418, 1.442695
        %v2421 = vpow.pop %v2420
        %v2422 = vmul.f32 %v2419, 1.442695
        %v2423 = vpow.pop %v2422
        %v2424 = vsel %vm1316, %v2421, 0.0
        %2425 = vadd.xlane.f32.xlu0 %v2424
        %v2426 = vpop.xlane.xlu0 %2425
        %v2427 = vsel %vm1316, %v2423, 0.0
        %2428 = vadd.xlane.f32.xlu0 %v2427
        %v2429 = vpop.xlane.xlu0 %2428
        %v2430 = vrcp.pop %v2426
        %v2431 = vrcp.pop %v2429
        %v2432 = vmul.f32 %v2421, %v2430
        %v2433 = vmul.f32 %v2423, %v2431
        %v2434 = vpack.c.bf16 %v2433, %v2432
        %2435 = vrot.lane.b32.xlu0 %v2239, 48
        %v2436 = vpop.permute.xlu0 %2435
        %v2439 = vsel %vm1316, %v2434, 0
        %2441 = vmatprep.subr.bf16.mxu0 0
        %2442 = vmatpush1.bf16.msra.mxu0 %v2436
        %2443 = vmatprep.subr.bf16.mxu0 0
        %2444 = vmatpush1.bf16.msra.mxu0 0
        %2445 = vmatprep.subr.bf16.mxu0 0
        %2446 = vmatpush1.bf16.msra.mxu0 0
        %2447 = vmatprep.subr.bf16.mxu0 0
        %2448 = vmatpush1.bf16.msra.mxu0 0
        %2449 = vmatprep.subr.bf16.mxu0 0
        %2450 = vmatpush1.bf16.msra.mxu0 0
        %2451 = vmatprep.subr.bf16.mxu0 0
        %2452 = vmatpush1.bf16.msra.mxu0 0
        %2453 = vmatprep.subr.bf16.mxu0 0
        %2454 = vmatpush1.bf16.msra.mxu0 0
        %2455 = vmatprep.subr.bf16.mxu0 0
        %2456 = vmatpush1.bf16.msra.mxu0 0
        %2457 = vmatprep.subr.bf16.mxu0 0
        %2458 = vmatpush1.bf16.msra.mxu0 0
        %2459 = vmatprep.subr.bf16.mxu0 0
        %2460 = vmatpush1.bf16.msra.mxu0 0
        %2461 = vmatprep.subr.bf16.mxu0 0
        %2462 = vmatpush1.bf16.msra.mxu0 0
        %2463 = vmatprep.subr.bf16.mxu0 0
        %2464 = vmatpush1.bf16.msra.mxu0 0
        %2465 = vmatprep.subr.bf16.mxu0 0
        %2466 = vmatpush1.bf16.msra.mxu0 0
        %2467 = vmatprep.subr.bf16.mxu0 0
        %2468 = vmatpush1.bf16.msra.mxu0 0
        %2469 = vmatprep.subr.bf16.mxu0 0
        %2470 = vmatpush1.bf16.msra.mxu0 0
        %2471 = vmatprep.subr.bf16.mxu0 0
        %2472 = vmatpush1.bf16.msra.mxu0 0
        %2473 = vmatprep.mubr.bf16.mxu0 0
        %2474 = vmatmul.mubr.bf16.gmra.mrb[0].mxu0 %v2439
        %v2475 = vpop.f32.mrb[0].mxu0
        %v2476 = vadd.f32 0.0, %v2475
        %v2477 = vpop.f32.mrb[0].mxu0
        %v2478 = vpop.f32.mrb[0].mxu0
        %v2479 = vadd.f32 0.0, %v2478
        %v2480 = vpop.f32.mrb[0].mxu0
        %2481 = vdwg.mxu0
        %v2482 = vpack.c.bf16 %v2479, %v2476
        %v2485 = vunpack.c.l.b16 %v2230
        %v2486 = vunpack.c.l.b16 %v2231
        %v2487 = vpack.c.b16 %v2486, %v2485
        %v2490 = vsel %vm1316, %v2482, 0
        %2492 = vmatprep.subr.bf16.mxu0 0
        %2493 = vmatpush1.bf16.msra.mxu0 %v2487
        %2494 = vmatprep.subr.bf16.mxu0 0
        %2495 = vmatpush1.bf16.msra.mxu0 0
        %2496 = vmatprep.subr.bf16.mxu0 0
        %2497 = vmatpush1.bf16.msra.mxu0 0
        %2498 = vmatprep.subr.bf16.mxu0 0
        %2499 = vmatpush1.bf16.msra.mxu0 0
        %2500 = vmatprep.subr.bf16.mxu0 0
        %2501 = vmatpush1.bf16.msra.mxu0 0
        %2502 = vmatprep.subr.bf16.mxu0 0
        %2503 = vmatpush1.bf16.msra.mxu0 0
        %2504 = vmatprep.subr.bf16.mxu0 0
        %2505 = vmatpush1.bf16.msra.mxu0 0
        %2506 = vmatprep.subr.bf16.mxu0 0
        %2507 = vmatpush1.bf16.msra.mxu0 0
        %2508 = vmatprep.subr.bf16.mxu0 0
        %2509 = vmatpush1.bf16.msra.mxu0 0
        %2510 = vmatprep.subr.bf16.mxu0 0
        %2511 = vmatpush1.bf16.msra.mxu0 0
        %2512 = vmatprep.subr.bf16.mxu0 0
        %2513 = vmatpush1.bf16.msra.mxu0 0
        %2514 = vmatprep.subr.bf16.mxu0 0
        %2515 = vmatpush1.bf16.msra.mxu0 0
        %2516 = vmatprep.subr.bf16.mxu0 0
        %2517 = vmatpush1.bf16.msra.mxu0 0
        %2518 = vmatprep.subr.bf16.mxu0 0
        %2519 = vmatpush1.bf16.msra.mxu0 0
        %2520 = vmatprep.subr.bf16.mxu0 0
        %2521 = vmatpush1.bf16.msra.mxu0 0
        %2522 = vmatprep.subr.bf16.mxu0 0
        %2523 = vmatpush1.bf16.msra.mxu0 0
        %2524 = vmatprep.mubr.bf16.mxu0 0
        %2525 = vmatmul.mubr.bf16.gmra.mrb[0].mxu0 %v2490
        %v2526 = vpop.f32.mrb[0].mxu0
        %v2527 = vadd.f32 0.0, %v2526
        %v2528 = vpop.f32.mrb[0].mxu0
        %v2529 = vpop.f32.mrb[0].mxu0
        %v2530 = vadd.f32 0.0, %v2529
        %v2531 = vpop.f32.mrb[0].mxu0
        %2532 = vdwg.mxu0
        %v2535 = vunpack.c.l.b16 %v2228
        %v2536 = vunpack.c.l.b16 %v2229
        %v2537 = vpack.c.b16 %v2536, %v2535
        %v2540 = vsel %vm1316, %v2358, 0
        %2542 = vmatprep.subr.bf16.mxu0 0
        %2543 = vmatpush1.bf16.msra.mxu0 %v2537
        %2544 = vmatprep.subr.bf16.mxu0 0
        %2545 = vmatpush1.bf16.msra.mxu0 0
        %2546 = vmatprep.subr.bf16.mxu0 0
        %2547 = vmatpush1.bf16.msra.mxu0 0
        %2548 = vmatprep.subr.bf16.mxu0 0
        %2549 = vmatpush1.bf16.msra.mxu0 0
        %2550 = vmatprep.subr.bf16.mxu0 0
        %2551 = vmatpush1.bf16.msra.mxu0 0
        %2552 = vmatprep.subr.bf16.mxu0 0
        %2553 = vmatpush1.bf16.msra.mxu0 0
        %2554 = vmatprep.subr.bf16.mxu0 0
        %2555 = vmatpush1.bf16.msra.mxu0 0
        %2556 = vmatprep.subr.bf16.mxu0 0
        %2557 = vmatpush1.bf16.msra.mxu0 0
        %2558 = vmatprep.subr.bf16.mxu0 0
        %2559 = vmatpush1.bf16.msra.mxu0 0
        %2560 = vmatprep.subr.bf16.mxu0 0
        %2561 = vmatpush1.bf16.msra.mxu0 0
        %2562 = vmatprep.subr.bf16.mxu0 0
        %2563 = vmatpush1.bf16.msra.mxu0 0
        %2564 = vmatprep.subr.bf16.mxu0 0
        %2565 = vmatpush1.bf16.msra.mxu0 0
        %2566 = vmatprep.subr.bf16.mxu0 0
        %2567 = vmatpush1.bf16.msra.mxu0 0
        %2568 = vmatprep.subr.bf16.mxu0 0
        %2569 = vmatpush1.bf16.msra.mxu0 0
        %2570 = vmatprep.subr.bf16.mxu0 0
        %2571 = vmatpush1.bf16.msra.mxu0 0
        %2572 = vmatprep.subr.bf16.mxu0 0
        %2573 = vmatpush1.bf16.msra.mxu0 0
        %2574 = vmatprep.mubr.bf16.mxu0 0
        %2575 = vmatmul.mubr.bf16.gmra.mrb[0].mxu0 %v2540
        %v2576 = vpop.f32.mrb[0].mxu0
        %v2577 = vadd.f32 %v2527, %v2576
        %v2578 = vpop.f32.mrb[0].mxu0
        %v2579 = vpop.f32.mrb[0].mxu0
        %v2580 = vadd.f32 %v2530, %v2579
        %v2581 = vpop.f32.mrb[0].mxu0
        %2582 = vdwg.mxu0
        %2583 = vrot.lane.b32.xlu0 %v2237, 96
        %v2584 = vpop.permute.xlu0 %2583
        %2585 = vrot.lane.b32.xlu0 %v2238, 96
        %v2586 = vpop.permute.xlu0 %2585
        %v2588 = vsel %vm1316, %v2584, 0
        %v2591 = vsel %vm1316, %v2586, 0
        %2593 = vmatprep.subr.bf16.mxu0 0
        %2594 = vmatpush1.bf16.xpose.msra.mxu0 %v2591
        %2595 = vmatprep.subr.bf16.mxu0 0
        %2596 = vmatpush1.bf16.xpose.msra.mxu0 0
        %2597 = vmatprep.subr.bf16.mxu0 0
        %2598 = vmatpush1.bf16.xpose.msra.mxu0 0
        %2599 = vmatprep.subr.bf16.mxu0 0
        %2600 = vmatpush1.bf16.xpose.msra.mxu0 0
        %2601 = vmatprep.subr.bf16.mxu0 0
        %2602 = vmatpush1.bf16.xpose.msra.mxu0 0
        %2603 = vmatprep.subr.bf16.mxu0 0
        %2604 = vmatpush1.bf16.xpose.msra.mxu0 0
        %2605 = vmatprep.subr.bf16.mxu0 0
        %2606 = vmatpush1.bf16.xpose.msra.mxu0 0
        %2607 = vmatprep.subr.bf16.mxu0 0
        %2608 = vmatpush1.bf16.xpose.msra.mxu0 0
        %2609 = vmatprep.subr.bf16.mxu0 0
        %2610 = vmatpush1.bf16.xpose.msra.mxu0 0
        %2611 = vmatprep.subr.bf16.mxu0 0
        %2612 = vmatpush1.bf16.xpose.msra.mxu0 0
        %2613 = vmatprep.subr.bf16.mxu0 0
        %2614 = vmatpush1.bf16.xpose.msra.mxu0 0
        %2615 = vmatprep.subr.bf16.mxu0 0
        %2616 = vmatpush1.bf16.xpose.msra.mxu0 0
        %2617 = vmatprep.subr.bf16.mxu0 0
        %2618 = vmatpush1.bf16.xpose.msra.mxu0 0
        %2619 = vmatprep.subr.bf16.mxu0 0
        %2620 = vmatpush1.bf16.xpose.msra.mxu0 0
        %2621 = vmatprep.subr.bf16.mxu0 0
        %2622 = vmatpush1.bf16.xpose.msra.mxu0 0
        %2623 = vmatprep.subr.bf16.mxu0 0
        %2624 = vmatpush1.bf16.xpose.msra.mxu0 0
        %2625 = vmatprep.mubr.bf16.mxu0 0
        %2626 = vmatmul.mubr.bf16.gmra.mrb[0].mxu0 %v2588
        %v2627 = vpop.f32.mrb[0].mxu0
        %v2628 = vadd.f32 0.0, %v2627
        %v2629 = vpop.f32.mrb[0].mxu0
        %v2630 = vpop.f32.mrb[0].mxu0
        %v2631 = vadd.f32 0.0, %v2630
        %v2632 = vpop.f32.mrb[0].mxu0
        %2633 = vdwg.mxu0
        %v2634 = vsel %vm1316, %v2628, -inf
        %2635 = vmax.xlane.f32.xlu0 %v2634
        %v2636 = vpop.xlane.xlu0 %2635
        %v2637 = vsel %vm1316, %v2631, -inf
        %2638 = vmax.xlane.f32.xlu0 %v2637
        %v2639 = vpop.xlane.xlu0 %2638
        %v2640 = vsub.f32 %v2628, %v2636
        %v2641 = vsub.f32 %v2631, %v2639
        %v2642 = vmul.f32 %v2640, 1.442695
        %v2643 = vpow.pop %v2642
        %v2644 = vmul.f32 %v2641, 1.442695
        %v2645 = vpow.pop %v2644
        %v2646 = vsel %vm1316, %v2643, 0.0
        %2647 = vadd.xlane.f32.xlu0 %v2646
        %v2648 = vpop.xlane.xlu0 %2647
        %v2649 = vsel %vm1316, %v2645, 0.0
        %2650 = vadd.xlane.f32.xlu0 %v2649
        %v2651 = vpop.xlane.xlu0 %2650
        %v2652 = vrcp.pop %v2648
        %v2653 = vrcp.pop %v2651
        %v2654 = vmul.f32 %v2643, %v2652
        %v2655 = vmul.f32 %v2645, %v2653
        %v2656 = vpack.c.bf16 %v2655, %v2654
        %2657 = vrot.lane.b32.xlu0 %v2239, 32
        %v2658 = vpop.permute.xlu0 %2657
        %v2661 = vsel %vm1316, %v2656, 0
        %2663 = vmatprep.subr.bf16.mxu0 0
        %2664 = vmatpush1.bf16.msra.mxu0 %v2658
        %2665 = vmatprep.subr.bf16.mxu0 0
        %2666 = vmatpush1.bf16.msra.mxu0 0
        %2667 = vmatprep.subr.bf16.mxu0 0
        %2668 = vmatpush1.bf16.msra.mxu0 0
        %2669 = vmatprep.subr.bf16.mxu0 0
        %2670 = vmatpush1.bf16.msra.mxu0 0
        %2671 = vmatprep.subr.bf16.mxu0 0
        %2672 = vmatpush1.bf16.msra.mxu0 0
        %2673 = vmatprep.subr.bf16.mxu0 0
        %2674 = vmatpush1.bf16.msra.mxu0 0
        %2675 = vmatprep.subr.bf16.mxu0 0
        %2676 = vmatpush1.bf16.msra.mxu0 0
        %2677 = vmatprep.subr.bf16.mxu0 0
        %2678 = vmatpush1.bf16.msra.mxu0 0
        %2679 = vmatprep.subr.bf16.mxu0 0
        %2680 = vmatpush1.bf16.msra.mxu0 0
        %2681 = vmatprep.subr.bf16.mxu0 0
        %2682 = vmatpush1.bf16.msra.mxu0 0
        %2683 = vmatprep.subr.bf16.mxu0 0
        %2684 = vmatpush1.bf16.msra.mxu0 0
        %2685 = vmatprep.subr.bf16.mxu0 0
        %2686 = vmatpush1.bf16.msra.mxu0 0
        %2687 = vmatprep.subr.bf16.mxu0 0
        %2688 = vmatpush1.bf16.msra.mxu0 0
        %2689 = vmatprep.subr.bf16.mxu0 0
        %2690 = vmatpush1.bf16.msra.mxu0 0
        %2691 = vmatprep.subr.bf16.mxu0 0
        %2692 = vmatpush1.bf16.msra.mxu0 0
        %2693 = vmatprep.subr.bf16.mxu0 0
        %2694 = vmatpush1.bf16.msra.mxu0 0
        %2695 = vmatprep.mubr.bf16.mxu0 0
        %2696 = vmatmul.mubr.bf16.gmra.mrb[0].mxu0 %v2661
        %v2697 = vpop.f32.mrb[0].mxu0
        %v2698 = vadd.f32 0.0, %v2697
        %v2699 = vpop.f32.mrb[0].mxu0
        %v2700 = vpop.f32.mrb[0].mxu0
        %v2701 = vadd.f32 0.0, %v2700
        %v2702 = vpop.f32.mrb[0].mxu0
        %2703 = vdwg.mxu0
        %v2704 = vpack.c.bf16 %v2701, %v2698
        %v2707 = vunpack.c.l.b16 %v2232
        %v2708 = vunpack.c.l.b16 %v2233
        %v2709 = vpack.c.b16 %v2708, %v2707
        %v2712 = vsel %vm1316, %v2704, 0
        %2714 = vmatprep.subr.bf16.mxu0 0
        %2715 = vmatpush1.bf16.msra.mxu0 %v2709
        %2716 = vmatprep.subr.bf16.mxu0 0
        %2717 = vmatpush1.bf16.msra.mxu0 0
        %2718 = vmatprep.subr.bf16.mxu0 0
        %2719 = vmatpush1.bf16.msra.mxu0 0
        %2720 = vmatprep.subr.bf16.mxu0 0
        %2721 = vmatpush1.bf16.msra.mxu0 0
        %2722 = vmatprep.subr.bf16.mxu0 0
        %2723 = vmatpush1.bf16.msra.mxu0 0
        %2724 = vmatprep.subr.bf16.mxu0 0
        %2725 = vmatpush1.bf16.msra.mxu0 0
        %2726 = vmatprep.subr.bf16.mxu0 0
        %2727 = vmatpush1.bf16.msra.mxu0 0
        %2728 = vmatprep.subr.bf16.mxu0 0
        %2729 = vmatpush1.bf16.msra.mxu0 0
        %2730 = vmatprep.subr.bf16.mxu0 0
        %2731 = vmatpush1.bf16.msra.mxu0 0
        %2732 = vmatprep.subr.bf16.mxu0 0
        %2733 = vmatpush1.bf16.msra.mxu0 0
        %2734 = vmatprep.subr.bf16.mxu0 0
        %2735 = vmatpush1.bf16.msra.mxu0 0
        %2736 = vmatprep.subr.bf16.mxu0 0
        %2737 = vmatpush1.bf16.msra.mxu0 0
        %2738 = vmatprep.subr.bf16.mxu0 0
        %2739 = vmatpush1.bf16.msra.mxu0 0
        %2740 = vmatprep.subr.bf16.mxu0 0
        %2741 = vmatpush1.bf16.msra.mxu0 0
        %2742 = vmatprep.subr.bf16.mxu0 0
        %2743 = vmatpush1.bf16.msra.mxu0 0
        %2744 = vmatprep.subr.bf16.mxu0 0
        %2745 = vmatpush1.bf16.msra.mxu0 0
        %2746 = vmatprep.mubr.bf16.mxu0 0
        %2747 = vmatmul.mubr.bf16.gmra.mrb[0].mxu0 %v2712
        %v2748 = vpop.f32.mrb[0].mxu0
        %v2749 = vadd.f32 0.0, %v2748
        %v2750 = vpop.f32.mrb[0].mxu0
        %v2751 = vpop.f32.mrb[0].mxu0
        %v2752 = vadd.f32 0.0, %v2751
        %v2753 = vpop.f32.mrb[0].mxu0
        %2754 = vdwg.mxu0
        %v2755 = vadd.f32 %v2577, %v2749
        %v2756 = vadd.f32 %v2580, %v2752
        %2757 = vrot.lane.b32.xlu0 %v2237, 80
        %v2758 = vpop.permute.xlu0 %2757
        %2759 = vrot.lane.b32.xlu0 %v2238, 80
        %v2760 = vpop.permute.xlu0 %2759
        %v2762 = vsel %vm1316, %v2758, 0
        %v2765 = vsel %vm1316, %v2760, 0
        %2767 = vmatprep.subr.bf16.mxu0 0
        %2768 = vmatpush1.bf16.xpose.msra.mxu0 %v2765
        %2769 = vmatprep.subr.bf16.mxu0 0
        %2770 = vmatpush1.bf16.xpose.msra.mxu0 0
        %2771 = vmatprep.subr.bf16.mxu0 0
        %2772 = vmatpush1.bf16.xpose.msra.mxu0 0
        %2773 = vmatprep.subr.bf16.mxu0 0
        %2774 = vmatpush1.bf16.xpose.msra.mxu0 0
        %2775 = vmatprep.subr.bf16.mxu0 0
        %2776 = vmatpush1.bf16.xpose.msra.mxu0 0
        %2777 = vmatprep.subr.bf16.mxu0 0
        %2778 = vmatpush1.bf16.xpose.msra.mxu0 0
        %2779 = vmatprep.subr.bf16.mxu0 0
        %2780 = vmatpush1.bf16.xpose.msra.mxu0 0
        %2781 = vmatprep.subr.bf16.mxu0 0
        %2782 = vmatpush1.bf16.xpose.msra.mxu0 0
        %2783 = vmatprep.subr.bf16.mxu0 0
        %2784 = vmatpush1.bf16.xpose.msra.mxu0 0
        %2785 = vmatprep.subr.bf16.mxu0 0
        %2786 = vmatpush1.bf16.xpose.msra.mxu0 0
        %2787 = vmatprep.subr.bf16.mxu0 0
        %2788 = vmatpush1.bf16.xpose.msra.mxu0 0
        %2789 = vmatprep.subr.bf16.mxu0 0
        %2790 = vmatpush1.bf16.xpose.msra.mxu0 0
        %2791 = vmatprep.subr.bf16.mxu0 0
        %2792 = vmatpush1.bf16.xpose.msra.mxu0 0
        %2793 = vmatprep.subr.bf16.mxu0 0
        %2794 = vmatpush1.bf16.xpose.msra.mxu0 0
        %2795 = vmatprep.subr.bf16.mxu0 0
        %2796 = vmatpush1.bf16.xpose.msra.mxu0 0
        %2797 = vmatprep.subr.bf16.mxu0 0
        %2798 = vmatpush1.bf16.xpose.msra.mxu0 0
        %2799 = vmatprep.mubr.bf16.mxu0 0
        %2800 = vmatmul.mubr.bf16.gmra.mrb[0].mxu0 %v2762
        %v2801 = vpop.f32.mrb[0].mxu0
        %v2802 = vadd.f32 0.0, %v2801
        %v2803 = vpop.f32.mrb[0].mxu0
        %v2804 = vpop.f32.mrb[0].mxu0
        %v2805 = vadd.f32 0.0, %v2804
        %v2806 = vpop.f32.mrb[0].mxu0
        %2807 = vdwg.mxu0
        %v2808 = vsel %vm1316, %v2802, -inf
        %2809 = vmax.xlane.f32.xlu0 %v2808
        %v2810 = vpop.xlane.xlu0 %2809
        %v2811 = vsel %vm1316, %v2805, -inf
        %2812 = vmax.xlane.f32.xlu0 %v2811
        %v2813 = vpop.xlane.xlu0 %2812
        %v2814 = vsub.f32 %v2802, %v2810
        %v2815 = vsub.f32 %v2805, %v2813
        %v2816 = vmul.f32 %v2814, 1.442695
        %v2817 = vpow.pop %v2816
        %v2818 = vmul.f32 %v2815, 1.442695
        %v2819 = vpow.pop %v2818
        %v2820 = vsel %vm1316, %v2817, 0.0
        %2821 = vadd.xlane.f32.xlu0 %v2820
        %v2822 = vpop.xlane.xlu0 %2821
        %v2823 = vsel %vm1316, %v2819, 0.0
        %2824 = vadd.xlane.f32.xlu0 %v2823
        %v2825 = vpop.xlane.xlu0 %2824
        %v2826 = vrcp.pop %v2822
        %v2827 = vrcp.pop %v2825
        %v2828 = vmul.f32 %v2817, %v2826
        %v2829 = vmul.f32 %v2819, %v2827
        %v2830 = vpack.c.bf16 %v2829, %v2828
        %2831 = vrot.lane.b32.xlu0 %v2239, 16
        %v2832 = vpop.permute.xlu0 %2831
        %v2835 = vsel %vm1316, %v2830, 0
        %2837 = vmatprep.subr.bf16.mxu0 0
        %2838 = vmatpush1.bf16.msra.mxu0 %v2832
        %2839 = vmatprep.subr.bf16.mxu0 0
        %2840 = vmatpush1.bf16.msra.mxu0 0
        %2841 = vmatprep.subr.bf16.mxu0 0
        %2842 = vmatpush1.bf16.msra.mxu0 0
        %2843 = vmatprep.subr.bf16.mxu0 0
        %2844 = vmatpush1.bf16.msra.mxu0 0
        %2845 = vmatprep.subr.bf16.mxu0 0
        %2846 = vmatpush1.bf16.msra.mxu0 0
        %2847 = vmatprep.subr.bf16.mxu0 0
        %2848 = vmatpush1.bf16.msra.mxu0 0
        %2849 = vmatprep.subr.bf16.mxu0 0
        %2850 = vmatpush1.bf16.msra.mxu0 0
        %2851 = vmatprep.subr.bf16.mxu0 0
        %2852 = vmatpush1.bf16.msra.mxu0 0
        %2853 = vmatprep.subr.bf16.mxu0 0
        %2854 = vmatpush1.bf16.msra.mxu0 0
        %2855 = vmatprep.subr.bf16.mxu0 0
        %2856 = vmatpush1.bf16.msra.mxu0 0
        %2857 = vmatprep.subr.bf16.mxu0 0
        %2858 = vmatpush1.bf16.msra.mxu0 0
        %2859 = vmatprep.subr.bf16.mxu0 0
        %2860 = vmatpush1.bf16.msra.mxu0 0
        %2861 = vmatprep.subr.bf16.mxu0 0
        %2862 = vmatpush1.bf16.msra.mxu0 0
        %2863 = vmatprep.subr.bf16.mxu0 0
        %2864 = vmatpush1.bf16.msra.mxu0 0
        %2865 = vmatprep.subr.bf16.mxu0 0
        %2866 = vmatpush1.bf16.msra.mxu0 0
        %2867 = vmatprep.subr.bf16.mxu0 0
        %2868 = vmatpush1.bf16.msra.mxu0 0
        %2869 = vmatprep.mubr.bf16.mxu0 0
        %2870 = vmatmul.mubr.bf16.gmra.mrb[0].mxu0 %v2835
        %v2871 = vpop.f32.mrb[0].mxu0
        %v2872 = vadd.f32 0.0, %v2871
        %v2873 = vpop.f32.mrb[0].mxu0
        %v2874 = vpop.f32.mrb[0].mxu0
        %v2875 = vadd.f32 0.0, %v2874
        %v2876 = vpop.f32.mrb[0].mxu0
        %2877 = vdwg.mxu0
        %v2878 = vpack.c.bf16 %v2875, %v2872
        %v2881 = vunpack.c.l.b16 %v2234
        %v2882 = vunpack.c.l.b16 %v2235
        %v2883 = vpack.c.b16 %v2882, %v2881
        %v2886 = vsel %vm1316, %v2878, 0
        %2888 = vmatprep.subr.bf16.mxu0 0
        %2889 = vmatpush1.bf16.msra.mxu0 %v2883
        %2890 = vmatprep.subr.bf16.mxu0 0
        %2891 = vmatpush1.bf16.msra.mxu0 0
        %2892 = vmatprep.subr.bf16.mxu0 0
        %2893 = vmatpush1.bf16.msra.mxu0 0
        %2894 = vmatprep.subr.bf16.mxu0 0
        %2895 = vmatpush1.bf16.msra.mxu0 0
        %2896 = vmatprep.subr.bf16.mxu0 0
        %2897 = vmatpush1.bf16.msra.mxu0 0
        %2898 = vmatprep.subr.bf16.mxu0 0
        %2899 = vmatpush1.bf16.msra.mxu0 0
        %2900 = vmatprep.subr.bf16.mxu0 0
        %2901 = vmatpush1.bf16.msra.mxu0 0
        %2902 = vmatprep.subr.bf16.mxu0 0
        %2903 = vmatpush1.bf16.msra.mxu0 0
        %2904 = vmatprep.subr.bf16.mxu0 0
        %2905 = vmatpush1.bf16.msra.mxu0 0
        %2906 = vmatprep.subr.bf16.mxu0 0
        %2907 = vmatpush1.bf16.msra.mxu0 0
        %2908 = vmatprep.subr.bf16.mxu0 0
        %2909 = vmatpush1.bf16.msra.mxu0 0
        %2910 = vmatprep.subr.bf16.mxu0 0
        %2911 = vmatpush1.bf16.msra.mxu0 0
        %2912 = vmatprep.subr.bf16.mxu0 0
        %2913 = vmatpush1.bf16.msra.mxu0 0
        %2914 = vmatprep.subr.bf16.mxu0 0
        %2915 = vmatpush1.bf16.msra.mxu0 0
        %2916 = vmatprep.subr.bf16.mxu0 0
        %2917 = vmatpush1.bf16.msra.mxu0 0
        %2918 = vmatprep.subr.bf16.mxu0 0
        %2919 = vmatpush1.bf16.msra.mxu0 0
        %2920 = vmatprep.mubr.bf16.mxu0 0
        %2921 = vmatmul.mubr.bf16.gmra.mrb[0].mxu0 %v2886
        %v2922 = vpop.f32.mrb[0].mxu0
        %v2923 = vadd.f32 0.0, %v2922
        %v2924 = vpop.f32.mrb[0].mxu0
        %v2925 = vpop.f32.mrb[0].mxu0
        %v2926 = vadd.f32 0.0, %v2925
        %v2927 = vpop.f32.mrb[0].mxu0
        %2928 = vdwg.mxu0
        %v2929 = vadd.f32 %v2755, %v2923
        %v2930 = vadd.f32 %v2756, %v2926
        %v2932 = vlaneseq
        %v2933 = vshrl.u32 %v2932, 7
        %v2934 = vsub.s32 0, %v2933
        %v2935 = vrot.slane %v2236, %v2934
        %v2937 = vadd.f32 %v2929, %v2935
        %v2938 = vadd.f32 %v2930, %v2935
        %v2939 = vlaneseq
        %v2940 = vshrl.u32 %v2939, 7
        %v2941 = vsub.s32 0, %v2940
        %v2942 = vrot.slane %v1100, %v2941
        %2945 = vrot.lane.b32.xlu0 %v2937, 64
        %v2946 = vpop.permute.xlu0 %2945
        %2947 = vrot.lane.b32.xlu0 %v2938, 64
        %v2948 = vpop.permute.xlu0 %2947
        %v2951 = vmul.f32 %v2942, %v2946
        %v2952 = vmul.f32 %v2942, %v2948
        %2955 = vrot.lane.b32.xlu0 %v2951, 64
        %v2956 = vpop.permute.xlu0 %2955
        %2957 = vrot.lane.b32.xlu0 %v2952, 64
        %v2958 = vpop.permute.xlu0 %2957
        %v2961 = vadd.f32 %v2018, %v2956
        %v2962 = vadd.f32 %v2019, %v2958
        %v2963 = vsel %vm1020, %v2961, 0.0
        %2964 = vadd.xlane.f32.xlu0 %v2963
        %v2965 = vpop.xlane.xlu0 %2964
        %v2966 = vsel %vm1020, %v2962, 0.0
        %2967 = vadd.xlane.f32.xlu0 %v2966
        %v2968 = vpop.xlane.xlu0 %2967
        %v2969 = vmul.f32 %v2965, %v1154
        %v2970 = vmul.f32 %v2968, %v1154
        %v2971 = vsub.f32 %v2961, %v2969
        %v2972 = vsub.f32 %v2962, %v2970
        %v2973 = vmul.f32 %v2971, %v2971
        %v2974 = vmul.f32 %v2972, %v2972
        %v2975 = vsel %vm1020, %v2973, 0.0
        %2976 = vadd.xlane.f32.xlu0 %v2975
        %v2977 = vpop.xlane.xlu0 %2976
        %v2978 = vsel %vm1020, %v2974, 0.0
        %2979 = vadd.xlane.f32.xlu0 %v2978
        %v2980 = vpop.xlane.xlu0 %2979
        %v2981 = vmul.f32 %v2977, %v1154
        %v2982 = vmul.f32 %v2980, %v1154
        %v2983 = vadd.f32 %v2981, 1e-06
        %v2984 = vadd.f32 %v2982, 1e-06
        %v2985 = vrsqrt.pop %v2983
        %v2986 = vrsqrt.pop %v2984
        %v2987 = vmul.f32 %v2971, %v2985
        %v2988 = vmul.f32 %v2972, %v2986
        %v2989 = vadd.f32 %v1102, 1.0
        %v2990 = vlaneseq
        %v2991 = vshrl.u32 %v2990, 7
        %v2992 = vsub.s32 0, %v2991
        %v2993 = vrot.slane %v2989, %v2992
        %2995 = vrot.lane.b32.xlu0 %v2993, 64
        %v2996 = vpop.permute.xlu0 %2995
        %v2998 = vmul.f32 %v2987, %v2996
        %v2999 = vmul.f32 %v2988, %v2996
        %v3000 = vlaneseq
        %v3001 = vshrl.u32 %v3000, 7
        %v3002 = vsub.s32 0, %v3001
        %v3003 = vrot.slane %v1102, %v3002
        %v3004 = vadd.f32 %v2998, %v3003
        %v3005 = vadd.f32 %v2999, %v3003
        %v3006 = vpack.c.bf16 %v3005, %v3004
        %v3007 = vld [vmem:[#allocation22] sm:$0xff]
        %v3008 = vld [vmem:[#allocation22 + $0x8] sm:$0xff]
        %v3009 = vld [vmem:[#allocation22 + $0x10] sm:$0xff]
        %v3010 = vld [vmem:[#allocation22 + $0x18] sm:$0xff]
        %v3011 = vld [vmem:[#allocation22 + $0x20] sm:$0xff]
        %v3012 = vld [vmem:[#allocation22 + $0x28] sm:$0xff]
        %v3013 = vld [vmem:[#allocation22 + $0x30] sm:$0xff]
        %v3014 = vld [vmem:[#allocation22 + $0x38] sm:$0xff]
        %v3015 = vld [vmem:[#allocation23] sm:$0x3]
        %v3017 = vlaneseq
        %v3018 = vshrl.u32 %v3017, 7
        %v3019 = vsub.s32 0, %v3018
        %v3020 = vrot.slane %v3015, %v3019
        %v3021 = vlaneseq
        %v3022 = vshrl.u32 %v3021, 7
        %v3023 = vsub.s32 1, %v3022
        %v3024 = vrot.slane %v3015, %v3023
        %v3035 = vunpack.c.l.b16 %v3007
        %v3036 = vunpack.c.h.b16 %v3007
        %v3037 = vunpack.c.l.b16 %v3008
        %v3038 = vunpack.c.h.b16 %v3008
        %v3039 = vunpack.c.l.b16 %v3009
        %v3040 = vunpack.c.h.b16 %v3009
        %v3041 = vunpack.c.l.b16 %v3010
        %v3042 = vunpack.c.h.b16 %v3010
        %v3043 = vunpack.c.l.b16 %v3011
        %v3044 = vunpack.c.h.b16 %v3011
        %v3045 = vunpack.c.l.b16 %v3012
        %v3046 = vunpack.c.h.b16 %v3012
        %v3047 = vunpack.c.l.b16 %v3013
        %v3048 = vunpack.c.h.b16 %v3013
        %v3049 = vunpack.c.l.b16 %v3014
        %v3050 = vunpack.c.h.b16 %v3014
        %v3051 = vpack.c.b16 %v3037, %v3035
        %v3052 = vpack.c.b16 %v3038, %v3036
        %v3053 = vpack.c.b16 %v3041, %v3039
        %v3054 = vpack.c.b16 %v3042, %v3040
        %v3055 = vpack.c.b16 %v3045, %v3043
        %v3056 = vpack.c.b16 %v3046, %v3044
        %v3057 = vpack.c.b16 %v3049, %v3047
        %v3058 = vpack.c.b16 %v3050, %v3048
        %v3068 = vsel %vm1020, %v3006, 0
        %3070 = vmatprep.subr.bf16.mxu0 %v3052
        %3071 = vmatpush1.bf16.msra.mxu0 %v3051
        %3072 = vmatprep.subr.bf16.mxu0 %v3054
        %3073 = vmatpush1.bf16.msra.mxu0 %v3053
        %3074 = vmatprep.subr.bf16.mxu0 %v3056
        %3075 = vmatpush1.bf16.msra.mxu0 %v3055
        %3076 = vmatprep.subr.bf16.mxu0 %v3058
        %3077 = vmatpush1.bf16.msra.mxu0 %v3057
        %3078 = vmatprep.subr.bf16.mxu0 0
        %3079 = vmatpush1.bf16.msra.mxu0 0
        %3080 = vmatprep.subr.bf16.mxu0 0
        %3081 = vmatpush1.bf16.msra.mxu0 0
        %3082 = vmatprep.subr.bf16.mxu0 0
        %3083 = vmatpush1.bf16.msra.mxu0 0
        %3084 = vmatprep.subr.bf16.mxu0 0
        %3085 = vmatpush1.bf16.msra.mxu0 0
        %3086 = vmatprep.subr.bf16.mxu0 0
        %3087 = vmatpush1.bf16.msra.mxu0 0
        %3088 = vmatprep.subr.bf16.mxu0 0
        %3089 = vmatpush1.bf16.msra.mxu0 0
        %3090 = vmatprep.subr.bf16.mxu0 0
        %3091 = vmatpush1.bf16.msra.mxu0 0
        %3092 = vmatprep.subr.bf16.mxu0 0
        %3093 = vmatpush1.bf16.msra.mxu0 0
        %3094 = vmatprep.subr.bf16.mxu0 0
        %3095 = vmatpush1.bf16.msra.mxu0 0
        %3096 = vmatprep.subr.bf16.mxu0 0
        %3097 = vmatpush1.bf16.msra.mxu0 0
        %3098 = vmatprep.subr.bf16.mxu0 0
        %3099 = vmatpush1.bf16.msra.mxu0 0
        %3100 = vmatprep.subr.bf16.mxu0 0
        %3101 = vmatpush1.bf16.msra.mxu0 0
        %3102 = vmatprep.mubr.bf16.mxu0 0
        %3103 = vmatmul.mubr.bf16.gmra.mrb[0].mxu0 %v3068
        %v3104 = vpop.f32.mrb[0].mxu0
        %v3105 = vadd.f32 %v3020, %v3104
        %v3106 = vpop.f32.mrb[0].mxu0
        %v3107 = vadd.f32 %v3024, %v3106
        %v3108 = vpop.f32.mrb[0].mxu0
        %v3109 = vadd.f32 %v3020, %v3108
        %v3110 = vpop.f32.mrb[0].mxu0
        %v3111 = vadd.f32 %v3024, %v3110
        %3112 = vdwg.mxu0
        %v3113 = vmul.f32 %v3105, 0.5
        %v3114 = vmul.f32 %v3107, 0.5
        %v3115 = vmul.f32 %v3109, 0.5
        %v3116 = vmul.f32 %v3111, 0.5
        %v3117 = vmul.f32 %v3105, 0.044715
        %v3118 = vmul.f32 %v3107, 0.044715
        %v3119 = vmul.f32 %v3109, 0.044715
        %v3120 = vmul.f32 %v3111, 0.044715
        %v3121 = vmul.f32 %v3117, %v3105
        %v3122 = vmul.f32 %v3118, %v3107
        %v3123 = vmul.f32 %v3119, %v3109
        %v3124 = vmul.f32 %v3120, %v3111
        %v3125 = vmul.f32 %v3121, %v3105
        %v3126 = vmul.f32 %v3122, %v3107
        %v3127 = vmul.f32 %v3123, %v3109
        %v3128 = vmul.f32 %v3124, %v3111
        %v3129 = vadd.f32 %v3105, %v3125
        %v3130 = vadd.f32 %v3107, %v3126
        %v3131 = vadd.f32 %v3109, %v3127
        %v3132 = vadd.f32 %v3111, %v3128
        %v3133 = vmul.f32 %v3129, 0.7978846
        %v3134 = vmul.f32 %v3130, 0.7978846
        %v3135 = vmul.f32 %v3131, 0.7978846
        %v3136 = vmul.f32 %v3132, 0.7978846
        %v3137 = vtanh.pop %v3133
        %v3138 = vtanh.pop %v3134
        %v3139 = vtanh.pop %v3135
        %v3140 = vtanh.pop %v3136
        %v3141 = vadd.f32 %v3137, 1.0
        %v3142 = vadd.f32 %v3138, 1.0
        %v3143 = vadd.f32 %v3139, 1.0
        %v3144 = vadd.f32 %v3140, 1.0
        %v3145 = vmul.f32 %v3113, %v3141
        %v3146 = vmul.f32 %v3114, %v3142
        %v3147 = vmul.f32 %v3115, %v3143
        %v3148 = vmul.f32 %v3116, %v3144
        %v3149 = vpack.c.bf16 %v3147, %v3145
        %v3150 = vpack.c.bf16 %v3148, %v3146
        %v3151 = vld [vmem:[%s18] sm:$0xf]
        %v3152 = vld [vmem:[%s18 + $0x4] sm:$0xf]
        %v3153 = vld [vmem:[%s18 + $0x8] sm:$0xf]
        %v3154 = vld [vmem:[%s18 + $0xc] sm:$0xf]
        %v3155 = vld [vmem:[%s18 + $0x10] sm:$0xf]
        %v3156 = vld [vmem:[%s18 + $0x14] sm:$0xf]
        %v3157 = vld [vmem:[%s18 + $0x18] sm:$0xf]
        %v3158 = vld [vmem:[%s18 + $0x1c] sm:$0xf]
        %v3159 = vld [vmem:[%s18 + $0x20] sm:$0xf]
        %v3160 = vld [vmem:[%s18 + $0x24] sm:$0xf]
        %v3161 = vld [vmem:[%s18 + $0x28] sm:$0xf]
        %v3162 = vld [vmem:[%s18 + $0x2c] sm:$0xf]
        %v3163 = vld [vmem:[%s18 + $0x30] sm:$0xf]
        %v3164 = vld [vmem:[%s18 + $0x34] sm:$0xf]
        %v3165 = vld [vmem:[%s18 + $0x38] sm:$0xf]
        %v3166 = vld [vmem:[%s18 + $0x3c] sm:$0xf]
        %v3167 = vld [vmem:[%s18 + $0x40] sm:$0xf]
        %v3168 = vld [vmem:[%s18 + $0x44] sm:$0xf]
        %v3169 = vld [vmem:[%s18 + $0x48] sm:$0xf]
        %v3170 = vld [vmem:[%s18 + $0x4c] sm:$0xf]
        %v3171 = vld [vmem:[%s18 + $0x50] sm:$0xf]
        %v3172 = vld [vmem:[%s18 + $0x54] sm:$0xf]
        %v3173 = vld [vmem:[%s18 + $0x58] sm:$0xf]
        %v3174 = vld [vmem:[%s18 + $0x5c] sm:$0xf]
        %v3175 = vld [vmem:[%s18 + $0x60] sm:$0xf]
        %v3176 = vld [vmem:[%s18 + $0x64] sm:$0xf]
        %v3177 = vld [vmem:[%s18 + $0x68] sm:$0xf]
        %v3178 = vld [vmem:[%s18 + $0x6c] sm:$0xf]
        %v3179 = vld [vmem:[%s18 + $0x70] sm:$0xf]
        %v3180 = vld [vmem:[%s18 + $0x74] sm:$0xf]
        %v3181 = vld [vmem:[%s18 + $0x78] sm:$0xf]
        %v3182 = vld [vmem:[%s18 + $0x7c] sm:$0xf]
        %v3183 = vld [vmem:[%s19] sm:$0x1]
        %v3185 = vlaneseq
        %v3186 = vshrl.u32 %v3185, 7
        %v3187 = vsub.s32 0, %v3186
        %v3188 = vrot.slane %v3183, %v3187
        %v3222 = vunpack.c.l.b16 %v3151
        %v3223 = vunpack.c.l.b16 %v3152
        %v3224 = vunpack.c.l.b16 %v3153
        %v3225 = vunpack.c.l.b16 %v3154
        %v3226 = vunpack.c.l.b16 %v3155
        %v3227 = vunpack.c.l.b16 %v3156
        %v3228 = vunpack.c.l.b16 %v3157
        %v3229 = vunpack.c.l.b16 %v3158
        %v3230 = vunpack.c.l.b16 %v3159
        %v3231 = vunpack.c.l.b16 %v3160
        %v3232 = vunpack.c.l.b16 %v3161
        %v3233 = vunpack.c.l.b16 %v3162
        %v3234 = vunpack.c.l.b16 %v3163
        %v3235 = vunpack.c.l.b16 %v3164
        %v3236 = vunpack.c.l.b16 %v3165
        %v3237 = vunpack.c.l.b16 %v3166
        %v3238 = vunpack.c.l.b16 %v3167
        %v3239 = vunpack.c.l.b16 %v3168
        %v3240 = vunpack.c.l.b16 %v3169
        %v3241 = vunpack.c.l.b16 %v3170
        %v3242 = vunpack.c.l.b16 %v3171
        %v3243 = vunpack.c.l.b16 %v3172
        %v3244 = vunpack.c.l.b16 %v3173
        %v3245 = vunpack.c.l.b16 %v3174
        %v3246 = vunpack.c.l.b16 %v3175
        %v3247 = vunpack.c.l.b16 %v3176
        %v3248 = vunpack.c.l.b16 %v3177
        %v3249 = vunpack.c.l.b16 %v3178
        %v3250 = vunpack.c.l.b16 %v3179
        %v3251 = vunpack.c.l.b16 %v3180
        %v3252 = vunpack.c.l.b16 %v3181
        %v3253 = vunpack.c.l.b16 %v3182
        %v3254 = vpack.c.b16 %v3223, %v3222
        %v3255 = vpack.c.b16 %v3225, %v3224
        %v3256 = vpack.c.b16 %v3227, %v3226
        %v3257 = vpack.c.b16 %v3229, %v3228
        %v3258 = vpack.c.b16 %v3231, %v3230
        %v3259 = vpack.c.b16 %v3233, %v3232
        %v3260 = vpack.c.b16 %v3235, %v3234
        %v3261 = vpack.c.b16 %v3237, %v3236
        %v3262 = vpack.c.b16 %v3239, %v3238
        %v3263 = vpack.c.b16 %v3241, %v3240
        %v3264 = vpack.c.b16 %v3243, %v3242
        %v3265 = vpack.c.b16 %v3245, %v3244
        %v3266 = vpack.c.b16 %v3247, %v3246
        %v3267 = vpack.c.b16 %v3249, %v3248
        %v3268 = vpack.c.b16 %v3251, %v3250
        %v3269 = vpack.c.b16 %v3253, %v3252
        %3286 = vmatprep.subr.bf16.mxu0 0
        %3287 = vmatpush1.bf16.msra.mxu0 %v3254
        %3288 = vmatprep.subr.bf16.mxu0 0
        %3289 = vmatpush1.bf16.msra.mxu0 %v3255
        %3290 = vmatprep.subr.bf16.mxu0 0
        %3291 = vmatpush1.bf16.msra.mxu0 %v3256
        %3292 = vmatprep.subr.bf16.mxu0 0
        %3293 = vmatpush1.bf16.msra.mxu0 %v3257
        %3294 = vmatprep.subr.bf16.mxu0 0
        %3295 = vmatpush1.bf16.msra.mxu0 %v3258
        %3296 = vmatprep.subr.bf16.mxu0 0
        %3297 = vmatpush1.bf16.msra.mxu0 %v3259
        %3298 = vmatprep.subr.bf16.mxu0 0
        %3299 = vmatpush1.bf16.msra.mxu0 %v3260
        %3300 = vmatprep.subr.bf16.mxu0 0
        %3301 = vmatpush1.bf16.msra.mxu0 %v3261
        %3302 = vmatprep.subr.bf16.mxu0 0
        %3303 = vmatpush1.bf16.msra.mxu0 %v3262
        %3304 = vmatprep.subr.bf16.mxu0 0
        %3305 = vmatpush1.bf16.msra.mxu0 %v3263
        %3306 = vmatprep.subr.bf16.mxu0 0
        %3307 = vmatpush1.bf16.msra.mxu0 %v3264
        %3308 = vmatprep.subr.bf16.mxu0 0
        %3309 = vmatpush1.bf16.msra.mxu0 %v3265
        %3310 = vmatprep.subr.bf16.mxu0 0
        %3311 = vmatpush1.bf16.msra.mxu0 %v3266
        %3312 = vmatprep.subr.bf16.mxu0 0
        %3313 = vmatpush1.bf16.msra.mxu0 %v3267
        %3314 = vmatprep.subr.bf16.mxu0 0
        %3315 = vmatpush1.bf16.msra.mxu0 %v3268
        %3316 = vmatprep.subr.bf16.mxu0 0
        %3317 = vmatpush1.bf16.msra.mxu0 %v3269
        %3318 = vmatprep.mubr.bf16.mxu0 %v3150
        %3319 = vmatmul.mubr.bf16.gmra.mrb[0].mxu0 %v3149
        %v3320 = vpop.f32.mrb[0].mxu0
        %v3321 = vadd.f32 %v3188, %v3320
        %v3322 = vpop.f32.mrb[0].mxu0
        %v3323 = vpop.f32.mrb[0].mxu0
        %v3324 = vadd.f32 %v3188, %v3323
        %v3325 = vpop.f32.mrb[0].mxu0
        %3326 = vdwg.mxu0
        %v3327 = vlaneseq
        %v3328 = vshrl.u32 %v3327, 7
        %v3329 = vsub.s32 0, %v3328
        %v3330 = vrot.slane %v1141, %v3329
        %v3331 = vmul.f32 %v3330, %v3321
        %v3332 = vmul.f32 %v3330, %v3324
        %v3333 = vadd.f32 %v2961, %v3331
        %v3334 = vadd.f32 %v2962, %v3332
        %3335 = vst.msk [vmem:[%s846] sm:$0xff] %vm1020, %v3333
        %3336 = vst.msk [vmem:[%s846 + $0x8] sm:$0xff] %vm1020, %v3334
        %s3337 = sand.u32 %s487, 1
        %s3338 = scalar_lea.sflag [#allocation4], %s3337
        %s3339 = sand.u32 %s487, 1
        %s3340 = smul.addr %s3339, 16
        %s3341 = scalar_lea.vmem [#allocation25], %s3340
        // Predicated region
        $region157: #{tpu_custom_call.1} parent=99 // pred_check
          %p3342 = pneg %p497
        $region158: #{tpu_custom_call.1} parent=99 // pred_check_branch
          %3344 = sbr.rel (%p3342) target = $region160
        $region159: #{tpu_custom_call.1} parent=99 // pred_region
          %s3346 = ssub.s32 256, 256
          %3347 = vsyncadd %s3338, %s3346
          %s3348 = smul.addr %s44, 2
          %s3349 = smul.addr %s3348, 128
          %s3350 = scalar_lea.hbm %s20, %s3349
          %s3351 = sshll.u32 %s3341, 4
          %s3352 = int_to_ptr.vmem [resolvable:$true] %s3351
          %3357 = dma.vmem_to_hbm [thread:$0]  %s3352, 256, %s3350, %s3338, 128, 128, 8
        $region160: #{tpu_custom_call.1} parent=99 // pred_fallthru
          _
      $region100: #{tpu_custom_call.1} parent=5 // pred_fallthru
        _
      %p3358 = scmp.le.s32.totalorder 2, %s39
      // Predicated region
      $region161: #{tpu_custom_call.1} parent=5 // pred_check
        %p3359 = pneg %p3358
      $region162: #{tpu_custom_call.1} parent=5 // pred_check_branch
        %3361 = sbr.rel (%p3359) target = $region164
      $region163: #{tpu_custom_call.1} parent=5 // pred_region
        %s3362 = ssub.s32 %s39, 2
        // Predicated region
        $region165: #{tpu_custom_call.1} parent=163 // pred_check
          %p3363 = pneg %p503
        $region166: #{tpu_custom_call.1} parent=163 // pred_check_branch
          %3365 = sbr.rel (%p3363) target = $region168
        $region167: #{tpu_custom_call.1} parent=163 // pred_region
          %s3366 = sand.u32 %s488, 1
          %s3367 = scalar_lea.sflag [#allocation4], %s3366
          %s3368 = sand.u32 %s488, 1
          %s3369 = smul.addr %s3368, 16
          %s3370 = scalar_lea.vmem [#allocation25], %s3369
          %3371 = dma.done %s3367, 256
        $region168: #{tpu_custom_call.1} parent=163 // pred_fallthru
          _
      $region164: #{tpu_custom_call.1} parent=5 // pred_fallthru
        _
    $region6: #{tpu_custom_call.1} parent=1 // loop_footer
      %s43 = sadd.s32 1, %s39
    $region7: #{tpu_custom_call.1} parent=1 // loop_footer_branch
      %38 = sbr.rel target = $region3
    $region8: #{tpu_custom_call.1} parent=1 // loop_exit
      _
    %3372 = vsyncpa [#allocation3], 1
    %s3373 = scalar_lea.sflag [#allocation3], 1
    %3374 = vsyncpa %s3373, 1
    %3375 = vsyncpa [#allocation6], 1
    %3376 = vsyncpa [#allocation9], 1
    %3377 = vsyncpa [#allocation12], 1
    %3378 = vsyncpa [#allocation15], 1
    %3379 = vsyncpa [#allocation18], 1
    %3380 = vsyncpa [#allocation21], 1
    %3381 = vsyncpa [#allocation24], 1
    %3382 = vsyncpa [#allocation4], 1
    %s3383 = scalar_lea.sflag [#allocation4], 1
    %3384 = vsyncpa %s3383, 1

</llo_original>
